<compile_context>
chip_gen: v6e
topology: v6e:2x2x1
jax: 0.10.0
libtpu: 0.0.40
codegen_flags: <defaults>
</compile_context>

<pallas_src>
import functools

import jax
import jax.numpy as jnp
from jax.experimental import pallas as pl
from jax.experimental.pallas import tpu as pltpu


# ----------------------------------------------------------------------------
# Fused Pallas kernel (one grid step = one batch element)
# ----------------------------------------------------------------------------
def _fused_lpn_head_kernel(x_ref, w1_ref, s1_ref, sh1_ref, w2_ref, b2_ref,
                           out_ref, xpad_ref, h1pad_ref, jpad_ref,
                           *, nms_size, nms_channel):
    # x_ref    : (1, H, W, Cin)      f32  input features (one batch element)
    # w1_ref   : (9*Cin, Cmid)       bf16 im2col conv1 weights (heads concat)
    # s1_ref   : (1, Cmid)           f32  folded BN scale
    # sh1_ref  : (1, Cmid)           f32  folded BN shift (includes conv1 bias)
    # w2_ref   : (9*Cmid, Cpad)      bf16 im2col conv2 weights (block-diag, 0-pad)
    # b2_ref   : (1, Cpad)           f32  conv2 bias (0-padded)
    # out_ref  : (1, Cpad, H*W)      f32  channel-major maps; ch nms_channel = NMS(jmap)
    # xpad_ref : (H+2, W+2, Cin)     f32  scratch: zero-padded input
    # h1pad_ref: (H+2, W+2, Cmid)    f32  scratch: zero-padded hidden
    # jpad_ref : (H+2p, W+2p, 1)     f32  scratch: (-big)-padded jmap for NMS
    _, H, W, Cin = x_ref.shape
    Cmid = w1_ref.shape[1]
    Cpad = out_ref.shape[1]
    HW = H * W

    # ---- zero-pad input in VMEM (no wrapper-side jnp.pad / HBM pass) --------
    xpad_ref[...] = jnp.zeros_like(xpad_ref)
    xpad_ref[pl.ds(1, H), pl.ds(1, W), :] = x_ref[...].reshape(H, W, Cin)
    xp = xpad_ref[...]

    # ---- conv1: im2col -> single (HW, 9*Cin) x (9*Cin, Cmid) bf16 matmul ----
    cols = [xp[dy:dy + H, dx:dx + W, :].reshape(HW, Cin).astype(jnp.bfloat16)
            for dy in range(3) for dx in range(3)]
    patch = jnp.concatenate(cols, axis=-1)                       # (HW, 9*Cin)
    h1 = jnp.dot(patch, w1_ref[...], preferred_element_type=jnp.float32)
    h1 = jnp.maximum(h1 * s1_ref[...] + sh1_ref[...], 0.0)       # BN affine + ReLU

    # ---- conv2: zero-pad hidden in VMEM, im2col, single bf16 matmul ---------
    h1pad_ref[...] = jnp.zeros_like(h1pad_ref)
    h1pad_ref[pl.ds(1, H), pl.ds(1, W), :] = h1.reshape(H, W, Cmid)
    h1p = h1pad_ref[...]
    cols2 = [h1p[dy:dy + H, dx:dx + W, :].reshape(HW, Cmid).astype(jnp.bfloat16)
             for dy in range(3) for dx in range(3)]
    patch2 = jnp.concatenate(cols2, axis=-1)                     # (HW, 9*Cmid)
    raw = jnp.dot(patch2, w2_ref[...],
                  preferred_element_type=jnp.float32) + b2_ref[...]   # (HW, Cpad)

    # ---- selective sigmoid: channels 0 (lmap), 1 (jmap), 4 (cmap) -----------
    # (matches the hard-coded channel indices of the PyTorch forward)
    chan = jax.lax.broadcasted_iota(jnp.int32, raw.shape, 1)
    is_sig = (chan == 0) | (chan == 1) | (chan == 4)
    maps_sm = jnp.where(is_sig, jax.nn.sigmoid(raw), raw)        # (HW, Cpad)

    # ---- NMS on the jmap channel (kxk max-pool, stride 1, same pad) ---------
    p = nms_size // 2
    jmap_hw1 = maps_sm[:, 1:2].reshape(H, W, 1)
    jpad_ref[...] = jnp.full_like(jpad_ref, -1e30)
    jpad_ref[pl.ds(p, H), pl.ds(p, W), :] = jmap_hw1
    jp = jpad_ref[...]
    center = jp[p:p + H, p:p + W, :]
    m = center
    for dy in range(nms_size):
        for dx in range(nms_size):
            if dy == p and dx == p:
                continue
            m = jnp.maximum(m, jp[dy:dy + H, dx:dx + W, :])
    jnms = jnp.where(center == m, center, 0.0)                   # (H, W, 1)

    # ---- pack NMS'd jmap into channel `nms_channel`, store lane-dense -------
    jb = jnp.broadcast_to(jnms.reshape(HW, 1), (HW, Cpad))
    final = jnp.where(chan == nms_channel, jb, maps_sm)          # (HW, Cpad)
    out_ref[...] = final.T.reshape(1, Cpad, HW)                  # channel-major


def fused_head_nms(feat_nhwc, w1_im2col, bn_scale, bn_shift, w2_im2col, b2,
                   *, nms_size, nms_channel):
    N, H, W, Cin = feat_nhwc.shape
    Cmid = w1_im2col.shape[1]
    Cpad = w2_im2col.shape[1]
    HW = H * W
    p = nms_size // 2
    kernel = functools.partial(_fused_lpn_head_kernel,
                               nms_size=nms_size, nms_channel=nms_channel)
    return pl.pallas_call(
        kernel,
        out_shape=jax.ShapeDtypeStruct((N, Cpad, HW), jnp.float32),
        grid=(N,),
        in_specs=[
            pl.BlockSpec((1, H, W, Cin), lambda n: (n, 0, 0, 0)),
            pl.BlockSpec((9 * Cin, Cmid), lambda n: (0, 0)),
            pl.BlockSpec((1, Cmid), lambda n: (0, 0)),
            pl.BlockSpec((1, Cmid), lambda n: (0, 0)),
            pl.BlockSpec((9 * Cmid, Cpad), lambda n: (0, 0)),
            pl.BlockSpec((1, Cpad), lambda n: (0, 0)),
        ],
        out_specs=pl.BlockSpec((1, Cpad, HW), lambda n: (n, 0, 0)),
        scratch_shapes=[
            pltpu.VMEM((H + 2, W + 2, Cin), jnp.float32),
            pltpu.VMEM((H + 2, W + 2, Cmid), jnp.float32),
            pltpu.VMEM((H + 2 * p, W + 2 * p, 1), jnp.float32),
        ],
        compiler_params=pltpu.CompilerParams(
            dimension_semantics=("parallel",)),   # v7x: one image per TC
    )(feat_nhwc, w1_im2col,
      bn_scale.reshape(1, Cmid), bn_shift.reshape(1, Cmid),
      w2_im2col, b2.reshape(1, Cpad))


# ----------------------------------------------------------------------------
# Plain-JAX glue (top-k proposal bookkeeping; static shapes, vmapped)
# ----------------------------------------------------------------------------
def calc_junction_jax(jmap_hw, joff_2hw, thresh, top_K):
    h, w = jmap_hw.shape
    score = jmap_hw.reshape(-1)
    joff = joff_2hw.reshape(2, -1).T                      # (HW, 2), PyTorch order
    # TODO(synk): PyTorch truncates to a data-dependent count (score>=thresh);
    #             TPU version keeps a fixed top_K plus a validity mask.
    topk_score, indices = jax.lax.top_k(score, top_K)
    valid = topk_score >= thresh
    y = (indices // w).astype(jnp.float32)
    x = (indices % w).astype(jnp.float32)
    junc = jnp.stack([x, y], axis=1) + joff[indices] + 0.5
    junc = jnp.stack([jnp.clip(junc[:, 0], 0.0, w - 1e-4),
                      jnp.clip(junc[:, 1], 0.0, h - 1e-4)], axis=1)
    return junc, topk_score, valid


def calc_line_jax(cmap_hw, coff_2hw, eoff_chw, order, thresh, top_K):
    n_pts = order + 1
    n_e = n_pts // 2 * 2
    h, w = cmap_hw.shape
    score = cmap_hw.reshape(-1)
    coff = coff_2hw.reshape(2, -1).T                      # (HW, 2)
    eoff = eoff_chw.reshape(n_e, 2, -1).transpose(2, 0, 1)  # (HW, n_e, 2)
    topk_score, indices = jax.lax.top_k(score, top_K)
    valid = topk_score >= thresh
    y = (indices // w).astype(jnp.float32)
    x = (indices % w).astype(jnp.float32)
    center = jnp.stack([x, y], axis=1) + coff[indices] + 0.5       # (K, 2)
    loi = center[:, None, :] + eoff[indices]                        # (K, n_e, 2)
    if n_pts % 2 == 1:
        loi = jnp.concatenate(
            [loi[:, :n_pts // 2], center[:, None], loi[:, n_pts // 2:]], axis=1)
    loi = jnp.stack([jnp.clip(loi[..., 0], 0.0, w - 1e-4),
                     jnp.clip(loi[..., 1], 0.0, h - 1e-4)], axis=-1)
    return loi, topk_score, valid


# ----------------------------------------------------------------------------
# The module
# ----------------------------------------------------------------------------
def _init_head_params(key, input_channels, output_channels_list):
    mid = input_channels // 4
    params = []
    for i, oc in enumerate(output_channels_list):
        k = jax.random.fold_in(key, i)
        k1, k2, k3, k4, k5, k6, k7, k8 = jax.random.split(k, 8)
        params.append(dict(
            w1=0.1 * jax.random.normal(k1, (3, 3, input_channels, mid), jnp.float32),
            b1=0.05 * jax.random.normal(k2, (mid,), jnp.float32),
            gamma=1.0 + 0.1 * jax.random.normal(k3, (mid,), jnp.float32),
            beta=0.05 * jax.random.normal(k4, (mid,), jnp.float32),
            rmean=0.05 * jax.random.normal(k5, (mid,), jnp.float32),
            rvar=1.0 + 0.1 * jnp.abs(jax.random.normal(k6, (mid,), jnp.float32)),
            w2=0.1 * jax.random.normal(k7, (3, 3, mid, oc), jnp.float32),
            b2=0.05 * jax.random.normal(k8, (oc,), jnp.float32),
        ))
    return params


class LineProposalNetworkPallas:
    """Eval-mode forward of LineProposalNetwork with a single fused Pallas kernel."""

    def __init__(self, order, input_channels, output_channels_list,
                 junc_score_thresh, line_score_thresh, junc_max_num,
                 line_max_num, num_pos_proposals, num_neg_proposals,
                 nms_size, key):
        self.order = order
        self.junc_score_thresh = junc_score_thresh
        self.line_score_thresh = line_score_thresh
        self.junc_max_num = junc_max_num
        self.line_max_num = line_max_num
        self.num_pos_proposals = num_pos_proposals
        self.num_neg_proposals = num_neg_proposals
        self.nms_size = nms_size
        self.bn_eps = 1e-5
        self.params = _init_head_params(key, input_channels, output_channels_list)

        mid = input_channels // 4
        n_heads = len(output_channels_list)
        Cmid = mid * n_heads
        self.n_maps = sum(output_channels_list)            # 11 map channels
        # +1 channel for the NMS'd jmap, pad to a multiple of 8 sublanes
        self.c_pad = ((self.n_maps + 1 + 7) // 8) * 8

        # conv1: concatenate per-head 3x3 weights along Cout, im2col layout, bf16
        w1_cat = jnp.concatenate([p['w1'] for p in self.params], axis=-1)
        self.w1_im2col = w1_cat.reshape(9 * input_channels, Cmid).astype(jnp.bfloat16)
        # folded BatchNorm (eval): scale = gamma/sqrt(var+eps),
        #                          shift = (b1 - mean)*scale + beta
        self.bn_scale = jnp.concatenate(
            [p['gamma'] / jnp.sqrt(p['rvar'] + self.bn_eps) for p in self.params])
        self.bn_shift = jnp.concatenate(
            [(p['b1'] - p['rmean']) * (p['gamma'] / jnp.sqrt(p['rvar'] + self.bn_eps))
             + p['beta'] for p in self.params])

        # conv2: block-diagonal over heads (off-head blocks zero), zero-padded
        # extra output channels, im2col layout, bf16
        w2_full = jnp.zeros((3, 3, Cmid, self.c_pad), jnp.float32)
        b2_full = jnp.zeros((self.c_pad,), jnp.float32)
        co = 0
        for i, (p, oc) in enumerate(zip(self.params, output_channels_list)):
            w2_full = w2_full.at[:, :, i * mid:(i + 1) * mid, co:co + oc].set(p['w2'])
            b2_full = b2_full.at[co:co + oc].set(p['b2'])
            co += oc
        self.w2_im2col = w2_full.reshape(9 * Cmid, self.c_pad).astype(jnp.bfloat16)
        self.b2 = b2_full

        self.lambda_ = jnp.concatenate(
            [jnp.linspace(1.0, 0.0, order + 1)[None],
             jnp.linspace(0.0, 1.0, order + 1)[None]], axis=0)   # (2, order+1)

        self._forward = jax.jit(self._forward_impl)

    # ------------------------------------------------------------------
    def _forward_impl(self, features_nchw):
        N, _, H, W = features_nchw.shape
        feat_nhwc = jnp.transpose(features_nchw, (0, 2, 3, 1))

        out = fused_head_nms(feat_nhwc, self.w1_im2col, self.bn_scale,
                             self.bn_shift, self.w2_im2col, self.b2,
                             nms_size=self.nms_size, nms_channel=self.n_maps)
        # out: (N, c_pad, H*W) channel-major, lane-dense
        maps_nchw = out[:, :self.n_maps, :].reshape(N, self.n_maps, H, W)
        jmap_nms = out[:, self.n_maps, :].reshape(N, H, W)

        lmap = maps_nchw[:, 0:1]
        jmap = maps_nchw[:, 1:2]
        joff = maps_nchw[:, 2:4]
        cmap = maps_nchw[:, 4:5]
        coff = maps_nchw[:, 5:7]
        eoff = maps_nchw[:, 7:]
        maps_dict = {'lmap': lmap, 'jmap': jmap, 'joff': joff,
                     'cmap': cmap, 'coff': coff, 'eoff': eoff}

        def per_image(jnms_hw, joff_i, cmap_i, coff_i, eoff_i):
            junc, _, junc_valid = calc_junction_jax(
                jnms_hw, joff_i, self.junc_score_thresh, self.junc_max_num)
            loi, loi_score, loi_valid = calc_line_jax(
                cmap_i, coff_i, eoff_i, self.order,
                self.line_score_thresh, self.line_max_num)

            # match line endpoints to junctions (invalid junctions pushed far away)
            jpen = jnp.where(junc_valid[None, :], 0.0, 1e12)
            d1 = ((loi[:, None, 0, :] - junc[None]) ** 2).sum(-1) + jpen
            d2 = ((loi[:, None, -1, :] - junc[None]) ** 2).sum(-1) + jpen
            idx1 = jnp.argmin(d1, axis=-1)
            idx2 = jnp.argmin(d2, axis=-1)
            idx_min = jnp.minimum(idx1, idx2)
            idx_max = jnp.maximum(idx1, idx2)
            iskeep = (idx_min != idx_max) & loi_valid

            # TODO(synk): the reference filters by iskeep, sorts by cost and dedups
            # endpoint pairs with np.unique (data-dependent shapes, host-side);
            # on TPU we return fixed-size arrays plus the keep mask.
            end_pred = jnp.stack([junc[idx_min], junc[idx_max]], axis=1)  # (K,2,2)
            swap = end_pred[:, 0, 1] > end_pred[:, 1, 1]
            end_pred = jnp.where(swap[:, None, None], end_pred[:, ::-1], end_pred)

            if self.order == 1:
                loi_out = end_pred
            else:
                delta = end_pred - jnp.stack([loi[:, 0], loi[:, -1]], axis=1)
                loi_out = loi + (self.lambda_[None, :, :, None] *
                                 delta[:, :, None, :]).sum(axis=1)
            return loi_out, loi_score, iskeep

        loi_pred, loi_score, loi_keep = jax.vmap(per_image)(
            jmap_nms, joff, cmap[:, 0], coff, eoff)
        return maps_dict, loi_pred, loi_score, loi_keep

    # ------------------------------------------------------------------
    def __call__(self, features_nchw):
        maps_dict, loi_pred, loi_score, loi_keep = self._forward(features_nchw)
        N = features_nchw.shape[0]
        loi_preds = [loi_pred[i] for i in range(N)]
        loi_scores = [loi_score[i] for i in range(N)]
        loi_keeps = [loi_keep[i] for i in range(N)]
        return maps_dict, loi_preds, loi_scores, loi_keeps


# ----------------------------------------------------------------------------
if __name__ == "__main__":
    key = jax.random.PRNGKey(0)
    N, C, H, W = 2, 32, 16, 16
    order = 2
    output_channels_list = [1, 1, 2, 1, 2, 4]   # lmap, jmap, joff, cmap, coff, eoff

    lpn = LineProposalNetworkPallas(
        order=order,
        input_channels=C,
        output_channels_list=output_channels_list,
        junc_score_thresh=0.25,
        line_score_thresh=0.25,
        junc_max_num=64,
        line_max_num=128,
        num_pos_proposals=64,
        num_neg_proposals=64,
        nms_size=3,
        key=jax.random.fold_in(key, 1),
    )

    # NCHW features, matching the PyTorch interface
    features = jax.random.normal(jax.random.fold_in(key, 2),
                                 (N, C, H, W), jnp.float32)

    maps, loi_preds, loi_scores, loi_keep = lpn(features)
    jax.block_until_ready((maps, loi_preds, loi_scores, loi_keep))
    print("KERNEL_OK")
</pallas_src>

<mosaic_0001>
module attributes {stable_mosaic.version = 11 : i64} {
  func.func @_fused_lpn_head_kernel(%arg0: i32, %arg1: memref<1x16x16x32xf32, #tpu.memory_space<vmem>>, %arg2: memref<288x48xbf16, #tpu.memory_space<vmem>>, %arg3: memref<1x48xf32, #tpu.memory_space<vmem>>, %arg4: memref<1x48xf32, #tpu.memory_space<vmem>>, %arg5: memref<432x16xbf16, #tpu.memory_space<vmem>>, %arg6: memref<1x16xf32, #tpu.memory_space<vmem>>, %arg7: memref<1x16x256xf32, #tpu.memory_space<vmem>>, %arg8: memref<18x18x32xf32, #tpu.memory_space<vmem>>, %arg9: memref<18x18x48xf32, #tpu.memory_space<vmem>>, %arg10: memref<18x18x1xf32, #tpu.memory_space<vmem>>) attributes {dimension_semantics = [#tpu.dimension_semantics<parallel>], iteration_bounds = array<i64: 2>, scalar_prefetch = 0 : i64, scratch_operands = 3 : i64, tpu.core_type = #tpu.core_type<tc>, window_params = [{transform_indices = @transform_0, window_bounds = array<i64: 1, 16, 16, 32>}, {pipeline_mode = #tpu.pipeline_mode<synchronous>, transform_indices = @transform_1, window_bounds = array<i64: 288, 48>}, {pipeline_mode = #tpu.pipeline_mode<synchronous>, transform_indices = @transform_2, window_bounds = array<i64: 1, 48>}, {pipeline_mode = #tpu.pipeline_mode<synchronous>, transform_indices = @transform_3, window_bounds = array<i64: 1, 48>}, {pipeline_mode = #tpu.pipeline_mode<synchronous>, transform_indices = @transform_4, window_bounds = array<i64: 432, 16>}, {pipeline_mode = #tpu.pipeline_mode<synchronous>, transform_indices = @transform_5, window_bounds = array<i64: 1, 16>}, {transform_indices = @transform_6, window_bounds = array<i64: 1, 16, 256>}]} {
    %cst = arith.constant 0.000000e+00 : f32
    %0 = vector.broadcast %cst : f32 to vector<18x18x32xf32>
    %c0 = arith.constant 0 : index
    %c0_0 = arith.constant 0 : index
    %c0_1 = arith.constant 0 : index
    %1 = vector.load %arg8[%c0, %c0_0, %c0_1] : memref<18x18x32xf32, #tpu.memory_space<vmem>>, vector<18x18x32xf32>
    tpu.vector_store %arg8[%c0, %c0_0, %c0_1], %0 {strides = array<i32>} : memref<18x18x32xf32, #tpu.memory_space<vmem>>, vector<18x18x32xf32>,
    %c0_2 = arith.constant 0 : index
    %c0_3 = arith.constant 0 : index
    %c0_4 = arith.constant 0 : index
    %c0_5 = arith.constant 0 : index
    %2 = vector.load %arg1[%c0_2, %c0_3, %c0_4, %c0_5] : memref<1x16x16x32xf32, #tpu.memory_space<vmem>>, vector<1x16x16x32xf32>
    %3 = vector.shape_cast %2 : vector<1x16x16x32xf32> to vector<16x16x32xf32>
    %c1 = arith.constant 1 : index
    %c1_6 = arith.constant 1 : index
    %c0_7 = arith.constant 0 : index
    %4 = vector.load %arg8[%c1, %c1_6, %c0_7] : memref<18x18x32xf32, #tpu.memory_space<vmem>>, vector<16x16x32xf32>
    tpu.vector_store %arg8[%c1, %c1_6, %c0_7], %3 {strides = array<i32>} : memref<18x18x32xf32, #tpu.memory_space<vmem>>, vector<16x16x32xf32>,
    %c0_8 = arith.constant 0 : index
    %c0_9 = arith.constant 0 : index
    %c0_10 = arith.constant 0 : index
    %5 = vector.load %arg8[%c0_8, %c0_9, %c0_10] : memref<18x18x32xf32, #tpu.memory_space<vmem>>, vector<18x18x32xf32>
    %6 = vector.extract_strided_slice %5 {offsets = [0, 0, 0], sizes = [16, 16, 32], strides = [1, 1, 1]} : vector<18x18x32xf32> to vector<16x16x32xf32>
    %7 = vector.shape_cast %6 : vector<16x16x32xf32> to vector<256x32xf32>
    %8 = arith.truncf %7 : vector<256x32xf32> to vector<256x32xbf16>
    %9 = vector.extract_strided_slice %5 {offsets = [0, 1, 0], sizes = [16, 16, 32], strides = [1, 1, 1]} : vector<18x18x32xf32> to vector<16x16x32xf32>
    %10 = vector.shape_cast %9 : vector<16x16x32xf32> to vector<256x32xf32>
    %11 = arith.truncf %10 : vector<256x32xf32> to vector<256x32xbf16>
    %12 = vector.extract_strided_slice %5 {offsets = [0, 2, 0], sizes = [16, 16, 32], strides = [1, 1, 1]} : vector<18x18x32xf32> to vector<16x16x32xf32>
    %13 = vector.shape_cast %12 : vector<16x16x32xf32> to vector<256x32xf32>
    %14 = arith.truncf %13 : vector<256x32xf32> to vector<256x32xbf16>
    %15 = vector.extract_strided_slice %5 {offsets = [1, 0, 0], sizes = [16, 16, 32], strides = [1, 1, 1]} : vector<18x18x32xf32> to vector<16x16x32xf32>
    %16 = vector.shape_cast %15 : vector<16x16x32xf32> to vector<256x32xf32>
    %17 = arith.truncf %16 : vector<256x32xf32> to vector<256x32xbf16>
    %18 = vector.extract_strided_slice %5 {offsets = [1, 1, 0], sizes = [16, 16, 32], strides = [1, 1, 1]} : vector<18x18x32xf32> to vector<16x16x32xf32>
    %19 = vector.shape_cast %18 : vector<16x16x32xf32> to vector<256x32xf32>
    %20 = arith.truncf %19 : vector<256x32xf32> to vector<256x32xbf16>
    %21 = vector.extract_strided_slice %5 {offsets = [1, 2, 0], sizes = [16, 16, 32], strides = [1, 1, 1]} : vector<18x18x32xf32> to vector<16x16x32xf32>
    %22 = vector.shape_cast %21 : vector<16x16x32xf32> to vector<256x32xf32>
    %23 = arith.truncf %22 : vector<256x32xf32> to vector<256x32xbf16>
    %24 = vector.extract_strided_slice %5 {offsets = [2, 0, 0], sizes = [16, 16, 32], strides = [1, 1, 1]} : vector<18x18x32xf32> to vector<16x16x32xf32>
    %25 = vector.shape_cast %24 : vector<16x16x32xf32> to vector<256x32xf32>
    %26 = arith.truncf %25 : vector<256x32xf32> to vector<256x32xbf16>
    %27 = vector.extract_strided_slice %5 {offsets = [2, 1, 0], sizes = [16, 16, 32], strides = [1, 1, 1]} : vector<18x18x32xf32> to vector<16x16x32xf32>
    %28 = vector.shape_cast %27 : vector<16x16x32xf32> to vector<256x32xf32>
    %29 = arith.truncf %28 : vector<256x32xf32> to vector<256x32xbf16>
    %30 = vector.extract_strided_slice %5 {offsets = [2, 2, 0], sizes = [16, 16, 32], strides = [1, 1, 1]} : vector<18x18x32xf32> to vector<16x16x32xf32>
    %31 = vector.shape_cast %30 : vector<16x16x32xf32> to vector<256x32xf32>
    %32 = arith.truncf %31 : vector<256x32xf32> to vector<256x32xbf16>
    %33 = tpu.concatenate %8, %11, %14, %17, %20, %23, %26, %29, %32 in 1 : vector<256x32xbf16>, vector<256x32xbf16>, vector<256x32xbf16>, vector<256x32xbf16>, vector<256x32xbf16>, vector<256x32xbf16>, vector<256x32xbf16>, vector<256x32xbf16>, vector<256x32xbf16> -> vector<256x288xbf16>
    %c0_11 = arith.constant 0 : index
    %c0_12 = arith.constant 0 : index
    %34 = vector.load %arg2[%c0_11, %c0_12] : memref<288x48xbf16, #tpu.memory_space<vmem>>, vector<288x48xbf16>
    %cst_13 = arith.constant dense<0.000000e+00> : vector<256x48xf32>
    %35 = tpu.matmul %33, %34, %cst_13 {dimension_numbers = #tpu.dot_dimension_numbers<[1], [0], [0], [1], [0, 0, 1, 1], [], []>} : vector<256x288xbf16>, vector<288x48xbf16>, vector<256x48xf32> -> vector<256x48xf32>
    %c0_14 = arith.constant 0 : index
    %c0_15 = arith.constant 0 : index
    %36 = vector.load %arg3[%c0_14, %c0_15] : memref<1x48xf32, #tpu.memory_space<vmem>>, vector<1x48xf32>
    %37 = vector.broadcast %36 : vector<1x48xf32> to vector<256x48xf32>
    %38 = arith.mulf %35, %37 : vector<256x48xf32>
    %c0_16 = arith.constant 0 : index
    %c0_17 = arith.constant 0 : index
    %39 = vector.load %arg4[%c0_16, %c0_17] : memref<1x48xf32, #tpu.memory_space<vmem>>, vector<1x48xf32>
    %40 = vector.broadcast %39 : vector<1x48xf32> to vector<256x48xf32>
    %41 = arith.addf %38, %40 : vector<256x48xf32>
    %cst_18 = arith.constant 0.000000e+00 : f32
    %42 = vector.broadcast %cst_18 : f32 to vector<256x48xf32>
    %43 = arith.maximumf %41, %42 : vector<256x48xf32>
    %cst_19 = arith.constant 0.000000e+00 : f32
    %44 = vector.broadcast %cst_19 : f32 to vector<18x18x48xf32>
    %c0_20 = arith.constant 0 : index
    %c0_21 = arith.constant 0 : index
    %c0_22 = arith.constant 0 : index
    %45 = vector.load %arg9[%c0_20, %c0_21, %c0_22] : memref<18x18x48xf32, #tpu.memory_space<vmem>>, vector<18x18x48xf32>
    tpu.vector_store %arg9[%c0_20, %c0_21, %c0_22], %44 {strides = array<i32>} : memref<18x18x48xf32, #tpu.memory_space<vmem>>, vector<18x18x48xf32>,
    %46 = vector.shape_cast %43 : vector<256x48xf32> to vector<16x16x48xf32>
    %c1_23 = arith.constant 1 : index
    %c1_24 = arith.constant 1 : index
    %c0_25 = arith.constant 0 : index
    %47 = vector.load %arg9[%c1_23, %c1_24, %c0_25] : memref<18x18x48xf32, #tpu.memory_space<vmem>>, vector<16x16x48xf32>
    tpu.vector_store %arg9[%c1_23, %c1_24, %c0_25], %46 {strides = array<i32>} : memref<18x18x48xf32, #tpu.memory_space<vmem>>, vector<16x16x48xf32>,
    %c0_26 = arith.constant 0 : index
    %c0_27 = arith.constant 0 : index
    %c0_28 = arith.constant 0 : index
    %48 = vector.load %arg9[%c0_26, %c0_27, %c0_28] : memref<18x18x48xf32, #tpu.memory_space<vmem>>, vector<18x18x48xf32>
    %49 = vector.extract_strided_slice %48 {offsets = [0, 0, 0], sizes = [16, 16, 48], strides = [1, 1, 1]} : vector<18x18x48xf32> to vector<16x16x48xf32>
    %50 = vector.shape_cast %49 : vector<16x16x48xf32> to vector<256x48xf32>
    %51 = arith.truncf %50 : vector<256x48xf32> to vector<256x48xbf16>
    %52 = vector.extract_strided_slice %48 {offsets = [0, 1, 0], sizes = [16, 16, 48], strides = [1, 1, 1]} : vector<18x18x48xf32> to vector<16x16x48xf32>
    %53 = vector.shape_cast %52 : vector<16x16x48xf32> to vector<256x48xf32>
    %54 = arith.truncf %53 : vector<256x48xf32> to vector<256x48xbf16>
    %55 = vector.extract_strided_slice %48 {offsets = [0, 2, 0], sizes = [16, 16, 48], strides = [1, 1, 1]} : vector<18x18x48xf32> to vector<16x16x48xf32>
    %56 = vector.shape_cast %55 : vector<16x16x48xf32> to vector<256x48xf32>
    %57 = arith.truncf %56 : vector<256x48xf32> to vector<256x48xbf16>
    %58 = vector.extract_strided_slice %48 {offsets = [1, 0, 0], sizes = [16, 16, 48], strides = [1, 1, 1]} : vector<18x18x48xf32> to vector<16x16x48xf32>
    %59 = vector.shape_cast %58 : vector<16x16x48xf32> to vector<256x48xf32>
    %60 = arith.truncf %59 : vector<256x48xf32> to vector<256x48xbf16>
    %61 = vector.extract_strided_slice %48 {offsets = [1, 1, 0], sizes = [16, 16, 48], strides = [1, 1, 1]} : vector<18x18x48xf32> to vector<16x16x48xf32>
    %62 = vector.shape_cast %61 : vector<16x16x48xf32> to vector<256x48xf32>
    %63 = arith.truncf %62 : vector<256x48xf32> to vector<256x48xbf16>
    %64 = vector.extract_strided_slice %48 {offsets = [1, 2, 0], sizes = [16, 16, 48], strides = [1, 1, 1]} : vector<18x18x48xf32> to vector<16x16x48xf32>
    %65 = vector.shape_cast %64 : vector<16x16x48xf32> to vector<256x48xf32>
    %66 = arith.truncf %65 : vector<256x48xf32> to vector<256x48xbf16>
    %67 = vector.extract_strided_slice %48 {offsets = [2, 0, 0], sizes = [16, 16, 48], strides = [1, 1, 1]} : vector<18x18x48xf32> to vector<16x16x48xf32>
    %68 = vector.shape_cast %67 : vector<16x16x48xf32> to vector<256x48xf32>
    %69 = arith.truncf %68 : vector<256x48xf32> to vector<256x48xbf16>
    %70 = vector.extract_strided_slice %48 {offsets = [2, 1, 0], sizes = [16, 16, 48], strides = [1, 1, 1]} : vector<18x18x48xf32> to vector<16x16x48xf32>
    %71 = vector.shape_cast %70 : vector<16x16x48xf32> to vector<256x48xf32>
    %72 = arith.truncf %71 : vector<256x48xf32> to vector<256x48xbf16>
    %73 = vector.extract_strided_slice %48 {offsets = [2, 2, 0], sizes = [16, 16, 48], strides = [1, 1, 1]} : vector<18x18x48xf32> to vector<16x16x48xf32>
    %74 = vector.shape_cast %73 : vector<16x16x48xf32> to vector<256x48xf32>
    %75 = arith.truncf %74 : vector<256x48xf32> to vector<256x48xbf16>
    %76 = tpu.concatenate %51, %54, %57, %60, %63, %66, %69, %72, %75 in 1 : vector<256x48xbf16>, vector<256x48xbf16>, vector<256x48xbf16>, vector<256x48xbf16>, vector<256x48xbf16>, vector<256x48xbf16>, vector<256x48xbf16>, vector<256x48xbf16>, vector<256x48xbf16> -> vector<256x432xbf16>
    %c0_29 = arith.constant 0 : index
    %c0_30 = arith.constant 0 : index
    %77 = vector.load %arg5[%c0_29, %c0_30] : memref<432x16xbf16, #tpu.memory_space<vmem>>, vector<432x16xbf16>
    %cst_31 = arith.constant dense<0.000000e+00> : vector<256x16xf32>
    %78 = tpu.matmul %76, %77, %cst_31 {dimension_numbers = #tpu.dot_dimension_numbers<[1], [0], [0], [1], [0, 0, 1, 1], [], []>} : vector<256x432xbf16>, vector<432x16xbf16>, vector<256x16xf32> -> vector<256x16xf32>
    %c0_32 = arith.constant 0 : index
    %c0_33 = arith.constant 0 : index
    %79 = vector.load %arg6[%c0_32, %c0_33] : memref<1x16xf32, #tpu.memory_space<vmem>>, vector<1x16xf32>
    %80 = vector.broadcast %79 : vector<1x16xf32> to vector<256x16xf32>
    %81 = arith.addf %78, %80 : vector<256x16xf32>
    %82 = tpu.iota {dimensions = array<i32: 1>} : vector<256x16xi32>
    %c0_i32 = arith.constant 0 : i32
    %83 = vector.broadcast %c0_i32 : i32 to vector<256x16xi32>
    %84 = arith.cmpi eq, %82, %83 : vector<256x16xi32>
    %c1_i32 = arith.constant 1 : i32
    %85 = vector.broadcast %c1_i32 : i32 to vector<256x16xi32>
    %86 = arith.cmpi eq, %82, %85 : vector<256x16xi32>
    %87 = arith.ori %84, %86 : vector<256x16xi1>
    %c4_i32 = arith.constant 4 : i32
    %88 = vector.broadcast %c4_i32 : i32 to vector<256x16xi32>
    %89 = arith.cmpi eq, %82, %88 : vector<256x16xi32>
    %90 = arith.ori %87, %89 : vector<256x16xi1>
    %91 = arith.negf %81 : vector<256x16xf32>
    %92 = math.exp %91 : vector<256x16xf32>
    %cst_34 = arith.constant 1.000000e+00 : f32
    %93 = vector.broadcast %cst_34 : f32 to vector<256x16xf32>
    %94 = arith.addf %93, %92 : vector<256x16xf32>
    %95 = arith.divf %93, %94 : vector<256x16xf32>
    %96 = arith.select %90, %95, %81 : vector<256x16xi1>, vector<256x16xf32>
    %97 = vector.extract_strided_slice %96 {offsets = [0, 1], sizes = [256, 1], strides = [1, 1]} : vector<256x16xf32> to vector<256x1xf32>
    %98 = vector.shape_cast %97 : vector<256x1xf32> to vector<16x16x1xf32>
    %cst_35 = arith.constant -1.000000e+30 : f32
    %99 = vector.broadcast %cst_35 : f32 to vector<18x18x1xf32>
    %c0_36 = arith.constant 0 : index
    %c0_37 = arith.constant 0 : index
    %c0_38 = arith.constant 0 : index
    %100 = vector.load %arg10[%c0_36, %c0_37, %c0_38] : memref<18x18x1xf32, #tpu.memory_space<vmem>>, vector<18x18x1xf32>
    tpu.vector_store %arg10[%c0_36, %c0_37, %c0_38], %99 {strides = array<i32>} : memref<18x18x1xf32, #tpu.memory_space<vmem>>, vector<18x18x1xf32>,
    %c1_39 = arith.constant 1 : index
    %c1_40 = arith.constant 1 : index
    %c0_41 = arith.constant 0 : index
    %101 = vector.load %arg10[%c1_39, %c1_40, %c0_41] : memref<18x18x1xf32, #tpu.memory_space<vmem>>, vector<16x16x1xf32>
    tpu.vector_store %arg10[%c1_39, %c1_40, %c0_41], %98 {strides = array<i32>} : memref<18x18x1xf32, #tpu.memory_space<vmem>>, vector<16x16x1xf32>,
    %c0_42 = arith.constant 0 : index
    %c0_43 = arith.constant 0 : index
    %c0_44 = arith.constant 0 : index
    %102 = vector.load %arg10[%c0_42, %c0_43, %c0_44] : memref<18x18x1xf32, #tpu.memory_space<vmem>>, vector<18x18x1xf32>
    %103 = vector.extract_strided_slice %102 {offsets = [1, 1, 0], sizes = [16, 16, 1], strides = [1, 1, 1]} : vector<18x18x1xf32> to vector<16x16x1xf32>
    %104 = vector.extract_strided_slice %102 {offsets = [0, 0, 0], sizes = [16, 16, 1], strides = [1, 1, 1]} : vector<18x18x1xf32> to vector<16x16x1xf32>
    %105 = arith.maximumf %103, %104 : vector<16x16x1xf32>
    %106 = vector.extract_strided_slice %102 {offsets = [0, 1, 0], sizes = [16, 16, 1], strides = [1, 1, 1]} : vector<18x18x1xf32> to vector<16x16x1xf32>
    %107 = arith.maximumf %105, %106 : vector<16x16x1xf32>
    %108 = vector.extract_strided_slice %102 {offsets = [0, 2, 0], sizes = [16, 16, 1], strides = [1, 1, 1]} : vector<18x18x1xf32> to vector<16x16x1xf32>
    %109 = arith.maximumf %107, %108 : vector<16x16x1xf32>
    %110 = vector.extract_strided_slice %102 {offsets = [1, 0, 0], sizes = [16, 16, 1], strides = [1, 1, 1]} : vector<18x18x1xf32> to vector<16x16x1xf32>
    %111 = arith.maximumf %109, %110 : vector<16x16x1xf32>
    %112 = vector.extract_strided_slice %102 {offsets = [1, 2, 0], sizes = [16, 16, 1], strides = [1, 1, 1]} : vector<18x18x1xf32> to vector<16x16x1xf32>
    %113 = arith.maximumf %111, %112 : vector<16x16x1xf32>
    %114 = vector.extract_strided_slice %102 {offsets = [2, 0, 0], sizes = [16, 16, 1], strides = [1, 1, 1]} : vector<18x18x1xf32> to vector<16x16x1xf32>
    %115 = arith.maximumf %113, %114 : vector<16x16x1xf32>
    %116 = vector.extract_strided_slice %102 {offsets = [2, 1, 0], sizes = [16, 16, 1], strides = [1, 1, 1]} : vector<18x18x1xf32> to vector<16x16x1xf32>
    %117 = arith.maximumf %115, %116 : vector<16x16x1xf32>
    %118 = vector.extract_strided_slice %102 {offsets = [2, 2, 0], sizes = [16, 16, 1], strides = [1, 1, 1]} : vector<18x18x1xf32> to vector<16x16x1xf32>
    %119 = arith.maximumf %117, %118 : vector<16x16x1xf32>
    %120 = arith.cmpf oeq, %103, %119 : vector<16x16x1xf32>
    %cst_45 = arith.constant 0.000000e+00 : f32
    %121 = vector.broadcast %cst_45 : f32 to vector<16x16x1xf32>
    %122 = arith.select %120, %103, %121 : vector<16x16x1xi1>, vector<16x16x1xf32>
    %123 = vector.shape_cast %122 : vector<16x16x1xf32> to vector<256x1xf32>
    %124 = vector.shape_cast %123 : vector<256x1xf32> to vector<256x1xf32>
    %125 = vector.broadcast %124 : vector<256x1xf32> to vector<256x16xf32>
    %c11_i32 = arith.constant 11 : i32
    %126 = vector.broadcast %c11_i32 : i32 to vector<256x16xi32>
    %127 = arith.cmpi eq, %82, %126 : vector<256x16xi32>
    %128 = arith.select %127, %125, %96 : vector<256x16xi1>, vector<256x16xf32>
    %129 = tpu.transpose %128, [1, 0] : vector<256x16xf32> -> vector<16x256xf32>
    %130 = vector.shape_cast %129 : vector<16x256xf32> to vector<1x16x256xf32>
    %c0_46 = arith.constant 0 : index
    %c0_47 = arith.constant 0 : index
    %c0_48 = arith.constant 0 : index
    %131 = vector.load %arg7[%c0_46, %c0_47, %c0_48] : memref<1x16x256xf32, #tpu.memory_space<vmem>>, vector<1x16x256xf32>
    tpu.vector_store %arg7[%c0_46, %c0_47, %c0_48], %130 {strides = array<i32>} : memref<1x16x256xf32, #tpu.memory_space<vmem>>, vector<1x16x256xf32>,
    return
  }
  func.func @transform_0(%arg0: i32) -> (i32, i32, i32, i32) {
    %c0_i32 = arith.constant 0 : i32
    %c0_i32_0 = arith.constant 0 : i32
    %c0_i32_1 = arith.constant 0 : i32
    %c0_i32_2 = arith.constant 0 : i32
    return %arg0, %c0_i32, %c0_i32_0, %c0_i32_1 : i32, i32, i32, i32
  }
  func.func @transform_1(%arg0: i32) -> (i32, i32) {
    %c0_i32 = arith.constant 0 : i32
    %c0_i32_0 = arith.constant 0 : i32
    %c0_i32_1 = arith.constant 0 : i32
    return %c0_i32, %c0_i32_0 : i32, i32
  }
  func.func @transform_2(%arg0: i32) -> (i32, i32) {
    %c0_i32 = arith.constant 0 : i32
    %c0_i32_0 = arith.constant 0 : i32
    %c0_i32_1 = arith.constant 0 : i32
    return %c0_i32, %c0_i32_0 : i32, i32
  }
  func.func @transform_3(%arg0: i32) -> (i32, i32) {
    %c0_i32 = arith.constant 0 : i32
    %c0_i32_0 = arith.constant 0 : i32
    %c0_i32_1 = arith.constant 0 : i32
    return %c0_i32, %c0_i32_0 : i32, i32
  }
  func.func @transform_4(%arg0: i32) -> (i32, i32) {
    %c0_i32 = arith.constant 0 : i32
    %c0_i32_0 = arith.constant 0 : i32
    %c0_i32_1 = arith.constant 0 : i32
    return %c0_i32, %c0_i32_0 : i32, i32
  }
  func.func @transform_5(%arg0: i32) -> (i32, i32) {
    %c0_i32 = arith.constant 0 : i32
    %c0_i32_0 = arith.constant 0 : i32
    %c0_i32_1 = arith.constant 0 : i32
    return %c0_i32, %c0_i32_0 : i32, i32
  }
  func.func @transform_6(%arg0: i32) -> (i32, i32, i32) {
    %c0_i32 = arith.constant 0 : i32
    %c0_i32_0 = arith.constant 0 : i32
    %c0_i32_1 = arith.constant 0 : i32
    return %arg0, %c0_i32, %c0_i32_0 : i32, i32, i32
  }
}

</mosaic_0001>

<llo_original>
// kernel: squeeze.11
$region0: #{squeeze.11}
  %s0 = inlined_call_operand.vmem [shape: f32[2,1,16,16], index: 0, kind: input, shape index: {}]
  %s1 = inlined_call_operand.vmem [shape: f32[2,256], index: 1, kind: output, shape index: {}]
  $region1: #{squeeze.11} parent=0
    #allocation0 [shape = 'u8[8192]{0}', space=vmem, size = 0x2000, scoped, tag = 'scoped mem for output reshape']
    %v2 = vld [vmem:[%s0] ss:$8 sm:$0xf]
    %vm3 = vcmask 130048
    %4 = vst.msk [vmem:[#allocation0] ss:$8 sm:$0x3] %vm3, %v2
    %s5 = scalar_lea.vmem [#allocation0], 4294967281
    %6 = vst.msk [vmem:[%s5] ss:$8 sm:$0xc] %vm3, %v2
    %s7 = scalar_lea.vmem %s0, 7
    %s8 = smov 3
    %v9 = vld [vmem:[%s7] ss:$16 sm:%s8]
    %s10 = scalar_lea.vmem %s0, 4294967279
    %s11 = smov 12
    %v12 = vld [vmem:[%s10] ss:$16 sm:%s11]
    %vm13 = vcmask 1043458
    %v14 = vsel %vm13, %v12, %v9
    %15 = vrot.lane.b32.xlu0 %v14, 112
    %v16 = vpop.permute.xlu0 %15
    %vm17 = vcmask 1048448
    %18 = vst.msk [vmem:[#allocation0] sm:$0x3] %vm17, %v16
    %s19 = scalar_lea.vmem [#allocation0], 6
    %20 = vst.msk [vmem:[%s19] sm:$0xc] %vm17, %v16
    %s21 = scalar_lea.vmem %s0, 6
    %s22 = smov 3
    %v23 = vld [vmem:[%s21] ss:$16 sm:%s22]
    %s24 = scalar_lea.vmem %s0, 4294967278
    %s25 = smov 12
    %v26 = vld [vmem:[%s24] ss:$16 sm:%s25]
    %vm27 = vcmask 1043458
    %v28 = vsel %vm27, %v26, %v23
    %29 = vrot.lane.b32.xlu0 %v28, 96
    %v30 = vpop.permute.xlu0 %29
    %vm31 = vcmask 917248
    %32 = vst.msk [vmem:[#allocation0] sm:$0x3] %vm31, %v30
    %s33 = scalar_lea.vmem [#allocation0], 6
    %34 = vst.msk [vmem:[%s33] sm:$0xc] %vm31, %v30
    %s35 = scalar_lea.vmem %s0, 5
    %s36 = smov 3
    %v37 = vld [vmem:[%s35] ss:$16 sm:%s36]
    %s38 = scalar_lea.vmem %s0, 4294967277
    %s39 = smov 12
    %v40 = vld [vmem:[%s38] ss:$16 sm:%s39]
    %vm41 = vcmask 1043458
    %v42 = vsel %vm41, %v40, %v37
    %43 = vrot.lane.b32.xlu0 %v42, 80
    %v44 = vpop.permute.xlu0 %43
    %vm45 = vcmask 786048
    %46 = vst.msk [vmem:[#allocation0] sm:$0x3] %vm45, %v44
    %s47 = scalar_lea.vmem [#allocation0], 6
    %48 = vst.msk [vmem:[%s47] sm:$0xc] %vm45, %v44
    %s49 = scalar_lea.vmem %s0, 4
    %s50 = smov 3
    %v51 = vld [vmem:[%s49] ss:$16 sm:%s50]
    %s52 = scalar_lea.vmem %s0, 4294967276
    %s53 = smov 12
    %v54 = vld [vmem:[%s52] ss:$16 sm:%s53]
    %vm55 = vcmask 1043458
    %v56 = vsel %vm55, %v54, %v51
    %57 = vrot.lane.b32.xlu0 %v56, 64
    %v58 = vpop.permute.xlu0 %57
    %vm59 = vcmask 654848
    %60 = vst.msk [vmem:[#allocation0] sm:$0x3] %vm59, %v58
    %s61 = scalar_lea.vmem [#allocation0], 6
    %62 = vst.msk [vmem:[%s61] sm:$0xc] %vm59, %v58
    %s63 = scalar_lea.vmem %s0, 3
    %s64 = smov 3
    %v65 = vld [vmem:[%s63] ss:$16 sm:%s64]
    %s66 = scalar_lea.vmem %s0, 4294967275
    %s67 = smov 12
    %v68 = vld [vmem:[%s66] ss:$16 sm:%s67]
    %vm69 = vcmask 1043458
    %v70 = vsel %vm69, %v68, %v65
    %71 = vrot.lane.b32.xlu0 %v70, 48
    %v72 = vpop.permute.xlu0 %71
    %vm73 = vcmask 523648
    %74 = vst.msk [vmem:[#allocation0] sm:$0x3] %vm73, %v72
    %s75 = scalar_lea.vmem [#allocation0], 6
    %76 = vst.msk [vmem:[%s75] sm:$0xc] %vm73, %v72
    %s77 = scalar_lea.vmem %s0, 2
    %s78 = smov 3
    %v79 = vld [vmem:[%s77] ss:$16 sm:%s78]
    %s80 = scalar_lea.vmem %s0, 4294967274
    %s81 = smov 12
    %v82 = vld [vmem:[%s80] ss:$16 sm:%s81]
    %vm83 = vcmask 1043458
    %v84 = vsel %vm83, %v82, %v79
    %85 = vrot.lane.b32.xlu0 %v84, 32
    %v86 = vpop.permute.xlu0 %85
    %vm87 = vcmask 392448
    %88 = vst.msk [vmem:[#allocation0] sm:$0x3] %vm87, %v86
    %s89 = scalar_lea.vmem [#allocation0], 6
    %90 = vst.msk [vmem:[%s89] sm:$0xc] %vm87, %v86
    %s91 = scalar_lea.vmem %s0, 1
    %s92 = smov 3
    %v93 = vld [vmem:[%s91] ss:$16 sm:%s92]
    %s94 = scalar_lea.vmem %s0, 4294967273
    %s95 = smov 12
    %v96 = vld [vmem:[%s94] ss:$16 sm:%s95]
    %vm97 = vcmask 1043458
    %v98 = vsel %vm97, %v96, %v93
    %99 = vrot.lane.b32.xlu0 %v98, 16
    %v100 = vpop.permute.xlu0 %99
    %vm101 = vcmask 261248
    %102 = vst.msk [vmem:[#allocation0] sm:$0x3] %vm101, %v100
    %s103 = scalar_lea.vmem [#allocation0], 6
    %104 = vst.msk [vmem:[%s103] sm:$0xc] %vm101, %v100
    %s106 = sshll.u32 1, 2
    %s107 = ssub.s32 %s106, 1
    %v109 = vld [vmem:[#allocation0] sm:%s107]
    %s110 = sshll.u32 1, 2
    %s111 = ssub.s32 %s110, 1
    %112 = vst [vmem:[%s1] sm:%s111] %v109
    %s113 = scalar_lea.vmem [#allocation0], 8
    %v114 = vld [vmem:[%s113] sm:%s107]
    %s115 = sshll.u32 1, 2
    %s116 = ssub.s32 %s115, 1
    %s117 = scalar_lea.vmem %s1, 2
    %118 = vst [vmem:[%s117] sm:%s116] %v114

// kernel: _forward_impl.1
$region0: #{_forward_impl.1}
  #allocation0 [shape = 'u32[]', space=smem, size = 0x4, offset = 0x4, fixed_abs, tag = 'smem constant byte address 0x4 - core index']
  #allocation1 [shape = 'u32[144,128]{1,0:T(1,128)}', space=vmem, size = 0x12000, scoped, tag = 'internal scratch']
  #allocation2 [shape = 'f32[18,18,32]{2,1,0:T(8,128)}', space=vmem, size = 0x36000, scoped, tag = 'scratch operand']
  #allocation3 [shape = 'f32[18,18,48]{2,1,0:T(8,128)}', space=vmem, size = 0x36000, scoped, tag = 'scratch operand']
  #allocation4 [shape = 'f32[18,18,1]{2,1,0:T(8,128)}', space=vmem, size = 0x36000, scoped, tag = 'scratch operand']
  %s0 = inlined_call_operand.hbm [shape: f32[2,16,16,32], index: 0, kind: input, shape index: {}]
  %s1 = inlined_call_operand.hbm [shape: bf16[288,48], index: 1, kind: input, shape index: {}]
  %s2 = inlined_call_operand.vmem [shape: f32[1,48], index: 2, kind: input, shape index: {}]
  %s3 = inlined_call_operand.vmem [shape: f32[1,48], index: 3, kind: input, shape index: {}]
  %s4 = inlined_call_operand.hbm [shape: bf16[432,16], index: 4, kind: input, shape index: {}]
  %s5 = inlined_call_operand.vmem [shape: f32[1,16], index: 5, kind: input, shape index: {}]
  %s6 = inlined_call_operand.vmem [shape: f32[2,16,256], index: 6, kind: output, shape index: {}]
  %s7 = sld [smem:[#allocation0]]
  $region69: #{_forward_impl.1} parent=0
    _
  %s9 = ssub.s32 1, %s7
  %s10 = scalar_select 0, %s9, %s7
  $region1: #{_forward_impl.1} parent=0
    #allocation5 [shape = 'u8[262144]{0}', space=vmem, size = 0x40000, scoped, tag = 'input window, operand 0']
    #allocation6 [shape = 's32[2]{0}', space=sflag, size = 0x8, scoped, tag = 'scoped memory for _forward_impl.1']
    #allocation7 [shape = 'u8[73728]{0}', space=vmem, size = 0x12000, scoped, tag = 'input window, operand 1, single buffered']
    #allocation8 [shape = 's32[1]{0}', space=sflag, size = 0x4, scoped, tag = 'scoped memory for _forward_impl.1']
    #allocation9 [shape = 'u8[110592]{0}', space=vmem, size = 0x1b000, scoped, tag = 'input window, operand 4, single buffered']
    %11 = vsyncpa [#allocation6], 0
    %s12 = scalar_lea.sflag [#allocation6], 1
    %13 = vsyncpa %s12, 0
    %14 = vsyncpa [#allocation8], 0
    loop: start=0, step=1, limit=4
    $region2: #{_forward_impl.1} parent=1 // loop_pre_header
      _
    $region3: #{_forward_impl.1} parent=1 // loop_header
      %s16 = sphi 0, %s20
      %p17 = scmp.ge.s32.totalorder %s16, 4
      %s26 = sphi 0, %s28
      %s29 = sphi 0, %s26
      %s30 = sphi 0, %s29
      %s46 = sphi 0, %s30
      %s50 = sphi 0, %s50
      %s52 = sphi 0, %s50
      %s53 = sphi 0, %s52
      %s67 = sphi 0, %s53
      %s71 = sphi 0, %s71
      %s73 = sphi 0, %s71
      %s74 = sphi 0, %s73
      %s88 = sphi 0, %s74
      %s92 = sphi 0, %s92
      %s94 = sphi 0, %s92
      %s95 = sphi 0, %s94
      %s109 = sphi 0, %s95
      %s113 = sphi 0, %s113
      %s115 = sphi 0, %s113
      %s116 = sphi 0, %s115
      %s130 = sphi 0, %s116
      %s134 = sphi 0, %s134
      %s136 = sphi 0, %s134
      %s137 = sphi 0, %s136
      %s151 = sphi 0, %s137
      %s157 = sphi 0, %s159
      %s160 = sphi 0, %s157
      %s161 = sphi 0, %s160
      %s177 = sphi 0, %s161
    $region4: #{_forward_impl.1} parent=1 // loop_header_branch
      %19 = sbr.rel (%p17) target = $region8
    $region5: #{_forward_impl.1} parent=1 // loop_body
      %s21 = ssub.s32 %s16, 1
      %s22 = ssub.s32 %s16, 2
      %s23 = sadd.s32 %s16, 1
      %s24 = ssub.s32 %s16, %s23
      %p25 = scmp.eq.s32.totalorder %s24, 0
      %s27 = sadd.s32 %s26, 1
      %s28 = scalar_select %p25, %s26, %s27
      %p31 = pneg %p25
      %p32 = scmp.eq.s32.totalorder %s16, 1
      %p33 = por %p31, %p32
      %p34 = scmp.ne.s32.totalorder %s26, %s29
      %p35 = scmp.eq.s32.totalorder %s16, 0
      %p36 = por %p34, %p35
      %p37 = scmp.ne.s32.totalorder %s26, %s29
      %p38 = scmp.eq.s32.totalorder %s21, 1
      %p39 = por %p37, %p38
      %p40 = scmp.ne.s32.totalorder %s29, %s30
      %p41 = scmp.eq.s32.totalorder %s21, 0
      %p42 = por %p40, %p41
      %p43 = scmp.ne.s32.totalorder %s29, %s30
      %p44 = scmp.eq.s32.totalorder %s22, 1
      %p45 = por %p43, %p44
      %p47 = scmp.ne.s32.totalorder %s30, %s46
      %p48 = scmp.eq.s32.totalorder %s22, 0
      %p49 = por %p47, %p48
      %s51 = sadd.s32 %s50, 1
      %p54 = scmp.eq.s32.totalorder %s16, 1
      %p55 = scmp.ne.s32.totalorder %s50, %s52
      %p56 = scmp.eq.s32.totalorder %s16, 0
      %p57 = por %p55, %p56
      %p58 = scmp.ne.s32.totalorder %s50, %s52
      %p59 = scmp.eq.s32.totalorder %s21, 1
      %p60 = por %p58, %p59
      %p61 = scmp.ne.s32.totalorder %s52, %s53
      %p62 = scmp.eq.s32.totalorder %s21, 0
      %p63 = por %p61, %p62
      %p64 = scmp.ne.s32.totalorder %s52, %s53
      %p65 = scmp.eq.s32.totalorder %s22, 1
      %p66 = por %p64, %p65
      %p68 = scmp.ne.s32.totalorder %s53, %s67
      %p69 = scmp.eq.s32.totalorder %s22, 0
      %p70 = por %p68, %p69
      %s72 = sadd.s32 %s71, 1
      %p75 = scmp.eq.s32.totalorder %s16, 1
      %p76 = scmp.ne.s32.totalorder %s71, %s73
      %p77 = scmp.eq.s32.totalorder %s16, 0
      %p78 = por %p76, %p77
      %p79 = scmp.ne.s32.totalorder %s71, %s73
      %p80 = scmp.eq.s32.totalorder %s21, 1
      %p81 = por %p79, %p80
      %p82 = scmp.ne.s32.totalorder %s73, %s74
      %p83 = scmp.eq.s32.totalorder %s21, 0
      %p84 = por %p82, %p83
      %p85 = scmp.ne.s32.totalorder %s73, %s74
      %p86 = scmp.eq.s32.totalorder %s22, 1
      %p87 = por %p85, %p86
      %p89 = scmp.ne.s32.totalorder %s74, %s88
      %p90 = scmp.eq.s32.totalorder %s22, 0
      %p91 = por %p89, %p90
      %s93 = sadd.s32 %s92, 1
      %p96 = scmp.eq.s32.totalorder %s16, 1
      %p97 = scmp.ne.s32.totalorder %s92, %s94
      %p98 = scmp.eq.s32.totalorder %s16, 0
      %p99 = por %p97, %p98
      %p100 = scmp.ne.s32.totalorder %s92, %s94
      %p101 = scmp.eq.s32.totalorder %s21, 1
      %p102 = por %p100, %p101
      %p103 = scmp.ne.s32.totalorder %s94, %s95
      %p104 = scmp.eq.s32.totalorder %s21, 0
      %p105 = por %p103, %p104
      %p106 = scmp.ne.s32.totalorder %s94, %s95
      %p107 = scmp.eq.s32.totalorder %s22, 1
      %p108 = por %p106, %p107
      %p110 = scmp.ne.s32.totalorder %s95, %s109
      %p111 = scmp.eq.s32.totalorder %s22, 0
      %p112 = por %p110, %p111
      %s114 = sadd.s32 %s113, 1
      %p117 = scmp.eq.s32.totalorder %s16, 1
      %p118 = scmp.ne.s32.totalorder %s113, %s115
      %p119 = scmp.eq.s32.totalorder %s16, 0
      %p120 = por %p118, %p119
      %p121 = scmp.ne.s32.totalorder %s113, %s115
      %p122 = scmp.eq.s32.totalorder %s21, 1
      %p123 = por %p121, %p122
      %p124 = scmp.ne.s32.totalorder %s115, %s116
      %p125 = scmp.eq.s32.totalorder %s21, 0
      %p126 = por %p124, %p125
      %p127 = scmp.ne.s32.totalorder %s115, %s116
      %p128 = scmp.eq.s32.totalorder %s22, 1
      %p129 = por %p127, %p128
      %p131 = scmp.ne.s32.totalorder %s116, %s130
      %p132 = scmp.eq.s32.totalorder %s22, 0
      %p133 = por %p131, %p132
      %s135 = sadd.s32 %s134, 1
      %p138 = scmp.eq.s32.totalorder %s16, 1
      %p139 = scmp.ne.s32.totalorder %s134, %s136
      %p140 = scmp.eq.s32.totalorder %s16, 0
      %p141 = por %p139, %p140
      %p142 = scmp.ne.s32.totalorder %s134, %s136
      %p143 = scmp.eq.s32.totalorder %s21, 1
      %p144 = por %p142, %p143
      %p145 = scmp.ne.s32.totalorder %s136, %s137
      %p146 = scmp.eq.s32.totalorder %s21, 0
      %p147 = por %p145, %p146
      %p148 = scmp.ne.s32.totalorder %s136, %s137
      %p149 = scmp.eq.s32.totalorder %s22, 1
      %p150 = por %p148, %p149
      %p152 = scmp.ne.s32.totalorder %s137, %s151
      %p153 = scmp.eq.s32.totalorder %s22, 0
      %p154 = por %p152, %p153
      %s155 = ssub.s32 %s16, %s23
      %p156 = scmp.eq.s32.totalorder %s155, 0
      %s158 = sadd.s32 %s157, 1
      %s159 = scalar_select %p156, %s157, %s158
      %p162 = pneg %p156
      %p163 = scmp.eq.s32.totalorder %s16, 1
      %p164 = por %p162, %p163
      %p165 = scmp.ne.s32.totalorder %s157, %s160
      %p166 = scmp.eq.s32.totalorder %s16, 0
      %p167 = por %p165, %p166
      %p168 = scmp.ne.s32.totalorder %s157, %s160
      %p169 = scmp.eq.s32.totalorder %s21, 1
      %p170 = por %p168, %p169
      %p171 = scmp.ne.s32.totalorder %s160, %s161
      %p172 = scmp.eq.s32.totalorder %s21, 0
      %p173 = por %p171, %p172
      %p174 = scmp.ne.s32.totalorder %s160, %s161
      %p175 = scmp.eq.s32.totalorder %s22, 1
      %p176 = por %p174, %p175
      %p178 = scmp.ne.s32.totalorder %s161, %s177
      %p179 = scmp.eq.s32.totalorder %s22, 0
      %p180 = por %p178, %p179
      %p181 = scmp.le.s32.totalorder 1, %s16
      %p182 = scmp.lt.s32.totalorder %s16, 3
      %p183 = pnand %p181, %p182
      %p184 = pneg %p183
      // Predicated region
      $region9: #{_forward_impl.1} parent=5 // pred_check
        _
      $region10: #{_forward_impl.1} parent=5 // pred_check_branch
        %186 = sbr.rel (%p183) target = $region12
      $region11: #{_forward_impl.1} parent=5 // pred_region
        %s187 = ssub.s32 %s16, 1
        // Predicated region
        $region13: #{_forward_impl.1} parent=11 // pred_check
          %p188 = pneg %p63
        $region14: #{_forward_impl.1} parent=11 // pred_check_branch
          %190 = sbr.rel (%p188) target = $region16
        $region15: #{_forward_impl.1} parent=11 // pred_region
          %s192 = ssub.s32 2304, 2304
          %193 = vsyncadd [#allocation8], %s192
          %s194 = sshll.u32 [#allocation7], 4
          %s195 = int_to_ptr.vmem [resolvable:$true] %s194
          %200 = dma.hbm_to_vmem [thread:$0]  %s1, 2304, %s195, [#allocation8], 64, 64, 4
        $region16: #{_forward_impl.1} parent=11 // pred_fallthru
          _
        // Predicated region
        $region17: #{_forward_impl.1} parent=11 // pred_check
          %p201 = pneg %p84
        $region18: #{_forward_impl.1} parent=11 // pred_check_branch
          %203 = sbr.rel (%p201) target = $region20
        $region19: #{_forward_impl.1} parent=11 // pred_region
          _
        $region20: #{_forward_impl.1} parent=11 // pred_fallthru
          _
        // Predicated region
        $region21: #{_forward_impl.1} parent=11 // pred_check
          %p204 = pneg %p105
        $region22: #{_forward_impl.1} parent=11 // pred_check_branch
          %206 = sbr.rel (%p204) target = $region24
        $region23: #{_forward_impl.1} parent=11 // pred_region
          _
        $region24: #{_forward_impl.1} parent=11 // pred_fallthru
          _
        // Predicated region
        $region25: #{_forward_impl.1} parent=11 // pred_check
          %p207 = pneg %p126
        $region26: #{_forward_impl.1} parent=11 // pred_check_branch
          %209 = sbr.rel (%p207) target = $region28
        $region27: #{_forward_impl.1} parent=11 // pred_region
          %s211 = ssub.s32 3456, 3456
          %212 = vsyncadd [#allocation8], %s211
          %s213 = sshll.u32 [#allocation9], 4
          %s214 = int_to_ptr.vmem [resolvable:$true] %s213
          %219 = dma.hbm_to_vmem [thread:$0]  %s4, 3456, %s214, [#allocation8], 64, 64, 4
        $region28: #{_forward_impl.1} parent=11 // pred_fallthru
          _
        // Predicated region
        $region29: #{_forward_impl.1} parent=11 // pred_check
          %p220 = pneg %p147
        $region30: #{_forward_impl.1} parent=11 // pred_check_branch
          %222 = sbr.rel (%p220) target = $region32
        $region31: #{_forward_impl.1} parent=11 // pred_region
          _
        $region32: #{_forward_impl.1} parent=11 // pred_fallthru
          _
      $region12: #{_forward_impl.1} parent=5 // pred_fallthru
        _
      %p223 = scmp.lt.s32.totalorder %s16, 2
      // Predicated region
      $region33: #{_forward_impl.1} parent=5 // pred_check
        %p224 = pneg %p223
      $region34: #{_forward_impl.1} parent=5 // pred_check_branch
        %226 = sbr.rel (%p224) target = $region36
      $region35: #{_forward_impl.1} parent=5 // pred_region
        // Predicated region
        $region37: #{_forward_impl.1} parent=35 // pred_check
          %p227 = pneg %p36
        $region38: #{_forward_impl.1} parent=35 // pred_check_branch
          %229 = sbr.rel (%p227) target = $region40
        $region39: #{_forward_impl.1} parent=35 // pred_region
          %s230 = sand.u32 %s26, 1
          %s231 = scalar_lea.sflag [#allocation6], %s230
          %s232 = sand.u32 %s26, 1
          %s233 = smul.addr %s232, 256
          %s234 = scalar_lea.vmem [#allocation5], %s233
          %s236 = ssub.s32 4096, 4096
          %237 = vsyncadd %s231, %s236
          %s238 = smul.addr %s16, 32
          %s239 = smul.addr %s238, 128
          %s240 = scalar_lea.hbm %s0, %s239
          %s241 = sshll.u32 %s234, 4
          %s242 = int_to_ptr.vmem [resolvable:$true] %s241
          %247 = dma.hbm_to_vmem [thread:$0]  %s240, 4096, %s242, %s231, 128, 128, 8
        $region40: #{_forward_impl.1} parent=35 // pred_fallthru
          _
      $region36: #{_forward_impl.1} parent=5 // pred_fallthru
        _
      %p248 = scmp.le.s32.totalorder 1, %s16
      %p249 = scmp.lt.s32.totalorder %s16, 3
      %p250 = pnand %p248, %p249
      %p251 = pneg %p250
      // Predicated region
      $region41: #{_forward_impl.1} parent=5 // pred_check
        _
      $region42: #{_forward_impl.1} parent=5 // pred_check_branch
        %253 = sbr.rel (%p250) target = $region44
      $region43: #{_forward_impl.1} parent=5 // pred_region
        %s254 = ssub.s32 %s16, 1
        %s255 = sand.u32 %s29, 1
        %s256 = scalar_lea.sflag [#allocation6], %s255
        %s257 = sand.u32 %s29, 1
        %s258 = smul.addr %s257, 256
        %s259 = scalar_lea.vmem [#allocation5], %s258
        // Predicated region
        $region45: #{_forward_impl.1} parent=43 // pred_check
          %p260 = pneg %p42
        $region46: #{_forward_impl.1} parent=43 // pred_check_branch
          %262 = sbr.rel (%p260) target = $region48
        $region47: #{_forward_impl.1} parent=43 // pred_region
          %263 = dma.done %s256, 4096
        $region48: #{_forward_impl.1} parent=43 // pred_fallthru
          _
        // Predicated region
        $region49: #{_forward_impl.1} parent=43 // pred_check
          %p264 = pneg %p63
        $region50: #{_forward_impl.1} parent=43 // pred_check_branch
          %266 = sbr.rel (%p264) target = $region52
        $region51: #{_forward_impl.1} parent=43 // pred_region
          %267 = dma.done [#allocation8], 2304
        $region52: #{_forward_impl.1} parent=43 // pred_fallthru
          _
        // Predicated region
        $region53: #{_forward_impl.1} parent=43 // pred_check
          %p268 = pneg %p126
        $region54: #{_forward_impl.1} parent=43 // pred_check_branch
          %270 = sbr.rel (%p268) target = $region56
        $region55: #{_forward_impl.1} parent=43 // pred_region
          %271 = dma.done [#allocation8], 3456
        $region56: #{_forward_impl.1} parent=43 // pred_fallthru
          _
        %s272 = sand.u32 %s29, 1
        %s273 = scalar_lea.sflag [#allocation6], %s272
        %s274 = sand.u32 %s29, 1
        %s275 = smul.addr %s274, 256
        %s276 = scalar_lea.vmem [#allocation5], %s275
        %p277 = pneg %p42
        %p278 = pneg %p39
        %p279 = pneg %p63
        %p280 = pneg %p60
        %p281 = pneg %p84
        %p282 = pneg %p81
        %p283 = pneg %p105
        %p284 = pneg %p102
        %p285 = pneg %p126
        %p286 = pneg %p123
        %p287 = pneg %p147
        %p288 = pneg %p144
        %p289 = pneg %p173
        %p290 = pneg %p170
        %p291 = scmp.lt.s32.totalorder %s21, 1
        %s292 = scalar_select %p291, %s21, 1
        %s293 = smul.addr %s292, 4
        %s294 = smul.addr %s293, 8
        %s295 = scalar_lea.vmem %s6, %s294
        %p296 = scmp.lt.s32.totalorder %s21, 1
        %s297 = scalar_select %p296, %s21, 1
        %s298 = smul.addr %s297, 4
        %s299 = smul.addr %s298, 8
        %s300 = scalar_lea.vmem %s6, %s299
        %vm302 = vcmask 261120
        %303 = vst.msk [vmem:[#allocation2] sm:$0xff] %vm302, 0.0
        %304 = vst.msk [vmem:[#allocation2 + $0x8] sm:$0xff] %vm302, 0.0
        %vm305 = vcmask 254976
        %306 = vst.msk [vmem:[#allocation2 + $0x10] sm:$0x3] %vm305, 0.0
        %307 = vst.msk [vmem:[#allocation2 + $0x18] sm:$0xff] %vm302, 0.0
        %308 = vst.msk [vmem:[#allocation2 + $0x20] sm:$0xff] %vm302, 0.0
        %309 = vst.msk [vmem:[#allocation2 + $0x28] sm:$0x3] %vm305, 0.0
        %310 = vst.msk [vmem:[#allocation2 + $0x30] sm:$0xff] %vm302, 0.0
        %311 = vst.msk [vmem:[#allocation2 + $0x38] sm:$0xff] %vm302, 0.0
        %312 = vst.msk [vmem:[#allocation2 + $0x40] sm:$0x3] %vm305, 0.0
        %313 = vst.msk [vmem:[#allocation2 + $0x48] sm:$0xff] %vm302, 0.0
        %314 = vst.msk [vmem:[#allocation2 + $0x50] sm:$0xff] %vm302, 0.0
        %315 = vst.msk [vmem:[#allocation2 + $0x58] sm:$0x3] %vm305, 0.0
        %316 = vst.msk [vmem:[#allocation2 + $0x60] sm:$0xff] %vm302, 0.0
        %317 = vst.msk [vmem:[#allocation2 + $0x68] sm:$0xff] %vm302, 0.0
        %318 = vst.msk [vmem:[#allocation2 + $0x70] sm:$0x3] %vm305, 0.0
        %319 = vst.msk [vmem:[#allocation2 + $0x78] sm:$0xff] %vm302, 0.0
        %320 = vst.msk [vmem:[#allocation2 + $0x80] sm:$0xff] %vm302, 0.0
        %321 = vst.msk [vmem:[#allocation2 + $0x88] sm:$0x3] %vm305, 0.0
        %322 = vst.msk [vmem:[#allocation2 + $0x90] sm:$0xff] %vm302, 0.0
        %323 = vst.msk [vmem:[#allocation2 + $0x98] sm:$0xff] %vm302, 0.0
        %324 = vst.msk [vmem:[#allocation2 + $0xa0] sm:$0x3] %vm305, 0.0
        %325 = vst.msk [vmem:[#allocation2 + $0xa8] sm:$0xff] %vm302, 0.0
        %326 = vst.msk [vmem:[#allocation2 + $0xb0] sm:$0xff] %vm302, 0.0
        %327 = vst.msk [vmem:[#allocation2 + $0xb8] sm:$0x3] %vm305, 0.0
        %328 = vst.msk [vmem:[#allocation2 + $0xc0] sm:$0xff] %vm302, 0.0
        %329 = vst.msk [vmem:[#allocation2 + $0xc8] sm:$0xff] %vm302, 0.0
        %330 = vst.msk [vmem:[#allocation2 + $0xd0] sm:$0x3] %vm305, 0.0
        %331 = vst.msk [vmem:[#allocation2 + $0xd8] sm:$0xff] %vm302, 0.0
        %332 = vst.msk [vmem:[#allocation2 + $0xe0] sm:$0xff] %vm302, 0.0
        %333 = vst.msk [vmem:[#allocation2 + $0xe8] sm:$0x3] %vm305, 0.0
        %334 = vst.msk [vmem:[#allocation2 + $0xf0] sm:$0xff] %vm302, 0.0
        %335 = vst.msk [vmem:[#allocation2 + $0xf8] sm:$0xff] %vm302, 0.0
        %336 = vst.msk [vmem:[#allocation2 + $0x100] sm:$0x3] %vm305, 0.0
        %337 = vst.msk [vmem:[#allocation2 + $0x108] sm:$0xff] %vm302, 0.0
        %338 = vst.msk [vmem:[#allocation2 + $0x110] sm:$0xff] %vm302, 0.0
        %339 = vst.msk [vmem:[#allocation2 + $0x118] sm:$0x3] %vm305, 0.0
        %340 = vst.msk [vmem:[#allocation2 + $0x120] sm:$0xff] %vm302, 0.0
        %341 = vst.msk [vmem:[#allocation2 + $0x128] sm:$0xff] %vm302, 0.0
        %342 = vst.msk [vmem:[#allocation2 + $0x130] sm:$0x3] %vm305, 0.0
        %343 = vst.msk [vmem:[#allocation2 + $0x138] sm:$0xff] %vm302, 0.0
        %344 = vst.msk [vmem:[#allocation2 + $0x140] sm:$0xff] %vm302, 0.0
        %345 = vst.msk [vmem:[#allocation2 + $0x148] sm:$0x3] %vm305, 0.0
        %346 = vst.msk [vmem:[#allocation2 + $0x150] sm:$0xff] %vm302, 0.0
        %347 = vst.msk [vmem:[#allocation2 + $0x158] sm:$0xff] %vm302, 0.0
        %348 = vst.msk [vmem:[#allocation2 + $0x160] sm:$0x3] %vm305, 0.0
        %349 = vst.msk [vmem:[#allocation2 + $0x168] sm:$0xff] %vm302, 0.0
        %350 = vst.msk [vmem:[#allocation2 + $0x170] sm:$0xff] %vm302, 0.0
        %351 = vst.msk [vmem:[#allocation2 + $0x178] sm:$0x3] %vm305, 0.0
        %352 = vst.msk [vmem:[#allocation2 + $0x180] sm:$0xff] %vm302, 0.0
        %353 = vst.msk [vmem:[#allocation2 + $0x188] sm:$0xff] %vm302, 0.0
        %354 = vst.msk [vmem:[#allocation2 + $0x190] sm:$0x3] %vm305, 0.0
        %355 = vst.msk [vmem:[#allocation2 + $0x198] sm:$0xff] %vm302, 0.0
        %356 = vst.msk [vmem:[#allocation2 + $0x1a0] sm:$0xff] %vm302, 0.0
        %357 = vst.msk [vmem:[#allocation2 + $0x1a8] sm:$0x3] %vm305, 0.0
        %v358 = vld [vmem:[%s259] sm:$0xff]
        %v359 = vld [vmem:[%s259 + $0x8] sm:$0xff]
        %v360 = vld [vmem:[%s259 + $0x10] sm:$0xff]
        %v361 = vld [vmem:[%s259 + $0x18] sm:$0xff]
        %v362 = vld [vmem:[%s259 + $0x20] sm:$0xff]
        %v363 = vld [vmem:[%s259 + $0x28] sm:$0xff]
        %v364 = vld [vmem:[%s259 + $0x30] sm:$0xff]
        %v365 = vld [vmem:[%s259 + $0x38] sm:$0xff]
        %v366 = vld [vmem:[%s259 + $0x40] sm:$0xff]
        %v367 = vld [vmem:[%s259 + $0x48] sm:$0xff]
        %v368 = vld [vmem:[%s259 + $0x50] sm:$0xff]
        %v369 = vld [vmem:[%s259 + $0x58] sm:$0xff]
        %v370 = vld [vmem:[%s259 + $0x60] sm:$0xff]
        %v371 = vld [vmem:[%s259 + $0x68] sm:$0xff]
        %v372 = vld [vmem:[%s259 + $0x70] sm:$0xff]
        %v373 = vld [vmem:[%s259 + $0x78] sm:$0xff]
        %v374 = vld [vmem:[%s259 + $0x80] sm:$0xff]
        %v375 = vld [vmem:[%s259 + $0x88] sm:$0xff]
        %v376 = vld [vmem:[%s259 + $0x90] sm:$0xff]
        %v377 = vld [vmem:[%s259 + $0x98] sm:$0xff]
        %v378 = vld [vmem:[%s259 + $0xa0] sm:$0xff]
        %v379 = vld [vmem:[%s259 + $0xa8] sm:$0xff]
        %v380 = vld [vmem:[%s259 + $0xb0] sm:$0xff]
        %v381 = vld [vmem:[%s259 + $0xb8] sm:$0xff]
        %v382 = vld [vmem:[%s259 + $0xc0] sm:$0xff]
        %v383 = vld [vmem:[%s259 + $0xc8] sm:$0xff]
        %v384 = vld [vmem:[%s259 + $0xd0] sm:$0xff]
        %v385 = vld [vmem:[%s259 + $0xd8] sm:$0xff]
        %v386 = vld [vmem:[%s259 + $0xe0] sm:$0xff]
        %v387 = vld [vmem:[%s259 + $0xe8] sm:$0xff]
        %v388 = vld [vmem:[%s259 + $0xf0] sm:$0xff]
        %v389 = vld [vmem:[%s259 + $0xf8] sm:$0xff]
        %s390 = scalar_lea.vmem [#allocation2], 24
        %391 = vst.msk [vmem:[%s390 + $0x1] sm:$0xff] %vm302, %v358
        %392 = vst.msk [vmem:[%s390 + $0x9] sm:$0xff] %vm302, %v359
        %393 = vst.msk [vmem:[%s390 + $0x19] sm:$0xff] %vm302, %v360
        %394 = vst.msk [vmem:[%s390 + $0x21] sm:$0xff] %vm302, %v361
        %395 = vst.msk [vmem:[%s390 + $0x31] sm:$0xff] %vm302, %v362
        %396 = vst.msk [vmem:[%s390 + $0x39] sm:$0xff] %vm302, %v363
        %397 = vst.msk [vmem:[%s390 + $0x49] sm:$0xff] %vm302, %v364
        %398 = vst.msk [vmem:[%s390 + $0x51] sm:$0xff] %vm302, %v365
        %399 = vst.msk [vmem:[%s390 + $0x61] sm:$0xff] %vm302, %v366
        %400 = vst.msk [vmem:[%s390 + $0x69] sm:$0xff] %vm302, %v367
        %401 = vst.msk [vmem:[%s390 + $0x79] sm:$0xff] %vm302, %v368
        %402 = vst.msk [vmem:[%s390 + $0x81] sm:$0xff] %vm302, %v369
        %403 = vst.msk [vmem:[%s390 + $0x91] sm:$0xff] %vm302, %v370
        %404 = vst.msk [vmem:[%s390 + $0x99] sm:$0xff] %vm302, %v371
        %405 = vst.msk [vmem:[%s390 + $0xa9] sm:$0xff] %vm302, %v372
        %406 = vst.msk [vmem:[%s390 + $0xb1] sm:$0xff] %vm302, %v373
        %407 = vst.msk [vmem:[%s390 + $0xc1] sm:$0xff] %vm302, %v374
        %408 = vst.msk [vmem:[%s390 + $0xc9] sm:$0xff] %vm302, %v375
        %409 = vst.msk [vmem:[%s390 + $0xd9] sm:$0xff] %vm302, %v376
        %410 = vst.msk [vmem:[%s390 + $0xe1] sm:$0xff] %vm302, %v377
        %411 = vst.msk [vmem:[%s390 + $0xf1] sm:$0xff] %vm302, %v378
        %412 = vst.msk [vmem:[%s390 + $0xf9] sm:$0xff] %vm302, %v379
        %413 = vst.msk [vmem:[%s390 + $0x109] sm:$0xff] %vm302, %v380
        %414 = vst.msk [vmem:[%s390 + $0x111] sm:$0xff] %vm302, %v381
        %415 = vst.msk [vmem:[%s390 + $0x121] sm:$0xff] %vm302, %v382
        %416 = vst.msk [vmem:[%s390 + $0x129] sm:$0xff] %vm302, %v383
        %417 = vst.msk [vmem:[%s390 + $0x139] sm:$0xff] %vm302, %v384
        %418 = vst.msk [vmem:[%s390 + $0x141] sm:$0xff] %vm302, %v385
        %419 = vst.msk [vmem:[%s390 + $0x151] sm:$0xff] %vm302, %v386
        %420 = vst.msk [vmem:[%s390 + $0x159] sm:$0xff] %vm302, %v387
        %421 = vst.msk [vmem:[%s390 + $0x169] sm:$0xff] %vm302, %v388
        %422 = vst.msk [vmem:[%s390 + $0x171] sm:$0xff] %vm302, %v389
        %v423 = vld [vmem:[#allocation2] sm:$0xff]
        %v424 = vld [vmem:[#allocation2 + $0x8] sm:$0xff]
        %v425 = vld [vmem:[#allocation2 + $0x10] sm:$0x3]
        %v426 = vld [vmem:[#allocation2 + $0x18] sm:$0xff]
        %v427 = vld [vmem:[#allocation2 + $0x20] sm:$0xff]
        %v428 = vld [vmem:[#allocation2 + $0x28] sm:$0x3]
        %v429 = vld [vmem:[#allocation2 + $0x30] sm:$0xff]
        %v430 = vld [vmem:[#allocation2 + $0x38] sm:$0xff]
        %v431 = vld [vmem:[#allocation2 + $0x40] sm:$0x3]
        %v432 = vld [vmem:[#allocation2 + $0x48] sm:$0xff]
        %v433 = vld [vmem:[#allocation2 + $0x50] sm:$0xff]
        %v434 = vld [vmem:[#allocation2 + $0x58] sm:$0x3]
        %v435 = vld [vmem:[#allocation2 + $0x60] sm:$0xff]
        %v436 = vld [vmem:[#allocation2 + $0x68] sm:$0xff]
        %v437 = vld [vmem:[#allocation2 + $0x70] sm:$0x3]
        %v438 = vld [vmem:[#allocation2 + $0x78] sm:$0xff]
        %v439 = vld [vmem:[#allocation2 + $0x80] sm:$0xff]
        %v440 = vld [vmem:[#allocation2 + $0x88] sm:$0x3]
        %v441 = vld [vmem:[#allocation2 + $0x90] sm:$0xff]
        %v442 = vld [vmem:[#allocation2 + $0x98] sm:$0xff]
        %v443 = vld [vmem:[#allocation2 + $0xa0] sm:$0x3]
        %v444 = vld [vmem:[#allocation2 + $0xa8] sm:$0xff]
        %v445 = vld [vmem:[#allocation2 + $0xb0] sm:$0xff]
        %v446 = vld [vmem:[#allocation2 + $0xb8] sm:$0x3]
        %v447 = vld [vmem:[#allocation2 + $0xc0] sm:$0xff]
        %v448 = vld [vmem:[#allocation2 + $0xc8] sm:$0xff]
        %v449 = vld [vmem:[#allocation2 + $0xd0] sm:$0x3]
        %v450 = vld [vmem:[#allocation2 + $0xd8] sm:$0xff]
        %v451 = vld [vmem:[#allocation2 + $0xe0] sm:$0xff]
        %v452 = vld [vmem:[#allocation2 + $0xe8] sm:$0x3]
        %v453 = vld [vmem:[#allocation2 + $0xf0] sm:$0xff]
        %v454 = vld [vmem:[#allocation2 + $0xf8] sm:$0xff]
        %v455 = vld [vmem:[#allocation2 + $0x100] sm:$0x3]
        %v456 = vld [vmem:[#allocation2 + $0x108] sm:$0xff]
        %v457 = vld [vmem:[#allocation2 + $0x110] sm:$0xff]
        %v458 = vld [vmem:[#allocation2 + $0x118] sm:$0x3]
        %v459 = vld [vmem:[#allocation2 + $0x120] sm:$0xff]
        %v460 = vld [vmem:[#allocation2 + $0x128] sm:$0xff]
        %v461 = vld [vmem:[#allocation2 + $0x130] sm:$0x3]
        %v462 = vld [vmem:[#allocation2 + $0x138] sm:$0xff]
        %v463 = vld [vmem:[#allocation2 + $0x140] sm:$0xff]
        %v464 = vld [vmem:[#allocation2 + $0x148] sm:$0x3]
        %v465 = vld [vmem:[#allocation2 + $0x150] sm:$0xff]
        %v466 = vld [vmem:[#allocation2 + $0x158] sm:$0xff]
        %v467 = vld [vmem:[#allocation2 + $0x160] sm:$0x3]
        %v468 = vld [vmem:[#allocation2 + $0x168] sm:$0xff]
        %v469 = vld [vmem:[#allocation2 + $0x170] sm:$0xff]
        %v470 = vld [vmem:[#allocation2 + $0x178] sm:$0x3]
        %v471 = vld [vmem:[#allocation2 + $0x180] sm:$0xff]
        %v472 = vld [vmem:[#allocation2 + $0x188] sm:$0xff]
        %v473 = vld [vmem:[#allocation2 + $0x190] sm:$0x3]
        %v474 = vld [vmem:[#allocation2 + $0x198] sm:$0xff]
        %v475 = vld [vmem:[#allocation2 + $0x1a0] sm:$0xff]
        %v476 = vld [vmem:[#allocation2 + $0x1a8] sm:$0x3]
        %v477 = vpack.c.bf16 %v424, %v423
        %v478 = vpack.c.bf16 %v427, %v426
        %v479 = vpack.c.bf16 %v430, %v429
        %v480 = vpack.c.bf16 %v433, %v432
        %v481 = vpack.c.bf16 %v436, %v435
        %v482 = vpack.c.bf16 %v439, %v438
        %v483 = vpack.c.bf16 %v442, %v441
        %v484 = vpack.c.bf16 %v445, %v444
        %v485 = vpack.c.bf16 %v448, %v447
        %v486 = vpack.c.bf16 %v451, %v450
        %v487 = vpack.c.bf16 %v454, %v453
        %v488 = vpack.c.bf16 %v457, %v456
        %v489 = vpack.c.bf16 %v460, %v459
        %v490 = vpack.c.bf16 %v463, %v462
        %v491 = vpack.c.bf16 %v466, %v465
        %v492 = vpack.c.bf16 %v469, %v468
        %vm541 = vcmask 1046528
        %v542 = vrot.slane %v423, 1
        %v543 = vrot.slane %v424, 1
        %v544 = vsel %vm541, %v542, %v543
        %v545 = vrot.slane %v425, 1
        %v546 = vsel %vm541, %v543, %v545
        %v547 = vrot.slane %v426, 1
        %v548 = vrot.slane %v427, 1
        %v549 = vsel %vm541, %v547, %v548
        %v550 = vrot.slane %v428, 1
        %v551 = vsel %vm541, %v548, %v550
        %v552 = vrot.slane %v429, 1
        %v553 = vrot.slane %v430, 1
        %v554 = vsel %vm541, %v552, %v553
        %v555 = vrot.slane %v431, 1
        %v556 = vsel %vm541, %v553, %v555
        %v557 = vrot.slane %v432, 1
        %v558 = vrot.slane %v433, 1
        %v559 = vsel %vm541, %v557, %v558
        %v560 = vrot.slane %v434, 1
        %v561 = vsel %vm541, %v558, %v560
        %v562 = vrot.slane %v435, 1
        %v563 = vrot.slane %v436, 1
        %v564 = vsel %vm541, %v562, %v563
        %v565 = vrot.slane %v437, 1
        %v566 = vsel %vm541, %v563, %v565
        %v567 = vrot.slane %v438, 1
        %v568 = vrot.slane %v439, 1
        %v569 = vsel %vm541, %v567, %v568
        %v570 = vrot.slane %v440, 1
        %v571 = vsel %vm541, %v568, %v570
        %v572 = vrot.slane %v441, 1
        %v573 = vrot.slane %v442, 1
        %v574 = vsel %vm541, %v572, %v573
        %v575 = vrot.slane %v443, 1
        %v576 = vsel %vm541, %v573, %v575
        %v577 = vrot.slane %v444, 1
        %v578 = vrot.slane %v445, 1
        %v579 = vsel %vm541, %v577, %v578
        %v580 = vrot.slane %v446, 1
        %v581 = vsel %vm541, %v578, %v580
        %v582 = vrot.slane %v447, 1
        %v583 = vrot.slane %v448, 1
        %v584 = vsel %vm541, %v582, %v583
        %v585 = vrot.slane %v449, 1
        %v586 = vsel %vm541, %v583, %v585
        %v587 = vrot.slane %v450, 1
        %v588 = vrot.slane %v451, 1
        %v589 = vsel %vm541, %v587, %v588
        %v590 = vrot.slane %v452, 1
        %v591 = vsel %vm541, %v588, %v590
        %v592 = vrot.slane %v453, 1
        %v593 = vrot.slane %v454, 1
        %v594 = vsel %vm541, %v592, %v593
        %v595 = vrot.slane %v455, 1
        %v596 = vsel %vm541, %v593, %v595
        %v597 = vrot.slane %v456, 1
        %v598 = vrot.slane %v457, 1
        %v599 = vsel %vm541, %v597, %v598
        %v600 = vrot.slane %v458, 1
        %v601 = vsel %vm541, %v598, %v600
        %v602 = vrot.slane %v459, 1
        %v603 = vrot.slane %v460, 1
        %v604 = vsel %vm541, %v602, %v603
        %v605 = vrot.slane %v461, 1
        %v606 = vsel %vm541, %v603, %v605
        %v607 = vrot.slane %v462, 1
        %v608 = vrot.slane %v463, 1
        %v609 = vsel %vm541, %v607, %v608
        %v610 = vrot.slane %v464, 1
        %v611 = vsel %vm541, %v608, %v610
        %v612 = vrot.slane %v465, 1
        %v613 = vrot.slane %v466, 1
        %v614 = vsel %vm541, %v612, %v613
        %v615 = vrot.slane %v467, 1
        %v616 = vsel %vm541, %v613, %v615
        %v617 = vrot.slane %v468, 1
        %v618 = vrot.slane %v469, 1
        %v619 = vsel %vm541, %v617, %v618
        %v620 = vrot.slane %v470, 1
        %v621 = vsel %vm541, %v618, %v620
        %v654 = vpack.c.bf16 %v546, %v544
        %v655 = vpack.c.bf16 %v551, %v549
        %v656 = vpack.c.bf16 %v556, %v554
        %v657 = vpack.c.bf16 %v561, %v559
        %v658 = vpack.c.bf16 %v566, %v564
        %v659 = vpack.c.bf16 %v571, %v569
        %v660 = vpack.c.bf16 %v576, %v574
        %v661 = vpack.c.bf16 %v581, %v579
        %v662 = vpack.c.bf16 %v586, %v584
        %v663 = vpack.c.bf16 %v591, %v589
        %v664 = vpack.c.bf16 %v596, %v594
        %v665 = vpack.c.bf16 %v601, %v599
        %v666 = vpack.c.bf16 %v606, %v604
        %v667 = vpack.c.bf16 %v611, %v609
        %v668 = vpack.c.bf16 %v616, %v614
        %v669 = vpack.c.bf16 %v621, %v619
        %vm670 = vcmask 1045504
        %v671 = vrot.slane %v423, 2
        %v672 = vrot.slane %v424, 2
        %v673 = vsel %vm670, %v671, %v672
        %v674 = vrot.slane %v425, 2
        %v675 = vsel %vm670, %v672, %v674
        %v676 = vrot.slane %v426, 2
        %v677 = vrot.slane %v427, 2
        %v678 = vsel %vm670, %v676, %v677
        %v679 = vrot.slane %v428, 2
        %v680 = vsel %vm670, %v677, %v679
        %v681 = vrot.slane %v429, 2
        %v682 = vrot.slane %v430, 2
        %v683 = vsel %vm670, %v681, %v682
        %v684 = vrot.slane %v431, 2
        %v685 = vsel %vm670, %v682, %v684
        %v686 = vrot.slane %v432, 2
        %v687 = vrot.slane %v433, 2
        %v688 = vsel %vm670, %v686, %v687
        %v689 = vrot.slane %v434, 2
        %v690 = vsel %vm670, %v687, %v689
        %v691 = vrot.slane %v435, 2
        %v692 = vrot.slane %v436, 2
        %v693 = vsel %vm670, %v691, %v692
        %v694 = vrot.slane %v437, 2
        %v695 = vsel %vm670, %v692, %v694
        %v696 = vrot.slane %v438, 2
        %v697 = vrot.slane %v439, 2
        %v698 = vsel %vm670, %v696, %v697
        %v699 = vrot.slane %v440, 2
        %v700 = vsel %vm670, %v697, %v699
        %v701 = vrot.slane %v441, 2
        %v702 = vrot.slane %v442, 2
        %v703 = vsel %vm670, %v701, %v702
        %v704 = vrot.slane %v443, 2
        %v705 = vsel %vm670, %v702, %v704
        %v706 = vrot.slane %v444, 2
        %v707 = vrot.slane %v445, 2
        %v708 = vsel %vm670, %v706, %v707
        %v709 = vrot.slane %v446, 2
        %v710 = vsel %vm670, %v707, %v709
        %v711 = vrot.slane %v447, 2
        %v712 = vrot.slane %v448, 2
        %v713 = vsel %vm670, %v711, %v712
        %v714 = vrot.slane %v449, 2
        %v715 = vsel %vm670, %v712, %v714
        %v716 = vrot.slane %v450, 2
        %v717 = vrot.slane %v451, 2
        %v718 = vsel %vm670, %v716, %v717
        %v719 = vrot.slane %v452, 2
        %v720 = vsel %vm670, %v717, %v719
        %v721 = vrot.slane %v453, 2
        %v722 = vrot.slane %v454, 2
        %v723 = vsel %vm670, %v721, %v722
        %v724 = vrot.slane %v455, 2
        %v725 = vsel %vm670, %v722, %v724
        %v726 = vrot.slane %v456, 2
        %v727 = vrot.slane %v457, 2
        %v728 = vsel %vm670, %v726, %v727
        %v729 = vrot.slane %v458, 2
        %v730 = vsel %vm670, %v727, %v729
        %v731 = vrot.slane %v459, 2
        %v732 = vrot.slane %v460, 2
        %v733 = vsel %vm670, %v731, %v732
        %v734 = vrot.slane %v461, 2
        %v735 = vsel %vm670, %v732, %v734
        %v736 = vrot.slane %v462, 2
        %v737 = vrot.slane %v463, 2
        %v738 = vsel %vm670, %v736, %v737
        %v739 = vrot.slane %v464, 2
        %v740 = vsel %vm670, %v737, %v739
        %v741 = vrot.slane %v465, 2
        %v742 = vrot.slane %v466, 2
        %v743 = vsel %vm670, %v741, %v742
        %v744 = vrot.slane %v467, 2
        %v745 = vsel %vm670, %v742, %v744
        %v746 = vrot.slane %v468, 2
        %v747 = vrot.slane %v469, 2
        %v748 = vsel %vm670, %v746, %v747
        %v749 = vrot.slane %v470, 2
        %v750 = vsel %vm670, %v747, %v749
        %v783 = vpack.c.bf16 %v675, %v673
        %v784 = vpack.c.bf16 %v680, %v678
        %v785 = vpack.c.bf16 %v685, %v683
        %v786 = vpack.c.bf16 %v690, %v688
        %v787 = vpack.c.bf16 %v695, %v693
        %v788 = vpack.c.bf16 %v700, %v698
        %v789 = vpack.c.bf16 %v705, %v703
        %v790 = vpack.c.bf16 %v710, %v708
        %v791 = vpack.c.bf16 %v715, %v713
        %v792 = vpack.c.bf16 %v720, %v718
        %v793 = vpack.c.bf16 %v725, %v723
        %v794 = vpack.c.bf16 %v730, %v728
        %v795 = vpack.c.bf16 %v735, %v733
        %v796 = vpack.c.bf16 %v740, %v738
        %v797 = vpack.c.bf16 %v745, %v743
        %v798 = vpack.c.bf16 %v750, %v748
        %v799 = vpack.c.bf16 %v472, %v471
        %v803 = vrot.slane %v471, 1
        %v804 = vrot.slane %v472, 1
        %v805 = vsel %vm541, %v803, %v804
        %v806 = vrot.slane %v473, 1
        %v807 = vsel %vm541, %v804, %v806
        %v810 = vpack.c.bf16 %v807, %v805
        %v811 = vrot.slane %v471, 2
        %v812 = vrot.slane %v472, 2
        %v813 = vsel %vm670, %v811, %v812
        %v814 = vrot.slane %v473, 2
        %v815 = vsel %vm670, %v812, %v814
        %v818 = vpack.c.bf16 %v815, %v813
        %v819 = vpack.c.bf16 %v475, %v474
        %v823 = vrot.slane %v474, 1
        %v824 = vrot.slane %v475, 1
        %v825 = vsel %vm541, %v823, %v824
        %v826 = vrot.slane %v476, 1
        %v827 = vsel %vm541, %v824, %v826
        %v830 = vpack.c.bf16 %v827, %v825
        %v831 = vrot.slane %v474, 2
        %v832 = vrot.slane %v475, 2
        %v833 = vsel %vm670, %v831, %v832
        %v834 = vrot.slane %v476, 2
        %v835 = vsel %vm670, %v832, %v834
        %v838 = vpack.c.bf16 %v835, %v833
        %855 = vrot.lane.b32.xlu0 %v654, 32
        %v856 = vpop.permute.xlu0 %855
        %857 = vrot.lane.b32.xlu0 %v655, 32
        %v858 = vpop.permute.xlu0 %857
        %859 = vrot.lane.b32.xlu0 %v656, 32
        %v860 = vpop.permute.xlu0 %859
        %861 = vrot.lane.b32.xlu0 %v657, 32
        %v862 = vpop.permute.xlu0 %861
        %863 = vrot.lane.b32.xlu0 %v658, 32
        %v864 = vpop.permute.xlu0 %863
        %865 = vrot.lane.b32.xlu0 %v659, 32
        %v866 = vpop.permute.xlu0 %865
        %867 = vrot.lane.b32.xlu0 %v660, 32
        %v868 = vpop.permute.xlu0 %867
        %869 = vrot.lane.b32.xlu0 %v661, 32
        %v870 = vpop.permute.xlu0 %869
        %871 = vrot.lane.b32.xlu0 %v662, 32
        %v872 = vpop.permute.xlu0 %871
        %873 = vrot.lane.b32.xlu0 %v663, 32
        %v874 = vpop.permute.xlu0 %873
        %875 = vrot.lane.b32.xlu0 %v664, 32
        %v876 = vpop.permute.xlu0 %875
        %877 = vrot.lane.b32.xlu0 %v665, 32
        %v878 = vpop.permute.xlu0 %877
        %879 = vrot.lane.b32.xlu0 %v666, 32
        %v880 = vpop.permute.xlu0 %879
        %881 = vrot.lane.b32.xlu0 %v667, 32
        %v882 = vpop.permute.xlu0 %881
        %883 = vrot.lane.b32.xlu0 %v668, 32
        %v884 = vpop.permute.xlu0 %883
        %885 = vrot.lane.b32.xlu0 %v669, 32
        %v886 = vpop.permute.xlu0 %885
        %903 = vrot.lane.b32.xlu0 %v783, 64
        %v904 = vpop.permute.xlu0 %903
        %905 = vrot.lane.b32.xlu0 %v784, 64
        %v906 = vpop.permute.xlu0 %905
        %907 = vrot.lane.b32.xlu0 %v785, 64
        %v908 = vpop.permute.xlu0 %907
        %909 = vrot.lane.b32.xlu0 %v786, 64
        %v910 = vpop.permute.xlu0 %909
        %911 = vrot.lane.b32.xlu0 %v787, 64
        %v912 = vpop.permute.xlu0 %911
        %913 = vrot.lane.b32.xlu0 %v788, 64
        %v914 = vpop.permute.xlu0 %913
        %915 = vrot.lane.b32.xlu0 %v789, 64
        %v916 = vpop.permute.xlu0 %915
        %917 = vrot.lane.b32.xlu0 %v790, 64
        %v918 = vpop.permute.xlu0 %917
        %919 = vrot.lane.b32.xlu0 %v791, 64
        %v920 = vpop.permute.xlu0 %919
        %921 = vrot.lane.b32.xlu0 %v792, 64
        %v922 = vpop.permute.xlu0 %921
        %923 = vrot.lane.b32.xlu0 %v793, 64
        %v924 = vpop.permute.xlu0 %923
        %925 = vrot.lane.b32.xlu0 %v794, 64
        %v926 = vpop.permute.xlu0 %925
        %927 = vrot.lane.b32.xlu0 %v795, 64
        %v928 = vpop.permute.xlu0 %927
        %929 = vrot.lane.b32.xlu0 %v796, 64
        %v930 = vpop.permute.xlu0 %929
        %931 = vrot.lane.b32.xlu0 %v797, 64
        %v932 = vpop.permute.xlu0 %931
        %933 = vrot.lane.b32.xlu0 %v798, 64
        %v934 = vpop.permute.xlu0 %933
        %951 = vrot.lane.b32.xlu0 %v478, 96
        %v952 = vpop.permute.xlu0 %951
        %953 = vrot.lane.b32.xlu0 %v479, 96
        %v954 = vpop.permute.xlu0 %953
        %955 = vrot.lane.b32.xlu0 %v480, 96
        %v956 = vpop.permute.xlu0 %955
        %957 = vrot.lane.b32.xlu0 %v481, 96
        %v958 = vpop.permute.xlu0 %957
        %959 = vrot.lane.b32.xlu0 %v482, 96
        %v960 = vpop.permute.xlu0 %959
        %961 = vrot.lane.b32.xlu0 %v483, 96
        %v962 = vpop.permute.xlu0 %961
        %963 = vrot.lane.b32.xlu0 %v484, 96
        %v964 = vpop.permute.xlu0 %963
        %965 = vrot.lane.b32.xlu0 %v485, 96
        %v966 = vpop.permute.xlu0 %965
        %967 = vrot.lane.b32.xlu0 %v486, 96
        %v968 = vpop.permute.xlu0 %967
        %969 = vrot.lane.b32.xlu0 %v487, 96
        %v970 = vpop.permute.xlu0 %969
        %971 = vrot.lane.b32.xlu0 %v488, 96
        %v972 = vpop.permute.xlu0 %971
        %973 = vrot.lane.b32.xlu0 %v489, 96
        %v974 = vpop.permute.xlu0 %973
        %975 = vrot.lane.b32.xlu0 %v490, 96
        %v976 = vpop.permute.xlu0 %975
        %977 = vrot.lane.b32.xlu0 %v491, 96
        %v978 = vpop.permute.xlu0 %977
        %979 = vrot.lane.b32.xlu0 %v492, 96
        %v980 = vpop.permute.xlu0 %979
        %981 = vrot.lane.b32.xlu0 %v799, 96
        %v982 = vpop.permute.xlu0 %981
        %984 = vrot.lane.b32.xlu0 %v784, 32
        %v985 = vpop.permute.xlu0 %984
        %986 = vrot.lane.b32.xlu0 %v785, 32
        %v987 = vpop.permute.xlu0 %986
        %988 = vrot.lane.b32.xlu0 %v786, 32
        %v989 = vpop.permute.xlu0 %988
        %990 = vrot.lane.b32.xlu0 %v787, 32
        %v991 = vpop.permute.xlu0 %990
        %992 = vrot.lane.b32.xlu0 %v788, 32
        %v993 = vpop.permute.xlu0 %992
        %994 = vrot.lane.b32.xlu0 %v789, 32
        %v995 = vpop.permute.xlu0 %994
        %996 = vrot.lane.b32.xlu0 %v790, 32
        %v997 = vpop.permute.xlu0 %996
        %998 = vrot.lane.b32.xlu0 %v791, 32
        %v999 = vpop.permute.xlu0 %998
        %1000 = vrot.lane.b32.xlu0 %v792, 32
        %v1001 = vpop.permute.xlu0 %1000
        %1002 = vrot.lane.b32.xlu0 %v793, 32
        %v1003 = vpop.permute.xlu0 %1002
        %1004 = vrot.lane.b32.xlu0 %v794, 32
        %v1005 = vpop.permute.xlu0 %1004
        %1006 = vrot.lane.b32.xlu0 %v795, 32
        %v1007 = vpop.permute.xlu0 %1006
        %1008 = vrot.lane.b32.xlu0 %v796, 32
        %v1009 = vpop.permute.xlu0 %1008
        %1010 = vrot.lane.b32.xlu0 %v797, 32
        %v1011 = vpop.permute.xlu0 %1010
        %1012 = vrot.lane.b32.xlu0 %v798, 32
        %v1013 = vpop.permute.xlu0 %1012
        %1014 = vrot.lane.b32.xlu0 %v818, 32
        %v1015 = vpop.permute.xlu0 %1014
        %1017 = vrot.lane.b32.xlu0 %v479, 64
        %v1018 = vpop.permute.xlu0 %1017
        %1019 = vrot.lane.b32.xlu0 %v480, 64
        %v1020 = vpop.permute.xlu0 %1019
        %1021 = vrot.lane.b32.xlu0 %v481, 64
        %v1022 = vpop.permute.xlu0 %1021
        %1023 = vrot.lane.b32.xlu0 %v482, 64
        %v1024 = vpop.permute.xlu0 %1023
        %1025 = vrot.lane.b32.xlu0 %v483, 64
        %v1026 = vpop.permute.xlu0 %1025
        %1027 = vrot.lane.b32.xlu0 %v484, 64
        %v1028 = vpop.permute.xlu0 %1027
        %1029 = vrot.lane.b32.xlu0 %v485, 64
        %v1030 = vpop.permute.xlu0 %1029
        %1031 = vrot.lane.b32.xlu0 %v486, 64
        %v1032 = vpop.permute.xlu0 %1031
        %1033 = vrot.lane.b32.xlu0 %v487, 64
        %v1034 = vpop.permute.xlu0 %1033
        %1035 = vrot.lane.b32.xlu0 %v488, 64
        %v1036 = vpop.permute.xlu0 %1035
        %1037 = vrot.lane.b32.xlu0 %v489, 64
        %v1038 = vpop.permute.xlu0 %1037
        %1039 = vrot.lane.b32.xlu0 %v490, 64
        %v1040 = vpop.permute.xlu0 %1039
        %1041 = vrot.lane.b32.xlu0 %v491, 64
        %v1042 = vpop.permute.xlu0 %1041
        %1043 = vrot.lane.b32.xlu0 %v492, 64
        %v1044 = vpop.permute.xlu0 %1043
        %1045 = vrot.lane.b32.xlu0 %v799, 64
        %v1046 = vpop.permute.xlu0 %1045
        %1047 = vrot.lane.b32.xlu0 %v819, 64
        %v1048 = vpop.permute.xlu0 %1047
        %1051 = vrot.lane.b32.xlu0 %v656, 96
        %v1052 = vpop.permute.xlu0 %1051
        %1053 = vrot.lane.b32.xlu0 %v657, 96
        %v1054 = vpop.permute.xlu0 %1053
        %1055 = vrot.lane.b32.xlu0 %v658, 96
        %v1056 = vpop.permute.xlu0 %1055
        %1057 = vrot.lane.b32.xlu0 %v659, 96
        %v1058 = vpop.permute.xlu0 %1057
        %1059 = vrot.lane.b32.xlu0 %v660, 96
        %v1060 = vpop.permute.xlu0 %1059
        %1061 = vrot.lane.b32.xlu0 %v661, 96
        %v1062 = vpop.permute.xlu0 %1061
        %1063 = vrot.lane.b32.xlu0 %v662, 96
        %v1064 = vpop.permute.xlu0 %1063
        %1065 = vrot.lane.b32.xlu0 %v663, 96
        %v1066 = vpop.permute.xlu0 %1065
        %1067 = vrot.lane.b32.xlu0 %v664, 96
        %v1068 = vpop.permute.xlu0 %1067
        %1069 = vrot.lane.b32.xlu0 %v665, 96
        %v1070 = vpop.permute.xlu0 %1069
        %1071 = vrot.lane.b32.xlu0 %v666, 96
        %v1072 = vpop.permute.xlu0 %1071
        %1073 = vrot.lane.b32.xlu0 %v667, 96
        %v1074 = vpop.permute.xlu0 %1073
        %1075 = vrot.lane.b32.xlu0 %v668, 96
        %v1076 = vpop.permute.xlu0 %1075
        %1077 = vrot.lane.b32.xlu0 %v669, 96
        %v1078 = vpop.permute.xlu0 %1077
        %1079 = vrot.lane.b32.xlu0 %v810, 96
        %v1080 = vpop.permute.xlu0 %1079
        %1081 = vrot.lane.b32.xlu0 %v830, 96
        %v1082 = vpop.permute.xlu0 %1081
        %v1085 = vsel %vm302, %v477, %v856
        %v1088 = vsel %vm302, %v478, %v858
        %v1091 = vsel %vm302, %v479, %v860
        %v1094 = vsel %vm302, %v480, %v862
        %v1097 = vsel %vm302, %v481, %v864
        %v1100 = vsel %vm302, %v482, %v866
        %v1103 = vsel %vm302, %v483, %v868
        %v1106 = vsel %vm302, %v484, %v870
        %v1109 = vsel %vm302, %v485, %v872
        %v1112 = vsel %vm302, %v486, %v874
        %v1115 = vsel %vm302, %v487, %v876
        %v1118 = vsel %vm302, %v488, %v878
        %v1121 = vsel %vm302, %v489, %v880
        %v1124 = vsel %vm302, %v490, %v882
        %v1127 = vsel %vm302, %v491, %v884
        %v1130 = vsel %vm302, %v492, %v886
        %vm1131 = vcmask 523264
        %v1133 = vsel %vm1131, %v1085, %v904
        %v1135 = vsel %vm1131, %v1088, %v906
        %v1137 = vsel %vm1131, %v1091, %v908
        %v1139 = vsel %vm1131, %v1094, %v910
        %v1141 = vsel %vm1131, %v1097, %v912
        %v1143 = vsel %vm1131, %v1100, %v914
        %v1145 = vsel %vm1131, %v1103, %v916
        %v1147 = vsel %vm1131, %v1106, %v918
        %v1149 = vsel %vm1131, %v1109, %v920
        %v1151 = vsel %vm1131, %v1112, %v922
        %v1153 = vsel %vm1131, %v1115, %v924
        %v1155 = vsel %vm1131, %v1118, %v926
        %v1157 = vsel %vm1131, %v1121, %v928
        %v1159 = vsel %vm1131, %v1124, %v930
        %v1161 = vsel %vm1131, %v1127, %v932
        %v1163 = vsel %vm1131, %v1130, %v934
        %vm1164 = vcmask 785408
        %v1166 = vsel %vm1164, %v1133, %v952
        %v1169 = vsel %vm1164, %v1135, %v954
        %v1172 = vsel %vm1164, %v1137, %v956
        %v1175 = vsel %vm1164, %v1139, %v958
        %v1178 = vsel %vm1164, %v1141, %v960
        %v1181 = vsel %vm1164, %v1143, %v962
        %v1184 = vsel %vm1164, %v1145, %v964
        %v1187 = vsel %vm1164, %v1147, %v966
        %v1190 = vsel %vm1164, %v1149, %v968
        %v1193 = vsel %vm1164, %v1151, %v970
        %v1196 = vsel %vm1164, %v1153, %v972
        %v1199 = vsel %vm1164, %v1155, %v974
        %v1202 = vsel %vm1164, %v1157, %v976
        %v1205 = vsel %vm1164, %v1159, %v978
        %v1208 = vsel %vm1164, %v1161, %v980
        %v1211 = vsel %vm1164, %v1163, %v982
        %v1215 = vsel %vm302, %v655, %v985
        %v1218 = vsel %vm302, %v656, %v987
        %v1221 = vsel %vm302, %v657, %v989
        %v1224 = vsel %vm302, %v658, %v991
        %v1227 = vsel %vm302, %v659, %v993
        %v1230 = vsel %vm302, %v660, %v995
        %v1233 = vsel %vm302, %v661, %v997
        %v1236 = vsel %vm302, %v662, %v999
        %v1239 = vsel %vm302, %v663, %v1001
        %v1242 = vsel %vm302, %v664, %v1003
        %v1245 = vsel %vm302, %v665, %v1005
        %v1248 = vsel %vm302, %v666, %v1007
        %v1251 = vsel %vm302, %v667, %v1009
        %v1254 = vsel %vm302, %v668, %v1011
        %v1257 = vsel %vm302, %v669, %v1013
        %v1260 = vsel %vm302, %v810, %v1015
        %v1262 = vsel %vm1131, %v1215, %v1018
        %v1264 = vsel %vm1131, %v1218, %v1020
        %v1266 = vsel %vm1131, %v1221, %v1022
        %v1268 = vsel %vm1131, %v1224, %v1024
        %v1270 = vsel %vm1131, %v1227, %v1026
        %v1272 = vsel %vm1131, %v1230, %v1028
        %v1274 = vsel %vm1131, %v1233, %v1030
        %v1276 = vsel %vm1131, %v1236, %v1032
        %v1278 = vsel %vm1131, %v1239, %v1034
        %v1280 = vsel %vm1131, %v1242, %v1036
        %v1282 = vsel %vm1131, %v1245, %v1038
        %v1284 = vsel %vm1131, %v1248, %v1040
        %v1286 = vsel %vm1131, %v1251, %v1042
        %v1288 = vsel %vm1131, %v1254, %v1044
        %v1290 = vsel %vm1131, %v1257, %v1046
        %v1292 = vsel %vm1131, %v1260, %v1048
        %v1294 = vsel %vm1164, %v1262, %v1052
        %v1297 = vsel %vm1164, %v1264, %v1054
        %v1300 = vsel %vm1164, %v1266, %v1056
        %v1303 = vsel %vm1164, %v1268, %v1058
        %v1306 = vsel %vm1164, %v1270, %v1060
        %v1309 = vsel %vm1164, %v1272, %v1062
        %v1312 = vsel %vm1164, %v1274, %v1064
        %v1315 = vsel %vm1164, %v1276, %v1066
        %v1318 = vsel %vm1164, %v1278, %v1068
        %v1321 = vsel %vm1164, %v1280, %v1070
        %v1324 = vsel %vm1164, %v1282, %v1072
        %v1327 = vsel %vm1164, %v1284, %v1074
        %v1330 = vsel %vm1164, %v1286, %v1076
        %v1333 = vsel %vm1164, %v1288, %v1078
        %v1336 = vsel %vm1164, %v1290, %v1080
        %v1339 = vsel %vm1164, %v1292, %v1082
        %v1341 = vld [vmem:[#allocation7] sm:$0xf]
        %v1342 = vld [vmem:[#allocation7 + $0x4] sm:$0xf]
        %v1343 = vld [vmem:[#allocation7 + $0x8] sm:$0xf]
        %v1344 = vld [vmem:[#allocation7 + $0xc] sm:$0xf]
        %v1345 = vld [vmem:[#allocation7 + $0x10] sm:$0xf]
        %v1346 = vld [vmem:[#allocation7 + $0x14] sm:$0xf]
        %v1347 = vld [vmem:[#allocation7 + $0x18] sm:$0xf]
        %v1348 = vld [vmem:[#allocation7 + $0x1c] sm:$0xf]
        %v1349 = vld [vmem:[#allocation7 + $0x20] sm:$0xf]
        %v1350 = vld [vmem:[#allocation7 + $0x24] sm:$0xf]
        %v1351 = vld [vmem:[#allocation7 + $0x28] sm:$0xf]
        %v1352 = vld [vmem:[#allocation7 + $0x2c] sm:$0xf]
        %v1353 = vld [vmem:[#allocation7 + $0x30] sm:$0xf]
        %v1354 = vld [vmem:[#allocation7 + $0x34] sm:$0xf]
        %v1355 = vld [vmem:[#allocation7 + $0x38] sm:$0xf]
        %v1356 = vld [vmem:[#allocation7 + $0x3c] sm:$0xf]
        %v1357 = vld [vmem:[#allocation7 + $0x40] sm:$0xf]
        %v1358 = vld [vmem:[#allocation7 + $0x44] sm:$0xf]
        %v1359 = vld [vmem:[#allocation7 + $0x48] sm:$0xf]
        %v1360 = vld [vmem:[#allocation7 + $0x4c] sm:$0xf]
        %v1361 = vld [vmem:[#allocation7 + $0x50] sm:$0xf]
        %v1362 = vld [vmem:[#allocation7 + $0x54] sm:$0xf]
        %v1363 = vld [vmem:[#allocation7 + $0x58] sm:$0xf]
        %v1364 = vld [vmem:[#allocation7 + $0x5c] sm:$0xf]
        %v1365 = vld [vmem:[#allocation7 + $0x60] sm:$0xf]
        %v1366 = vld [vmem:[#allocation7 + $0x64] sm:$0xf]
        %v1367 = vld [vmem:[#allocation7 + $0x68] sm:$0xf]
        %v1368 = vld [vmem:[#allocation7 + $0x6c] sm:$0xf]
        %v1369 = vld [vmem:[#allocation7 + $0x70] sm:$0xf]
        %v1370 = vld [vmem:[#allocation7 + $0x74] sm:$0xf]
        %v1371 = vld [vmem:[#allocation7 + $0x78] sm:$0xf]
        %v1372 = vld [vmem:[#allocation7 + $0x7c] sm:$0xf]
        %v1373 = vld [vmem:[#allocation7 + $0x80] sm:$0xf]
        %v1374 = vld [vmem:[#allocation7 + $0x84] sm:$0xf]
        %v1375 = vld [vmem:[#allocation7 + $0x88] sm:$0xf]
        %v1376 = vld [vmem:[#allocation7 + $0x8c] sm:$0xf]
        %v1413 = vunpack.c.l.b16 %v1341
        %v1414 = vunpack.c.l.b16 %v1342
        %v1415 = vunpack.c.l.b16 %v1343
        %v1416 = vunpack.c.l.b16 %v1344
        %v1417 = vunpack.c.l.b16 %v1345
        %v1418 = vunpack.c.l.b16 %v1346
        %v1419 = vunpack.c.l.b16 %v1347
        %v1420 = vunpack.c.l.b16 %v1348
        %v1421 = vunpack.c.l.b16 %v1349
        %v1422 = vunpack.c.l.b16 %v1350
        %v1423 = vunpack.c.l.b16 %v1351
        %v1424 = vunpack.c.l.b16 %v1352
        %v1425 = vunpack.c.l.b16 %v1353
        %v1426 = vunpack.c.l.b16 %v1354
        %v1427 = vunpack.c.l.b16 %v1355
        %v1428 = vunpack.c.l.b16 %v1356
        %v1429 = vunpack.c.l.b16 %v1357
        %v1430 = vunpack.c.l.b16 %v1358
        %v1431 = vunpack.c.l.b16 %v1359
        %v1432 = vunpack.c.l.b16 %v1360
        %v1433 = vunpack.c.l.b16 %v1361
        %v1434 = vunpack.c.l.b16 %v1362
        %v1435 = vunpack.c.l.b16 %v1363
        %v1436 = vunpack.c.l.b16 %v1364
        %v1437 = vunpack.c.l.b16 %v1365
        %v1438 = vunpack.c.l.b16 %v1366
        %v1439 = vunpack.c.l.b16 %v1367
        %v1440 = vunpack.c.l.b16 %v1368
        %v1441 = vunpack.c.l.b16 %v1369
        %v1442 = vunpack.c.l.b16 %v1370
        %v1443 = vunpack.c.l.b16 %v1371
        %v1444 = vunpack.c.l.b16 %v1372
        %v1445 = vunpack.c.l.b16 %v1373
        %v1446 = vunpack.c.l.b16 %v1374
        %v1447 = vunpack.c.l.b16 %v1375
        %v1448 = vunpack.c.l.b16 %v1376
        %v1449 = vpack.c.b16 %v1414, %v1413
        %v1450 = vpack.c.b16 %v1416, %v1415
        %v1451 = vpack.c.b16 %v1418, %v1417
        %v1452 = vpack.c.b16 %v1420, %v1419
        %v1453 = vpack.c.b16 %v1422, %v1421
        %v1454 = vpack.c.b16 %v1424, %v1423
        %v1455 = vpack.c.b16 %v1426, %v1425
        %v1456 = vpack.c.b16 %v1428, %v1427
        %v1457 = vpack.c.b16 %v1430, %v1429
        %v1458 = vpack.c.b16 %v1432, %v1431
        %v1459 = vpack.c.b16 %v1434, %v1433
        %v1460 = vpack.c.b16 %v1436, %v1435
        %v1461 = vpack.c.b16 %v1438, %v1437
        %v1462 = vpack.c.b16 %v1440, %v1439
        %v1463 = vpack.c.b16 %v1442, %v1441
        %v1464 = vpack.c.b16 %v1444, %v1443
        %v1465 = vpack.c.b16 %v1446, %v1445
        %v1466 = vpack.c.b16 %v1448, %v1447
        %v1486 = vsel %vm302, %v785, 0
        %v1489 = vsel %vm302, %v786, 0
        %v1492 = vsel %vm302, %v787, 0
        %v1495 = vsel %vm302, %v788, 0
        %v1498 = vsel %vm302, %v789, 0
        %v1501 = vsel %vm302, %v790, 0
        %v1504 = vsel %vm302, %v791, 0
        %v1507 = vsel %vm302, %v792, 0
        %v1510 = vsel %vm302, %v793, 0
        %v1513 = vsel %vm302, %v794, 0
        %v1516 = vsel %vm302, %v795, 0
        %v1519 = vsel %vm302, %v796, 0
        %v1522 = vsel %vm302, %v797, 0
        %v1525 = vsel %vm302, %v798, 0
        %v1528 = vsel %vm302, %v818, 0
        %v1531 = vsel %vm302, %v838, 0
        %1533 = vmatprep.subr.bf16.mxu0 0
        %1534 = vmatpush1.bf16.msra.mxu0 %v1456
        %1535 = vmatprep.subr.bf16.mxu0 0
        %1536 = vmatpush1.bf16.msra.mxu0 %v1455
        %1537 = vmatprep.subr.bf16.mxu0 0
        %1538 = vmatpush1.bf16.msra.mxu0 %v1454
        %1539 = vmatprep.subr.bf16.mxu0 0
        %1540 = vmatpush1.bf16.msra.mxu0 %v1453
        %1541 = vmatprep.subr.bf16.mxu0 0
        %1542 = vmatpush1.bf16.msra.mxu0 %v1452
        %1543 = vmatprep.subr.bf16.mxu0 0
        %1544 = vmatpush1.bf16.msra.mxu0 %v1451
        %1545 = vmatprep.subr.bf16.mxu0 0
        %1546 = vmatpush1.bf16.msra.mxu0 %v1450
        %1547 = vmatprep.subr.bf16.mxu0 0
        %1548 = vmatpush1.bf16.msra.mxu0 %v1449
        %1549 = vmatprep.subr.bf16.mxu0 0
        %1550 = vmatpush2.bf16.msra.mxu0 %v1464
        %1551 = vmatprep.subr.bf16.mxu0 0
        %1552 = vmatpush2.bf16.msra.mxu0 %v1463
        %1553 = vmatprep.subr.bf16.mxu0 0
        %1554 = vmatpush2.bf16.msra.mxu0 %v1462
        %1555 = vmatprep.subr.bf16.mxu0 0
        %1556 = vmatpush2.bf16.msra.mxu0 %v1461
        %1557 = vmatprep.subr.bf16.mxu0 0
        %1558 = vmatpush2.bf16.msra.mxu0 %v1460
        %1559 = vmatprep.subr.bf16.mxu0 0
        %1560 = vmatpush2.bf16.msra.mxu0 %v1459
        %1561 = vmatprep.subr.bf16.mxu0 0
        %1562 = vmatpush2.bf16.msra.mxu0 %v1458
        %1563 = vmatprep.subr.bf16.mxu0 0
        %1564 = vmatpush2.bf16.msra.mxu0 %v1457
        %1565 = vmatprep.mubr.bf16.mxu0 %v1294
        %1566 = vmatmul.mubr.bf16.gmra.mxu0 %v1166
        %v1567 = vpop.f32.mrf.mxu0
        %v1568 = vadd.f32 0.0, %v1567
        %v1569 = vpop.f32.mrf.mxu0
        %v1570 = vpop.f32.mrf.mxu0
        %v1571 = vadd.f32 0.0, %v1570
        %v1572 = vpop.f32.mrf.mxu0
        %1573 = vmatprep.mubr.bf16.mxu0 %v1297
        %1574 = vmatmul.mubr.bf16.gmra.mxu0 %v1169
        %v1575 = vpop.f32.mrf.mxu0
        %v1576 = vadd.f32 0.0, %v1575
        %v1577 = vpop.f32.mrf.mxu0
        %v1578 = vpop.f32.mrf.mxu0
        %v1579 = vadd.f32 0.0, %v1578
        %v1580 = vpop.f32.mrf.mxu0
        %1581 = vmatprep.mubr.bf16.mxu0 %v1300
        %1582 = vmatmul.mubr.bf16.gmra.mxu0 %v1172
        %v1583 = vpop.f32.mrf.mxu0
        %v1584 = vadd.f32 0.0, %v1583
        %v1585 = vpop.f32.mrf.mxu0
        %v1586 = vpop.f32.mrf.mxu0
        %v1587 = vadd.f32 0.0, %v1586
        %v1588 = vpop.f32.mrf.mxu0
        %1589 = vmatprep.mubr.bf16.mxu0 %v1303
        %1590 = vmatmul.mubr.bf16.gmra.mxu0 %v1175
        %v1591 = vpop.f32.mrf.mxu0
        %v1592 = vadd.f32 0.0, %v1591
        %v1593 = vpop.f32.mrf.mxu0
        %v1594 = vpop.f32.mrf.mxu0
        %v1595 = vadd.f32 0.0, %v1594
        %v1596 = vpop.f32.mrf.mxu0
        %1597 = vmatprep.mubr.bf16.mxu0 %v1306
        %1598 = vmatmul.mubr.bf16.gmra.mxu0 %v1178
        %v1599 = vpop.f32.mrf.mxu0
        %v1600 = vadd.f32 0.0, %v1599
        %v1601 = vpop.f32.mrf.mxu0
        %v1602 = vpop.f32.mrf.mxu0
        %v1603 = vadd.f32 0.0, %v1602
        %v1604 = vpop.f32.mrf.mxu0
        %1605 = vmatprep.mubr.bf16.mxu0 %v1309
        %1606 = vmatmul.mubr.bf16.gmra.mxu0 %v1181
        %v1607 = vpop.f32.mrf.mxu0
        %v1608 = vadd.f32 0.0, %v1607
        %v1609 = vpop.f32.mrf.mxu0
        %v1610 = vpop.f32.mrf.mxu0
        %v1611 = vadd.f32 0.0, %v1610
        %v1612 = vpop.f32.mrf.mxu0
        %1613 = vmatprep.mubr.bf16.mxu0 %v1312
        %1614 = vmatmul.mubr.bf16.gmra.mxu0 %v1184
        %v1615 = vpop.f32.mrf.mxu0
        %v1616 = vadd.f32 0.0, %v1615
        %v1617 = vpop.f32.mrf.mxu0
        %v1618 = vpop.f32.mrf.mxu0
        %v1619 = vadd.f32 0.0, %v1618
        %v1620 = vpop.f32.mrf.mxu0
        %1621 = vmatprep.mubr.bf16.mxu0 %v1315
        %1622 = vmatmul.mubr.bf16.gmra.mxu0 %v1187
        %v1623 = vpop.f32.mrf.mxu0
        %v1624 = vadd.f32 0.0, %v1623
        %v1625 = vpop.f32.mrf.mxu0
        %v1626 = vpop.f32.mrf.mxu0
        %v1627 = vadd.f32 0.0, %v1626
        %v1628 = vpop.f32.mrf.mxu0
        %1629 = vmatprep.mubr.bf16.mxu0 %v1318
        %1630 = vmatmul.mubr.bf16.gmra.mxu0 %v1190
        %v1631 = vpop.f32.mrf.mxu0
        %v1632 = vadd.f32 0.0, %v1631
        %v1633 = vpop.f32.mrf.mxu0
        %v1634 = vpop.f32.mrf.mxu0
        %v1635 = vadd.f32 0.0, %v1634
        %v1636 = vpop.f32.mrf.mxu0
        %1637 = vmatprep.mubr.bf16.mxu0 %v1321
        %1638 = vmatmul.mubr.bf16.gmra.mxu0 %v1193
        %v1639 = vpop.f32.mrf.mxu0
        %v1640 = vadd.f32 0.0, %v1639
        %v1641 = vpop.f32.mrf.mxu0
        %v1642 = vpop.f32.mrf.mxu0
        %v1643 = vadd.f32 0.0, %v1642
        %v1644 = vpop.f32.mrf.mxu0
        %1645 = vmatprep.mubr.bf16.mxu0 %v1324
        %1646 = vmatmul.mubr.bf16.gmra.mxu0 %v1196
        %v1647 = vpop.f32.mrf.mxu0
        %v1648 = vadd.f32 0.0, %v1647
        %v1649 = vpop.f32.mrf.mxu0
        %v1650 = vpop.f32.mrf.mxu0
        %v1651 = vadd.f32 0.0, %v1650
        %v1652 = vpop.f32.mrf.mxu0
        %1653 = vmatprep.mubr.bf16.mxu0 %v1327
        %1654 = vmatmul.mubr.bf16.gmra.mxu0 %v1199
        %v1655 = vpop.f32.mrf.mxu0
        %v1656 = vadd.f32 0.0, %v1655
        %v1657 = vpop.f32.mrf.mxu0
        %v1658 = vpop.f32.mrf.mxu0
        %v1659 = vadd.f32 0.0, %v1658
        %v1660 = vpop.f32.mrf.mxu0
        %1661 = vmatprep.mubr.bf16.mxu0 %v1330
        %1662 = vmatmul.mubr.bf16.gmra.mxu0 %v1202
        %v1663 = vpop.f32.mrf.mxu0
        %v1664 = vadd.f32 0.0, %v1663
        %v1665 = vpop.f32.mrf.mxu0
        %v1666 = vpop.f32.mrf.mxu0
        %v1667 = vadd.f32 0.0, %v1666
        %v1668 = vpop.f32.mrf.mxu0
        %1669 = vmatprep.mubr.bf16.mxu0 %v1333
        %1670 = vmatmul.mubr.bf16.gmra.mxu0 %v1205
        %v1671 = vpop.f32.mrf.mxu0
        %v1672 = vadd.f32 0.0, %v1671
        %v1673 = vpop.f32.mrf.mxu0
        %v1674 = vpop.f32.mrf.mxu0
        %v1675 = vadd.f32 0.0, %v1674
        %v1676 = vpop.f32.mrf.mxu0
        %1677 = vmatprep.mubr.bf16.mxu0 %v1336
        %1678 = vmatmul.mubr.bf16.gmra.mxu0 %v1208
        %v1679 = vpop.f32.mrf.mxu0
        %v1680 = vadd.f32 0.0, %v1679
        %v1681 = vpop.f32.mrf.mxu0
        %v1682 = vpop.f32.mrf.mxu0
        %v1683 = vadd.f32 0.0, %v1682
        %v1684 = vpop.f32.mrf.mxu0
        %1685 = vmatprep.mubr.bf16.mxu0 %v1339
        %1686 = vmatmul.mubr.bf16.gmra.mxu0 %v1211
        %v1687 = vpop.f32.mrf.mxu0
        %v1688 = vadd.f32 0.0, %v1687
        %v1689 = vpop.f32.mrf.mxu0
        %v1690 = vpop.f32.mrf.mxu0
        %v1691 = vadd.f32 0.0, %v1690
        %v1692 = vpop.f32.mrf.mxu0
        %1693 = vdwg.mxu0
        %1694 = vmatprep.subr.bf16.mxu0 0
        %1695 = vmatpush1.bf16.msra.mxu0 0
        %1696 = vmatprep.subr.bf16.mxu0 0
        %1697 = vmatpush1.bf16.msra.mxu0 0
        %1698 = vmatprep.subr.bf16.mxu0 0
        %1699 = vmatpush1.bf16.msra.mxu0 0
        %1700 = vmatprep.subr.bf16.mxu0 0
        %1701 = vmatpush1.bf16.msra.mxu0 0
        %1702 = vmatprep.subr.bf16.mxu0 0
        %1703 = vmatpush1.bf16.msra.mxu0 0
        %1704 = vmatprep.subr.bf16.mxu0 0
        %1705 = vmatpush1.bf16.msra.mxu0 0
        %1706 = vmatprep.subr.bf16.mxu0 0
        %1707 = vmatpush1.bf16.msra.mxu0 %v1466
        %1708 = vmatprep.subr.bf16.mxu0 0
        %1709 = vmatpush1.bf16.msra.mxu0 %v1465
        %1710 = vmatprep.subr.bf16.mxu0 0
        %1711 = vmatpush2.bf16.msra.mxu0 0
        %1712 = vmatprep.subr.bf16.mxu0 0
        %1713 = vmatpush2.bf16.msra.mxu0 0
        %1714 = vmatprep.subr.bf16.mxu0 0
        %1715 = vmatpush2.bf16.msra.mxu0 0
        %1716 = vmatprep.subr.bf16.mxu0 0
        %1717 = vmatpush2.bf16.msra.mxu0 0
        %1718 = vmatprep.subr.bf16.mxu0 0
        %1719 = vmatpush2.bf16.msra.mxu0 0
        %1720 = vmatprep.subr.bf16.mxu0 0
        %1721 = vmatpush2.bf16.msra.mxu0 0
        %1722 = vmatprep.subr.bf16.mxu0 0
        %1723 = vmatpush2.bf16.msra.mxu0 0
        %1724 = vmatprep.subr.bf16.mxu0 0
        %1725 = vmatpush2.bf16.msra.mxu0 0
        %1726 = vmatprep.mubr.bf16.mxu0 0
        %1727 = vmatmul.mubr.bf16.gmra.mxu0 %v1486
        %v1728 = vpop.f32.mrf.mxu0
        %v1729 = vadd.f32 %v1568, %v1728
        %v1730 = vpop.f32.mrf.mxu0
        %v1731 = vpop.f32.mrf.mxu0
        %v1732 = vadd.f32 %v1571, %v1731
        %v1733 = vpop.f32.mrf.mxu0
        %1734 = vmatprep.mubr.bf16.mxu0 0
        %1735 = vmatmul.mubr.bf16.gmra.mxu0 %v1489
        %v1736 = vpop.f32.mrf.mxu0
        %v1737 = vadd.f32 %v1576, %v1736
        %v1738 = vpop.f32.mrf.mxu0
        %v1739 = vpop.f32.mrf.mxu0
        %v1740 = vadd.f32 %v1579, %v1739
        %v1741 = vpop.f32.mrf.mxu0
        %1742 = vmatprep.mubr.bf16.mxu0 0
        %1743 = vmatmul.mubr.bf16.gmra.mxu0 %v1492
        %v1744 = vpop.f32.mrf.mxu0
        %v1745 = vadd.f32 %v1584, %v1744
        %v1746 = vpop.f32.mrf.mxu0
        %v1747 = vpop.f32.mrf.mxu0
        %v1748 = vadd.f32 %v1587, %v1747
        %v1749 = vpop.f32.mrf.mxu0
        %1750 = vmatprep.mubr.bf16.mxu0 0
        %1751 = vmatmul.mubr.bf16.gmra.mxu0 %v1495
        %v1752 = vpop.f32.mrf.mxu0
        %v1753 = vadd.f32 %v1592, %v1752
        %v1754 = vpop.f32.mrf.mxu0
        %v1755 = vpop.f32.mrf.mxu0
        %v1756 = vadd.f32 %v1595, %v1755
        %v1757 = vpop.f32.mrf.mxu0
        %1758 = vmatprep.mubr.bf16.mxu0 0
        %1759 = vmatmul.mubr.bf16.gmra.mxu0 %v1498
        %v1760 = vpop.f32.mrf.mxu0
        %v1761 = vadd.f32 %v1600, %v1760
        %v1762 = vpop.f32.mrf.mxu0
        %v1763 = vpop.f32.mrf.mxu0
        %v1764 = vadd.f32 %v1603, %v1763
        %v1765 = vpop.f32.mrf.mxu0
        %1766 = vmatprep.mubr.bf16.mxu0 0
        %1767 = vmatmul.mubr.bf16.gmra.mxu0 %v1501
        %v1768 = vpop.f32.mrf.mxu0
        %v1769 = vadd.f32 %v1608, %v1768
        %v1770 = vpop.f32.mrf.mxu0
        %v1771 = vpop.f32.mrf.mxu0
        %v1772 = vadd.f32 %v1611, %v1771
        %v1773 = vpop.f32.mrf.mxu0
        %1774 = vmatprep.mubr.bf16.mxu0 0
        %1775 = vmatmul.mubr.bf16.gmra.mxu0 %v1504
        %v1776 = vpop.f32.mrf.mxu0
        %v1777 = vadd.f32 %v1616, %v1776
        %v1778 = vpop.f32.mrf.mxu0
        %v1779 = vpop.f32.mrf.mxu0
        %v1780 = vadd.f32 %v1619, %v1779
        %v1781 = vpop.f32.mrf.mxu0
        %1782 = vmatprep.mubr.bf16.mxu0 0
        %1783 = vmatmul.mubr.bf16.gmra.mxu0 %v1507
        %v1784 = vpop.f32.mrf.mxu0
        %v1785 = vadd.f32 %v1624, %v1784
        %v1786 = vpop.f32.mrf.mxu0
        %v1787 = vpop.f32.mrf.mxu0
        %v1788 = vadd.f32 %v1627, %v1787
        %v1789 = vpop.f32.mrf.mxu0
        %1790 = vmatprep.mubr.bf16.mxu0 0
        %1791 = vmatmul.mubr.bf16.gmra.mxu0 %v1510
        %v1792 = vpop.f32.mrf.mxu0
        %v1793 = vadd.f32 %v1632, %v1792
        %v1794 = vpop.f32.mrf.mxu0
        %v1795 = vpop.f32.mrf.mxu0
        %v1796 = vadd.f32 %v1635, %v1795
        %v1797 = vpop.f32.mrf.mxu0
        %1798 = vmatprep.mubr.bf16.mxu0 0
        %1799 = vmatmul.mubr.bf16.gmra.mxu0 %v1513
        %v1800 = vpop.f32.mrf.mxu0
        %v1801 = vadd.f32 %v1640, %v1800
        %v1802 = vpop.f32.mrf.mxu0
        %v1803 = vpop.f32.mrf.mxu0
        %v1804 = vadd.f32 %v1643, %v1803
        %v1805 = vpop.f32.mrf.mxu0
        %1806 = vmatprep.mubr.bf16.mxu0 0
        %1807 = vmatmul.mubr.bf16.gmra.mxu0 %v1516
        %v1808 = vpop.f32.mrf.mxu0
        %v1809 = vadd.f32 %v1648, %v1808
        %v1810 = vpop.f32.mrf.mxu0
        %v1811 = vpop.f32.mrf.mxu0
        %v1812 = vadd.f32 %v1651, %v1811
        %v1813 = vpop.f32.mrf.mxu0
        %1814 = vmatprep.mubr.bf16.mxu0 0
        %1815 = vmatmul.mubr.bf16.gmra.mxu0 %v1519
        %v1816 = vpop.f32.mrf.mxu0
        %v1817 = vadd.f32 %v1656, %v1816
        %v1818 = vpop.f32.mrf.mxu0
        %v1819 = vpop.f32.mrf.mxu0
        %v1820 = vadd.f32 %v1659, %v1819
        %v1821 = vpop.f32.mrf.mxu0
        %1822 = vmatprep.mubr.bf16.mxu0 0
        %1823 = vmatmul.mubr.bf16.gmra.mxu0 %v1522
        %v1824 = vpop.f32.mrf.mxu0
        %v1825 = vadd.f32 %v1664, %v1824
        %v1826 = vpop.f32.mrf.mxu0
        %v1827 = vpop.f32.mrf.mxu0
        %v1828 = vadd.f32 %v1667, %v1827
        %v1829 = vpop.f32.mrf.mxu0
        %1830 = vmatprep.mubr.bf16.mxu0 0
        %1831 = vmatmul.mubr.bf16.gmra.mxu0 %v1525
        %v1832 = vpop.f32.mrf.mxu0
        %v1833 = vadd.f32 %v1672, %v1832
        %v1834 = vpop.f32.mrf.mxu0
        %v1835 = vpop.f32.mrf.mxu0
        %v1836 = vadd.f32 %v1675, %v1835
        %v1837 = vpop.f32.mrf.mxu0
        %1838 = vmatprep.mubr.bf16.mxu0 0
        %1839 = vmatmul.mubr.bf16.gmra.mxu0 %v1528
        %v1840 = vpop.f32.mrf.mxu0
        %v1841 = vadd.f32 %v1680, %v1840
        %v1842 = vpop.f32.mrf.mxu0
        %v1843 = vpop.f32.mrf.mxu0
        %v1844 = vadd.f32 %v1683, %v1843
        %v1845 = vpop.f32.mrf.mxu0
        %1846 = vmatprep.mubr.bf16.mxu0 0
        %1847 = vmatmul.mubr.bf16.gmra.mxu0 %v1531
        %v1848 = vpop.f32.mrf.mxu0
        %v1849 = vadd.f32 %v1688, %v1848
        %v1850 = vpop.f32.mrf.mxu0
        %v1851 = vpop.f32.mrf.mxu0
        %v1852 = vadd.f32 %v1691, %v1851
        %v1853 = vpop.f32.mrf.mxu0
        %1854 = vdwg.mxu0
        %v1855 = vld [vmem:[%s2] sm:$0x1]
        %v1857 = vlaneseq
        %v1858 = vshrl.u32 %v1857, 7
        %v1859 = vsub.s32 0, %v1858
        %v1860 = vrot.slane %v1855, %v1859
        %v1862 = vmul.f32 %v1729, %v1860
        %v1863 = vmul.f32 %v1732, %v1860
        %v1864 = vmul.f32 %v1737, %v1860
        %v1865 = vmul.f32 %v1740, %v1860
        %v1866 = vmul.f32 %v1745, %v1860
        %v1867 = vmul.f32 %v1748, %v1860
        %v1868 = vmul.f32 %v1753, %v1860
        %v1869 = vmul.f32 %v1756, %v1860
        %v1870 = vmul.f32 %v1761, %v1860
        %v1871 = vmul.f32 %v1764, %v1860
        %v1872 = vmul.f32 %v1769, %v1860
        %v1873 = vmul.f32 %v1772, %v1860
        %v1874 = vmul.f32 %v1777, %v1860
        %v1875 = vmul.f32 %v1780, %v1860
        %v1876 = vmul.f32 %v1785, %v1860
        %v1877 = vmul.f32 %v1788, %v1860
        %v1878 = vmul.f32 %v1793, %v1860
        %v1879 = vmul.f32 %v1796, %v1860
        %v1880 = vmul.f32 %v1801, %v1860
        %v1881 = vmul.f32 %v1804, %v1860
        %v1882 = vmul.f32 %v1809, %v1860
        %v1883 = vmul.f32 %v1812, %v1860
        %v1884 = vmul.f32 %v1817, %v1860
        %v1885 = vmul.f32 %v1820, %v1860
        %v1886 = vmul.f32 %v1825, %v1860
        %v1887 = vmul.f32 %v1828, %v1860
        %v1888 = vmul.f32 %v1833, %v1860
        %v1889 = vmul.f32 %v1836, %v1860
        %v1890 = vmul.f32 %v1841, %v1860
        %v1891 = vmul.f32 %v1844, %v1860
        %v1892 = vmul.f32 %v1849, %v1860
        %v1893 = vmul.f32 %v1852, %v1860
        %v1894 = vld [vmem:[%s3] sm:$0x1]
        %v1896 = vlaneseq
        %v1897 = vshrl.u32 %v1896, 7
        %v1898 = vsub.s32 0, %v1897
        %v1899 = vrot.slane %v1894, %v1898
        %v1901 = vadd.f32 %v1862, %v1899
        %v1902 = vadd.f32 %v1863, %v1899
        %v1903 = vadd.f32 %v1864, %v1899
        %v1904 = vadd.f32 %v1865, %v1899
        %v1905 = vadd.f32 %v1866, %v1899
        %v1906 = vadd.f32 %v1867, %v1899
        %v1907 = vadd.f32 %v1868, %v1899
        %v1908 = vadd.f32 %v1869, %v1899
        %v1909 = vadd.f32 %v1870, %v1899
        %v1910 = vadd.f32 %v1871, %v1899
        %v1911 = vadd.f32 %v1872, %v1899
        %v1912 = vadd.f32 %v1873, %v1899
        %v1913 = vadd.f32 %v1874, %v1899
        %v1914 = vadd.f32 %v1875, %v1899
        %v1915 = vadd.f32 %v1876, %v1899
        %v1916 = vadd.f32 %v1877, %v1899
        %v1917 = vadd.f32 %v1878, %v1899
        %v1918 = vadd.f32 %v1879, %v1899
        %v1919 = vadd.f32 %v1880, %v1899
        %v1920 = vadd.f32 %v1881, %v1899
        %v1921 = vadd.f32 %v1882, %v1899
        %v1922 = vadd.f32 %v1883, %v1899
        %v1923 = vadd.f32 %v1884, %v1899
        %v1924 = vadd.f32 %v1885, %v1899
        %v1925 = vadd.f32 %v1886, %v1899
        %v1926 = vadd.f32 %v1887, %v1899
        %v1927 = vadd.f32 %v1888, %v1899
        %v1928 = vadd.f32 %v1889, %v1899
        %v1929 = vadd.f32 %v1890, %v1899
        %v1930 = vadd.f32 %v1891, %v1899
        %v1931 = vadd.f32 %v1892, %v1899
        %v1932 = vadd.f32 %v1893, %v1899
        %v1933 = vmax.f32 %v1901, 0.0
        %v1934 = vmax.f32 %v1902, 0.0
        %v1935 = vmax.f32 %v1903, 0.0
        %v1936 = vmax.f32 %v1904, 0.0
        %v1937 = vmax.f32 %v1905, 0.0
        %v1938 = vmax.f32 %v1906, 0.0
        %v1939 = vmax.f32 %v1907, 0.0
        %v1940 = vmax.f32 %v1908, 0.0
        %v1941 = vmax.f32 %v1909, 0.0
        %v1942 = vmax.f32 %v1910, 0.0
        %v1943 = vmax.f32 %v1911, 0.0
        %v1944 = vmax.f32 %v1912, 0.0
        %v1945 = vmax.f32 %v1913, 0.0
        %v1946 = vmax.f32 %v1914, 0.0
        %v1947 = vmax.f32 %v1915, 0.0
        %v1948 = vmax.f32 %v1916, 0.0
        %v1949 = vmax.f32 %v1917, 0.0
        %v1950 = vmax.f32 %v1918, 0.0
        %v1951 = vmax.f32 %v1919, 0.0
        %v1952 = vmax.f32 %v1920, 0.0
        %v1953 = vmax.f32 %v1921, 0.0
        %v1954 = vmax.f32 %v1922, 0.0
        %v1955 = vmax.f32 %v1923, 0.0
        %v1956 = vmax.f32 %v1924, 0.0
        %v1957 = vmax.f32 %v1925, 0.0
        %v1958 = vmax.f32 %v1926, 0.0
        %v1959 = vmax.f32 %v1927, 0.0
        %v1960 = vmax.f32 %v1928, 0.0
        %v1961 = vmax.f32 %v1929, 0.0
        %v1962 = vmax.f32 %v1930, 0.0
        %v1963 = vmax.f32 %v1931, 0.0
        %v1964 = vmax.f32 %v1932, 0.0
        %vm1965 = vcmask 392192
        %1966 = vst.msk [vmem:[#allocation3] sm:$0xff] %vm1965, 0.0
        %1967 = vst.msk [vmem:[#allocation3 + $0x8] sm:$0xff] %vm1965, 0.0
        %vm1968 = vcmask 386048
        %1969 = vst.msk [vmem:[#allocation3 + $0x10] sm:$0x3] %vm1968, 0.0
        %1970 = vst.msk [vmem:[#allocation3 + $0x18] sm:$0xff] %vm1965, 0.0
        %1971 = vst.msk [vmem:[#allocation3 + $0x20] sm:$0xff] %vm1965, 0.0
        %1972 = vst.msk [vmem:[#allocation3 + $0x28] sm:$0x3] %vm1968, 0.0
        %1973 = vst.msk [vmem:[#allocation3 + $0x30] sm:$0xff] %vm1965, 0.0
        %1974 = vst.msk [vmem:[#allocation3 + $0x38] sm:$0xff] %vm1965, 0.0
        %1975 = vst.msk [vmem:[#allocation3 + $0x40] sm:$0x3] %vm1968, 0.0
        %1976 = vst.msk [vmem:[#allocation3 + $0x48] sm:$0xff] %vm1965, 0.0
        %1977 = vst.msk [vmem:[#allocation3 + $0x50] sm:$0xff] %vm1965, 0.0
        %1978 = vst.msk [vmem:[#allocation3 + $0x58] sm:$0x3] %vm1968, 0.0
        %1979 = vst.msk [vmem:[#allocation3 + $0x60] sm:$0xff] %vm1965, 0.0
        %1980 = vst.msk [vmem:[#allocation3 + $0x68] sm:$0xff] %vm1965, 0.0
        %1981 = vst.msk [vmem:[#allocation3 + $0x70] sm:$0x3] %vm1968, 0.0
        %1982 = vst.msk [vmem:[#allocation3 + $0x78] sm:$0xff] %vm1965, 0.0
        %1983 = vst.msk [vmem:[#allocation3 + $0x80] sm:$0xff] %vm1965, 0.0
        %1984 = vst.msk [vmem:[#allocation3 + $0x88] sm:$0x3] %vm1968, 0.0
        %1985 = vst.msk [vmem:[#allocation3 + $0x90] sm:$0xff] %vm1965, 0.0
        %1986 = vst.msk [vmem:[#allocation3 + $0x98] sm:$0xff] %vm1965, 0.0
        %1987 = vst.msk [vmem:[#allocation3 + $0xa0] sm:$0x3] %vm1968, 0.0
        %1988 = vst.msk [vmem:[#allocation3 + $0xa8] sm:$0xff] %vm1965, 0.0
        %1989 = vst.msk [vmem:[#allocation3 + $0xb0] sm:$0xff] %vm1965, 0.0
        %1990 = vst.msk [vmem:[#allocation3 + $0xb8] sm:$0x3] %vm1968, 0.0
        %1991 = vst.msk [vmem:[#allocation3 + $0xc0] sm:$0xff] %vm1965, 0.0
        %1992 = vst.msk [vmem:[#allocation3 + $0xc8] sm:$0xff] %vm1965, 0.0
        %1993 = vst.msk [vmem:[#allocation3 + $0xd0] sm:$0x3] %vm1968, 0.0
        %1994 = vst.msk [vmem:[#allocation3 + $0xd8] sm:$0xff] %vm1965, 0.0
        %1995 = vst.msk [vmem:[#allocation3 + $0xe0] sm:$0xff] %vm1965, 0.0
        %1996 = vst.msk [vmem:[#allocation3 + $0xe8] sm:$0x3] %vm1968, 0.0
        %1997 = vst.msk [vmem:[#allocation3 + $0xf0] sm:$0xff] %vm1965, 0.0
        %1998 = vst.msk [vmem:[#allocation3 + $0xf8] sm:$0xff] %vm1965, 0.0
        %1999 = vst.msk [vmem:[#allocation3 + $0x100] sm:$0x3] %vm1968, 0.0
        %2000 = vst.msk [vmem:[#allocation3 + $0x108] sm:$0xff] %vm1965, 0.0
        %2001 = vst.msk [vmem:[#allocation3 + $0x110] sm:$0xff] %vm1965, 0.0
        %2002 = vst.msk [vmem:[#allocation3 + $0x118] sm:$0x3] %vm1968, 0.0
        %2003 = vst.msk [vmem:[#allocation3 + $0x120] sm:$0xff] %vm1965, 0.0
        %2004 = vst.msk [vmem:[#allocation3 + $0x128] sm:$0xff] %vm1965, 0.0
        %2005 = vst.msk [vmem:[#allocation3 + $0x130] sm:$0x3] %vm1968, 0.0
        %2006 = vst.msk [vmem:[#allocation3 + $0x138] sm:$0xff] %vm1965, 0.0
        %2007 = vst.msk [vmem:[#allocation3 + $0x140] sm:$0xff] %vm1965, 0.0
        %2008 = vst.msk [vmem:[#allocation3 + $0x148] sm:$0x3] %vm1968, 0.0
        %2009 = vst.msk [vmem:[#allocation3 + $0x150] sm:$0xff] %vm1965, 0.0
        %2010 = vst.msk [vmem:[#allocation3 + $0x158] sm:$0xff] %vm1965, 0.0
        %2011 = vst.msk [vmem:[#allocation3 + $0x160] sm:$0x3] %vm1968, 0.0
        %2012 = vst.msk [vmem:[#allocation3 + $0x168] sm:$0xff] %vm1965, 0.0
        %2013 = vst.msk [vmem:[#allocation3 + $0x170] sm:$0xff] %vm1965, 0.0
        %2014 = vst.msk [vmem:[#allocation3 + $0x178] sm:$0x3] %vm1968, 0.0
        %2015 = vst.msk [vmem:[#allocation3 + $0x180] sm:$0xff] %vm1965, 0.0
        %2016 = vst.msk [vmem:[#allocation3 + $0x188] sm:$0xff] %vm1965, 0.0
        %2017 = vst.msk [vmem:[#allocation3 + $0x190] sm:$0x3] %vm1968, 0.0
        %2018 = vst.msk [vmem:[#allocation3 + $0x198] sm:$0xff] %vm1965, 0.0
        %2019 = vst.msk [vmem:[#allocation3 + $0x1a0] sm:$0xff] %vm1965, 0.0
        %2020 = vst.msk [vmem:[#allocation3 + $0x1a8] sm:$0x3] %vm1968, 0.0
        %s2021 = scalar_lea.vmem [#allocation3], 24
        %2022 = vst.msk [vmem:[%s2021 + $0x1] sm:$0xff] %vm1965, %v1933
        %2023 = vst.msk [vmem:[%s2021 + $0x9] sm:$0xff] %vm1965, %v1934
        %2024 = vst.msk [vmem:[%s2021 + $0x19] sm:$0xff] %vm1965, %v1935
        %2025 = vst.msk [vmem:[%s2021 + $0x21] sm:$0xff] %vm1965, %v1936
        %2026 = vst.msk [vmem:[%s2021 + $0x31] sm:$0xff] %vm1965, %v1937
        %2027 = vst.msk [vmem:[%s2021 + $0x39] sm:$0xff] %vm1965, %v1938
        %2028 = vst.msk [vmem:[%s2021 + $0x49] sm:$0xff] %vm1965, %v1939
        %2029 = vst.msk [vmem:[%s2021 + $0x51] sm:$0xff] %vm1965, %v1940
        %2030 = vst.msk [vmem:[%s2021 + $0x61] sm:$0xff] %vm1965, %v1941
        %2031 = vst.msk [vmem:[%s2021 + $0x69] sm:$0xff] %vm1965, %v1942
        %2032 = vst.msk [vmem:[%s2021 + $0x79] sm:$0xff] %vm1965, %v1943
        %2033 = vst.msk [vmem:[%s2021 + $0x81] sm:$0xff] %vm1965, %v1944
        %2034 = vst.msk [vmem:[%s2021 + $0x91] sm:$0xff] %vm1965, %v1945
        %2035 = vst.msk [vmem:[%s2021 + $0x99] sm:$0xff] %vm1965, %v1946
        %2036 = vst.msk [vmem:[%s2021 + $0xa9] sm:$0xff] %vm1965, %v1947
        %2037 = vst.msk [vmem:[%s2021 + $0xb1] sm:$0xff] %vm1965, %v1948
        %2038 = vst.msk [vmem:[%s2021 + $0xc1] sm:$0xff] %vm1965, %v1949
        %2039 = vst.msk [vmem:[%s2021 + $0xc9] sm:$0xff] %vm1965, %v1950
        %2040 = vst.msk [vmem:[%s2021 + $0xd9] sm:$0xff] %vm1965, %v1951
        %2041 = vst.msk [vmem:[%s2021 + $0xe1] sm:$0xff] %vm1965, %v1952
        %2042 = vst.msk [vmem:[%s2021 + $0xf1] sm:$0xff] %vm1965, %v1953
        %2043 = vst.msk [vmem:[%s2021 + $0xf9] sm:$0xff] %vm1965, %v1954
        %2044 = vst.msk [vmem:[%s2021 + $0x109] sm:$0xff] %vm1965, %v1955
        %2045 = vst.msk [vmem:[%s2021 + $0x111] sm:$0xff] %vm1965, %v1956
        %2046 = vst.msk [vmem:[%s2021 + $0x121] sm:$0xff] %vm1965, %v1957
        %2047 = vst.msk [vmem:[%s2021 + $0x129] sm:$0xff] %vm1965, %v1958
        %2048 = vst.msk [vmem:[%s2021 + $0x139] sm:$0xff] %vm1965, %v1959
        %2049 = vst.msk [vmem:[%s2021 + $0x141] sm:$0xff] %vm1965, %v1960
        %2050 = vst.msk [vmem:[%s2021 + $0x151] sm:$0xff] %vm1965, %v1961
        %2051 = vst.msk [vmem:[%s2021 + $0x159] sm:$0xff] %vm1965, %v1962
        %2052 = vst.msk [vmem:[%s2021 + $0x169] sm:$0xff] %vm1965, %v1963
        %2053 = vst.msk [vmem:[%s2021 + $0x171] sm:$0xff] %vm1965, %v1964
        %v2054 = vld [vmem:[#allocation3] sm:$0xff]
        %v2055 = vld [vmem:[#allocation3 + $0x8] sm:$0xff]
        %v2056 = vld [vmem:[#allocation3 + $0x10] sm:$0x3]
        %v2057 = vld [vmem:[#allocation3 + $0x18] sm:$0xff]
        %v2058 = vld [vmem:[#allocation3 + $0x20] sm:$0xff]
        %v2059 = vld [vmem:[#allocation3 + $0x28] sm:$0x3]
        %v2060 = vld [vmem:[#allocation3 + $0x30] sm:$0xff]
        %v2061 = vld [vmem:[#allocation3 + $0x38] sm:$0xff]
        %v2062 = vld [vmem:[#allocation3 + $0x40] sm:$0x3]
        %v2063 = vld [vmem:[#allocation3 + $0x48] sm:$0xff]
        %v2064 = vld [vmem:[#allocation3 + $0x50] sm:$0xff]
        %v2065 = vld [vmem:[#allocation3 + $0x58] sm:$0x3]
        %v2066 = vld [vmem:[#allocation3 + $0x60] sm:$0xff]
        %v2067 = vld [vmem:[#allocation3 + $0x68] sm:$0xff]
        %v2068 = vld [vmem:[#allocation3 + $0x70] sm:$0x3]
        %v2069 = vld [vmem:[#allocation3 + $0x78] sm:$0xff]
        %v2070 = vld [vmem:[#allocation3 + $0x80] sm:$0xff]
        %v2071 = vld [vmem:[#allocation3 + $0x88] sm:$0x3]
        %v2072 = vld [vmem:[#allocation3 + $0x90] sm:$0xff]
        %v2073 = vld [vmem:[#allocation3 + $0x98] sm:$0xff]
        %v2074 = vld [vmem:[#allocation3 + $0xa0] sm:$0x3]
        %v2075 = vld [vmem:[#allocation3 + $0xa8] sm:$0xff]
        %v2076 = vld [vmem:[#allocation3 + $0xb0] sm:$0xff]
        %v2077 = vld [vmem:[#allocation3 + $0xb8] sm:$0x3]
        %v2078 = vld [vmem:[#allocation3 + $0xc0] sm:$0xff]
        %v2079 = vld [vmem:[#allocation3 + $0xc8] sm:$0xff]
        %v2080 = vld [vmem:[#allocation3 + $0xd0] sm:$0x3]
        %v2081 = vld [vmem:[#allocation3 + $0xd8] sm:$0xff]
        %v2082 = vld [vmem:[#allocation3 + $0xe0] sm:$0xff]
        %v2083 = vld [vmem:[#allocation3 + $0xe8] sm:$0x3]
        %v2084 = vld [vmem:[#allocation3 + $0xf0] sm:$0xff]
        %v2085 = vld [vmem:[#allocation3 + $0xf8] sm:$0xff]
        %v2086 = vld [vmem:[#allocation3 + $0x100] sm:$0x3]
        %v2087 = vld [vmem:[#allocation3 + $0x108] sm:$0xff]
        %v2088 = vld [vmem:[#allocation3 + $0x110] sm:$0xff]
        %v2089 = vld [vmem:[#allocation3 + $0x118] sm:$0x3]
        %v2090 = vld [vmem:[#allocation3 + $0x120] sm:$0xff]
        %v2091 = vld [vmem:[#allocation3 + $0x128] sm:$0xff]
        %v2092 = vld [vmem:[#allocation3 + $0x130] sm:$0x3]
        %v2093 = vld [vmem:[#allocation3 + $0x138] sm:$0xff]
        %v2094 = vld [vmem:[#allocation3 + $0x140] sm:$0xff]
        %v2095 = vld [vmem:[#allocation3 + $0x148] sm:$0x3]
        %v2096 = vld [vmem:[#allocation3 + $0x150] sm:$0xff]
        %v2097 = vld [vmem:[#allocation3 + $0x158] sm:$0xff]
        %v2098 = vld [vmem:[#allocation3 + $0x160] sm:$0x3]
        %v2099 = vld [vmem:[#allocation3 + $0x168] sm:$0xff]
        %v2100 = vld [vmem:[#allocation3 + $0x170] sm:$0xff]
        %v2101 = vld [vmem:[#allocation3 + $0x178] sm:$0x3]
        %v2102 = vld [vmem:[#allocation3 + $0x180] sm:$0xff]
        %v2103 = vld [vmem:[#allocation3 + $0x188] sm:$0xff]
        %v2104 = vld [vmem:[#allocation3 + $0x190] sm:$0x3]
        %v2105 = vld [vmem:[#allocation3 + $0x198] sm:$0xff]
        %v2106 = vld [vmem:[#allocation3 + $0x1a0] sm:$0xff]
        %v2107 = vld [vmem:[#allocation3 + $0x1a8] sm:$0x3]
        %v2108 = vpack.c.bf16 %v2055, %v2054
        %v2109 = vpack.c.bf16 %v2058, %v2057
        %v2110 = vpack.c.bf16 %v2061, %v2060
        %v2111 = vpack.c.bf16 %v2064, %v2063
        %v2112 = vpack.c.bf16 %v2067, %v2066
        %v2113 = vpack.c.bf16 %v2070, %v2069
        %v2114 = vpack.c.bf16 %v2073, %v2072
        %v2115 = vpack.c.bf16 %v2076, %v2075
        %v2116 = vpack.c.bf16 %v2079, %v2078
        %v2117 = vpack.c.bf16 %v2082, %v2081
        %v2118 = vpack.c.bf16 %v2085, %v2084
        %v2119 = vpack.c.bf16 %v2088, %v2087
        %v2120 = vpack.c.bf16 %v2091, %v2090
        %v2121 = vpack.c.bf16 %v2094, %v2093
        %v2122 = vpack.c.bf16 %v2097, %v2096
        %v2123 = vpack.c.bf16 %v2100, %v2099
        %v2172 = vrot.slane %v2054, 1
        %v2173 = vrot.slane %v2055, 1
        %v2174 = vsel %vm541, %v2172, %v2173
        %v2175 = vrot.slane %v2056, 1
        %v2176 = vsel %vm541, %v2173, %v2175
        %v2177 = vrot.slane %v2057, 1
        %v2178 = vrot.slane %v2058, 1
        %v2179 = vsel %vm541, %v2177, %v2178
        %v2180 = vrot.slane %v2059, 1
        %v2181 = vsel %vm541, %v2178, %v2180
        %v2182 = vrot.slane %v2060, 1
        %v2183 = vrot.slane %v2061, 1
        %v2184 = vsel %vm541, %v2182, %v2183
        %v2185 = vrot.slane %v2062, 1
        %v2186 = vsel %vm541, %v2183, %v2185
        %v2187 = vrot.slane %v2063, 1
        %v2188 = vrot.slane %v2064, 1
        %v2189 = vsel %vm541, %v2187, %v2188
        %v2190 = vrot.slane %v2065, 1
        %v2191 = vsel %vm541, %v2188, %v2190
        %v2192 = vrot.slane %v2066, 1
        %v2193 = vrot.slane %v2067, 1
        %v2194 = vsel %vm541, %v2192, %v2193
        %v2195 = vrot.slane %v2068, 1
        %v2196 = vsel %vm541, %v2193, %v2195
        %v2197 = vrot.slane %v2069, 1
        %v2198 = vrot.slane %v2070, 1
        %v2199 = vsel %vm541, %v2197, %v2198
        %v2200 = vrot.slane %v2071, 1
        %v2201 = vsel %vm541, %v2198, %v2200
        %v2202 = vrot.slane %v2072, 1
        %v2203 = vrot.slane %v2073, 1
        %v2204 = vsel %vm541, %v2202, %v2203
        %v2205 = vrot.slane %v2074, 1
        %v2206 = vsel %vm541, %v2203, %v2205
        %v2207 = vrot.slane %v2075, 1
        %v2208 = vrot.slane %v2076, 1
        %v2209 = vsel %vm541, %v2207, %v2208
        %v2210 = vrot.slane %v2077, 1
        %v2211 = vsel %vm541, %v2208, %v2210
        %v2212 = vrot.slane %v2078, 1
        %v2213 = vrot.slane %v2079, 1
        %v2214 = vsel %vm541, %v2212, %v2213
        %v2215 = vrot.slane %v2080, 1
        %v2216 = vsel %vm541, %v2213, %v2215
        %v2217 = vrot.slane %v2081, 1
        %v2218 = vrot.slane %v2082, 1
        %v2219 = vsel %vm541, %v2217, %v2218
        %v2220 = vrot.slane %v2083, 1
        %v2221 = vsel %vm541, %v2218, %v2220
        %v2222 = vrot.slane %v2084, 1
        %v2223 = vrot.slane %v2085, 1
        %v2224 = vsel %vm541, %v2222, %v2223
        %v2225 = vrot.slane %v2086, 1
        %v2226 = vsel %vm541, %v2223, %v2225
        %v2227 = vrot.slane %v2087, 1
        %v2228 = vrot.slane %v2088, 1
        %v2229 = vsel %vm541, %v2227, %v2228
        %v2230 = vrot.slane %v2089, 1
        %v2231 = vsel %vm541, %v2228, %v2230
        %v2232 = vrot.slane %v2090, 1
        %v2233 = vrot.slane %v2091, 1
        %v2234 = vsel %vm541, %v2232, %v2233
        %v2235 = vrot.slane %v2092, 1
        %v2236 = vsel %vm541, %v2233, %v2235
        %v2237 = vrot.slane %v2093, 1
        %v2238 = vrot.slane %v2094, 1
        %v2239 = vsel %vm541, %v2237, %v2238
        %v2240 = vrot.slane %v2095, 1
        %v2241 = vsel %vm541, %v2238, %v2240
        %v2242 = vrot.slane %v2096, 1
        %v2243 = vrot.slane %v2097, 1
        %v2244 = vsel %vm541, %v2242, %v2243
        %v2245 = vrot.slane %v2098, 1
        %v2246 = vsel %vm541, %v2243, %v2245
        %v2247 = vrot.slane %v2099, 1
        %v2248 = vrot.slane %v2100, 1
        %v2249 = vsel %vm541, %v2247, %v2248
        %v2250 = vrot.slane %v2101, 1
        %v2251 = vsel %vm541, %v2248, %v2250
        %v2284 = vpack.c.bf16 %v2176, %v2174
        %v2285 = vpack.c.bf16 %v2181, %v2179
        %v2286 = vpack.c.bf16 %v2186, %v2184
        %v2287 = vpack.c.bf16 %v2191, %v2189
        %v2288 = vpack.c.bf16 %v2196, %v2194
        %v2289 = vpack.c.bf16 %v2201, %v2199
        %v2290 = vpack.c.bf16 %v2206, %v2204
        %v2291 = vpack.c.bf16 %v2211, %v2209
        %v2292 = vpack.c.bf16 %v2216, %v2214
        %v2293 = vpack.c.bf16 %v2221, %v2219
        %v2294 = vpack.c.bf16 %v2226, %v2224
        %v2295 = vpack.c.bf16 %v2231, %v2229
        %v2296 = vpack.c.bf16 %v2236, %v2234
        %v2297 = vpack.c.bf16 %v2241, %v2239
        %v2298 = vpack.c.bf16 %v2246, %v2244
        %v2299 = vpack.c.bf16 %v2251, %v2249
        %v2300 = vrot.slane %v2054, 2
        %v2301 = vrot.slane %v2055, 2
        %v2302 = vsel %vm670, %v2300, %v2301
        %v2303 = vrot.slane %v2056, 2
        %v2304 = vsel %vm670, %v2301, %v2303
        %v2305 = vrot.slane %v2057, 2
        %v2306 = vrot.slane %v2058, 2
        %v2307 = vsel %vm670, %v2305, %v2306
        %v2308 = vrot.slane %v2059, 2
        %v2309 = vsel %vm670, %v2306, %v2308
        %v2310 = vrot.slane %v2060, 2
        %v2311 = vrot.slane %v2061, 2
        %v2312 = vsel %vm670, %v2310, %v2311
        %v2313 = vrot.slane %v2062, 2
        %v2314 = vsel %vm670, %v2311, %v2313
        %v2315 = vrot.slane %v2063, 2
        %v2316 = vrot.slane %v2064, 2
        %v2317 = vsel %vm670, %v2315, %v2316
        %v2318 = vrot.slane %v2065, 2
        %v2319 = vsel %vm670, %v2316, %v2318
        %v2320 = vrot.slane %v2066, 2
        %v2321 = vrot.slane %v2067, 2
        %v2322 = vsel %vm670, %v2320, %v2321
        %v2323 = vrot.slane %v2068, 2
        %v2324 = vsel %vm670, %v2321, %v2323
        %v2325 = vrot.slane %v2069, 2
        %v2326 = vrot.slane %v2070, 2
        %v2327 = vsel %vm670, %v2325, %v2326
        %v2328 = vrot.slane %v2071, 2
        %v2329 = vsel %vm670, %v2326, %v2328
        %v2330 = vrot.slane %v2072, 2
        %v2331 = vrot.slane %v2073, 2
        %v2332 = vsel %vm670, %v2330, %v2331
        %v2333 = vrot.slane %v2074, 2
        %v2334 = vsel %vm670, %v2331, %v2333
        %v2335 = vrot.slane %v2075, 2
        %v2336 = vrot.slane %v2076, 2
        %v2337 = vsel %vm670, %v2335, %v2336
        %v2338 = vrot.slane %v2077, 2
        %v2339 = vsel %vm670, %v2336, %v2338
        %v2340 = vrot.slane %v2078, 2
        %v2341 = vrot.slane %v2079, 2
        %v2342 = vsel %vm670, %v2340, %v2341
        %v2343 = vrot.slane %v2080, 2
        %v2344 = vsel %vm670, %v2341, %v2343
        %v2345 = vrot.slane %v2081, 2
        %v2346 = vrot.slane %v2082, 2
        %v2347 = vsel %vm670, %v2345, %v2346
        %v2348 = vrot.slane %v2083, 2
        %v2349 = vsel %vm670, %v2346, %v2348
        %v2350 = vrot.slane %v2084, 2
        %v2351 = vrot.slane %v2085, 2
        %v2352 = vsel %vm670, %v2350, %v2351
        %v2353 = vrot.slane %v2086, 2
        %v2354 = vsel %vm670, %v2351, %v2353
        %v2355 = vrot.slane %v2087, 2
        %v2356 = vrot.slane %v2088, 2
        %v2357 = vsel %vm670, %v2355, %v2356
        %v2358 = vrot.slane %v2089, 2
        %v2359 = vsel %vm670, %v2356, %v2358
        %v2360 = vrot.slane %v2090, 2
        %v2361 = vrot.slane %v2091, 2
        %v2362 = vsel %vm670, %v2360, %v2361
        %v2363 = vrot.slane %v2092, 2
        %v2364 = vsel %vm670, %v2361, %v2363
        %v2365 = vrot.slane %v2093, 2
        %v2366 = vrot.slane %v2094, 2
        %v2367 = vsel %vm670, %v2365, %v2366
        %v2368 = vrot.slane %v2095, 2
        %v2369 = vsel %vm670, %v2366, %v2368
        %v2370 = vrot.slane %v2096, 2
        %v2371 = vrot.slane %v2097, 2
        %v2372 = vsel %vm670, %v2370, %v2371
        %v2373 = vrot.slane %v2098, 2
        %v2374 = vsel %vm670, %v2371, %v2373
        %v2375 = vrot.slane %v2099, 2
        %v2376 = vrot.slane %v2100, 2
        %v2377 = vsel %vm670, %v2375, %v2376
        %v2378 = vrot.slane %v2101, 2
        %v2379 = vsel %vm670, %v2376, %v2378
        %v2412 = vpack.c.bf16 %v2304, %v2302
        %v2413 = vpack.c.bf16 %v2309, %v2307
        %v2414 = vpack.c.bf16 %v2314, %v2312
        %v2415 = vpack.c.bf16 %v2319, %v2317
        %v2416 = vpack.c.bf16 %v2324, %v2322
        %v2417 = vpack.c.bf16 %v2329, %v2327
        %v2418 = vpack.c.bf16 %v2334, %v2332
        %v2419 = vpack.c.bf16 %v2339, %v2337
        %v2420 = vpack.c.bf16 %v2344, %v2342
        %v2421 = vpack.c.bf16 %v2349, %v2347
        %v2422 = vpack.c.bf16 %v2354, %v2352
        %v2423 = vpack.c.bf16 %v2359, %v2357
        %v2424 = vpack.c.bf16 %v2364, %v2362
        %v2425 = vpack.c.bf16 %v2369, %v2367
        %v2426 = vpack.c.bf16 %v2374, %v2372
        %v2427 = vpack.c.bf16 %v2379, %v2377
        %v2428 = vpack.c.bf16 %v2103, %v2102
        %v2432 = vrot.slane %v2102, 1
        %v2433 = vrot.slane %v2103, 1
        %v2434 = vsel %vm541, %v2432, %v2433
        %v2435 = vrot.slane %v2104, 1
        %v2436 = vsel %vm541, %v2433, %v2435
        %v2439 = vpack.c.bf16 %v2436, %v2434
        %v2440 = vrot.slane %v2102, 2
        %v2441 = vrot.slane %v2103, 2
        %v2442 = vsel %vm670, %v2440, %v2441
        %v2443 = vrot.slane %v2104, 2
        %v2444 = vsel %vm670, %v2441, %v2443
        %v2447 = vpack.c.bf16 %v2444, %v2442
        %v2448 = vpack.c.bf16 %v2106, %v2105
        %v2452 = vrot.slane %v2105, 1
        %v2453 = vrot.slane %v2106, 1
        %v2454 = vsel %vm541, %v2452, %v2453
        %v2455 = vrot.slane %v2107, 1
        %v2456 = vsel %vm541, %v2453, %v2455
        %v2459 = vpack.c.bf16 %v2456, %v2454
        %v2460 = vrot.slane %v2105, 2
        %v2461 = vrot.slane %v2106, 2
        %v2462 = vsel %vm670, %v2460, %v2461
        %v2463 = vrot.slane %v2107, 2
        %v2464 = vsel %vm670, %v2461, %v2463
        %v2467 = vpack.c.bf16 %v2464, %v2462
        %2484 = vrot.lane.b32.xlu0 %v2284, 48
        %v2485 = vpop.permute.xlu0 %2484
        %2486 = vrot.lane.b32.xlu0 %v2285, 48
        %v2487 = vpop.permute.xlu0 %2486
        %2488 = vrot.lane.b32.xlu0 %v2286, 48
        %v2489 = vpop.permute.xlu0 %2488
        %2490 = vrot.lane.b32.xlu0 %v2287, 48
        %v2491 = vpop.permute.xlu0 %2490
        %2492 = vrot.lane.b32.xlu0 %v2288, 48
        %v2493 = vpop.permute.xlu0 %2492
        %2494 = vrot.lane.b32.xlu0 %v2289, 48
        %v2495 = vpop.permute.xlu0 %2494
        %2496 = vrot.lane.b32.xlu0 %v2290, 48
        %v2497 = vpop.permute.xlu0 %2496
        %2498 = vrot.lane.b32.xlu0 %v2291, 48
        %v2499 = vpop.permute.xlu0 %2498
        %2500 = vrot.lane.b32.xlu0 %v2292, 48
        %v2501 = vpop.permute.xlu0 %2500
        %2502 = vrot.lane.b32.xlu0 %v2293, 48
        %v2503 = vpop.permute.xlu0 %2502
        %2504 = vrot.lane.b32.xlu0 %v2294, 48
        %v2505 = vpop.permute.xlu0 %2504
        %2506 = vrot.lane.b32.xlu0 %v2295, 48
        %v2507 = vpop.permute.xlu0 %2506
        %2508 = vrot.lane.b32.xlu0 %v2296, 48
        %v2509 = vpop.permute.xlu0 %2508
        %2510 = vrot.lane.b32.xlu0 %v2297, 48
        %v2511 = vpop.permute.xlu0 %2510
        %2512 = vrot.lane.b32.xlu0 %v2298, 48
        %v2513 = vpop.permute.xlu0 %2512
        %2514 = vrot.lane.b32.xlu0 %v2299, 48
        %v2515 = vpop.permute.xlu0 %2514
        %2532 = vrot.lane.b32.xlu0 %v2412, 96
        %v2533 = vpop.permute.xlu0 %2532
        %2534 = vrot.lane.b32.xlu0 %v2413, 96
        %v2535 = vpop.permute.xlu0 %2534
        %2536 = vrot.lane.b32.xlu0 %v2414, 96
        %v2537 = vpop.permute.xlu0 %2536
        %2538 = vrot.lane.b32.xlu0 %v2415, 96
        %v2539 = vpop.permute.xlu0 %2538
        %2540 = vrot.lane.b32.xlu0 %v2416, 96
        %v2541 = vpop.permute.xlu0 %2540
        %2542 = vrot.lane.b32.xlu0 %v2417, 96
        %v2543 = vpop.permute.xlu0 %2542
        %2544 = vrot.lane.b32.xlu0 %v2418, 96
        %v2545 = vpop.permute.xlu0 %2544
        %2546 = vrot.lane.b32.xlu0 %v2419, 96
        %v2547 = vpop.permute.xlu0 %2546
        %2548 = vrot.lane.b32.xlu0 %v2420, 96
        %v2549 = vpop.permute.xlu0 %2548
        %2550 = vrot.lane.b32.xlu0 %v2421, 96
        %v2551 = vpop.permute.xlu0 %2550
        %2552 = vrot.lane.b32.xlu0 %v2422, 96
        %v2553 = vpop.permute.xlu0 %2552
        %2554 = vrot.lane.b32.xlu0 %v2423, 96
        %v2555 = vpop.permute.xlu0 %2554
        %2556 = vrot.lane.b32.xlu0 %v2424, 96
        %v2557 = vpop.permute.xlu0 %2556
        %2558 = vrot.lane.b32.xlu0 %v2425, 96
        %v2559 = vpop.permute.xlu0 %2558
        %2560 = vrot.lane.b32.xlu0 %v2426, 96
        %v2561 = vpop.permute.xlu0 %2560
        %2562 = vrot.lane.b32.xlu0 %v2427, 96
        %v2563 = vpop.permute.xlu0 %2562
        %2580 = vrot.lane.b32.xlu0 %v2109, 16
        %v2581 = vpop.permute.xlu0 %2580
        %2582 = vrot.lane.b32.xlu0 %v2110, 16
        %v2583 = vpop.permute.xlu0 %2582
        %2584 = vrot.lane.b32.xlu0 %v2111, 16
        %v2585 = vpop.permute.xlu0 %2584
        %2586 = vrot.lane.b32.xlu0 %v2112, 16
        %v2587 = vpop.permute.xlu0 %2586
        %2588 = vrot.lane.b32.xlu0 %v2113, 16
        %v2589 = vpop.permute.xlu0 %2588
        %2590 = vrot.lane.b32.xlu0 %v2114, 16
        %v2591 = vpop.permute.xlu0 %2590
        %2592 = vrot.lane.b32.xlu0 %v2115, 16
        %v2593 = vpop.permute.xlu0 %2592
        %2594 = vrot.lane.b32.xlu0 %v2116, 16
        %v2595 = vpop.permute.xlu0 %2594
        %2596 = vrot.lane.b32.xlu0 %v2117, 16
        %v2597 = vpop.permute.xlu0 %2596
        %2598 = vrot.lane.b32.xlu0 %v2118, 16
        %v2599 = vpop.permute.xlu0 %2598
        %2600 = vrot.lane.b32.xlu0 %v2119, 16
        %v2601 = vpop.permute.xlu0 %2600
        %2602 = vrot.lane.b32.xlu0 %v2120, 16
        %v2603 = vpop.permute.xlu0 %2602
        %2604 = vrot.lane.b32.xlu0 %v2121, 16
        %v2605 = vpop.permute.xlu0 %2604
        %2606 = vrot.lane.b32.xlu0 %v2122, 16
        %v2607 = vpop.permute.xlu0 %2606
        %2608 = vrot.lane.b32.xlu0 %v2123, 16
        %v2609 = vpop.permute.xlu0 %2608
        %2610 = vrot.lane.b32.xlu0 %v2428, 16
        %v2611 = vpop.permute.xlu0 %2610
        %2613 = vrot.lane.b32.xlu0 %v2285, 64
        %v2614 = vpop.permute.xlu0 %2613
        %2615 = vrot.lane.b32.xlu0 %v2286, 64
        %v2616 = vpop.permute.xlu0 %2615
        %2617 = vrot.lane.b32.xlu0 %v2287, 64
        %v2618 = vpop.permute.xlu0 %2617
        %2619 = vrot.lane.b32.xlu0 %v2288, 64
        %v2620 = vpop.permute.xlu0 %2619
        %2621 = vrot.lane.b32.xlu0 %v2289, 64
        %v2622 = vpop.permute.xlu0 %2621
        %2623 = vrot.lane.b32.xlu0 %v2290, 64
        %v2624 = vpop.permute.xlu0 %2623
        %2625 = vrot.lane.b32.xlu0 %v2291, 64
        %v2626 = vpop.permute.xlu0 %2625
        %2627 = vrot.lane.b32.xlu0 %v2292, 64
        %v2628 = vpop.permute.xlu0 %2627
        %2629 = vrot.lane.b32.xlu0 %v2293, 64
        %v2630 = vpop.permute.xlu0 %2629
        %2631 = vrot.lane.b32.xlu0 %v2294, 64
        %v2632 = vpop.permute.xlu0 %2631
        %2633 = vrot.lane.b32.xlu0 %v2295, 64
        %v2634 = vpop.permute.xlu0 %2633
        %2635 = vrot.lane.b32.xlu0 %v2296, 64
        %v2636 = vpop.permute.xlu0 %2635
        %2637 = vrot.lane.b32.xlu0 %v2297, 64
        %v2638 = vpop.permute.xlu0 %2637
        %2639 = vrot.lane.b32.xlu0 %v2298, 64
        %v2640 = vpop.permute.xlu0 %2639
        %2641 = vrot.lane.b32.xlu0 %v2299, 64
        %v2642 = vpop.permute.xlu0 %2641
        %2643 = vrot.lane.b32.xlu0 %v2439, 64
        %v2644 = vpop.permute.xlu0 %2643
        %2646 = vrot.lane.b32.xlu0 %v2413, 112
        %v2647 = vpop.permute.xlu0 %2646
        %2648 = vrot.lane.b32.xlu0 %v2414, 112
        %v2649 = vpop.permute.xlu0 %2648
        %2650 = vrot.lane.b32.xlu0 %v2415, 112
        %v2651 = vpop.permute.xlu0 %2650
        %2652 = vrot.lane.b32.xlu0 %v2416, 112
        %v2653 = vpop.permute.xlu0 %2652
        %2654 = vrot.lane.b32.xlu0 %v2417, 112
        %v2655 = vpop.permute.xlu0 %2654
        %2656 = vrot.lane.b32.xlu0 %v2418, 112
        %v2657 = vpop.permute.xlu0 %2656
        %2658 = vrot.lane.b32.xlu0 %v2419, 112
        %v2659 = vpop.permute.xlu0 %2658
        %2660 = vrot.lane.b32.xlu0 %v2420, 112
        %v2661 = vpop.permute.xlu0 %2660
        %2662 = vrot.lane.b32.xlu0 %v2421, 112
        %v2663 = vpop.permute.xlu0 %2662
        %2664 = vrot.lane.b32.xlu0 %v2422, 112
        %v2665 = vpop.permute.xlu0 %2664
        %2666 = vrot.lane.b32.xlu0 %v2423, 112
        %v2667 = vpop.permute.xlu0 %2666
        %2668 = vrot.lane.b32.xlu0 %v2424, 112
        %v2669 = vpop.permute.xlu0 %2668
        %2670 = vrot.lane.b32.xlu0 %v2425, 112
        %v2671 = vpop.permute.xlu0 %2670
        %2672 = vrot.lane.b32.xlu0 %v2426, 112
        %v2673 = vpop.permute.xlu0 %2672
        %2674 = vrot.lane.b32.xlu0 %v2427, 112
        %v2675 = vpop.permute.xlu0 %2674
        %2676 = vrot.lane.b32.xlu0 %v2447, 112
        %v2677 = vpop.permute.xlu0 %2676
        %2679 = vrot.lane.b32.xlu0 %v2110, 32
        %v2680 = vpop.permute.xlu0 %2679
        %2681 = vrot.lane.b32.xlu0 %v2111, 32
        %v2682 = vpop.permute.xlu0 %2681
        %2683 = vrot.lane.b32.xlu0 %v2112, 32
        %v2684 = vpop.permute.xlu0 %2683
        %2685 = vrot.lane.b32.xlu0 %v2113, 32
        %v2686 = vpop.permute.xlu0 %2685
        %2687 = vrot.lane.b32.xlu0 %v2114, 32
        %v2688 = vpop.permute.xlu0 %2687
        %2689 = vrot.lane.b32.xlu0 %v2115, 32
        %v2690 = vpop.permute.xlu0 %2689
        %2691 = vrot.lane.b32.xlu0 %v2116, 32
        %v2692 = vpop.permute.xlu0 %2691
        %2693 = vrot.lane.b32.xlu0 %v2117, 32
        %v2694 = vpop.permute.xlu0 %2693
        %2695 = vrot.lane.b32.xlu0 %v2118, 32
        %v2696 = vpop.permute.xlu0 %2695
        %2697 = vrot.lane.b32.xlu0 %v2119, 32
        %v2698 = vpop.permute.xlu0 %2697
        %2699 = vrot.lane.b32.xlu0 %v2120, 32
        %v2700 = vpop.permute.xlu0 %2699
        %2701 = vrot.lane.b32.xlu0 %v2121, 32
        %v2702 = vpop.permute.xlu0 %2701
        %2703 = vrot.lane.b32.xlu0 %v2122, 32
        %v2704 = vpop.permute.xlu0 %2703
        %2705 = vrot.lane.b32.xlu0 %v2123, 32
        %v2706 = vpop.permute.xlu0 %2705
        %2707 = vrot.lane.b32.xlu0 %v2428, 32
        %v2708 = vpop.permute.xlu0 %2707
        %2709 = vrot.lane.b32.xlu0 %v2448, 32
        %v2710 = vpop.permute.xlu0 %2709
        %2712 = vrot.lane.b32.xlu0 %v2286, 80
        %v2713 = vpop.permute.xlu0 %2712
        %2714 = vrot.lane.b32.xlu0 %v2287, 80
        %v2715 = vpop.permute.xlu0 %2714
        %2716 = vrot.lane.b32.xlu0 %v2288, 80
        %v2717 = vpop.permute.xlu0 %2716
        %2718 = vrot.lane.b32.xlu0 %v2289, 80
        %v2719 = vpop.permute.xlu0 %2718
        %2720 = vrot.lane.b32.xlu0 %v2290, 80
        %v2721 = vpop.permute.xlu0 %2720
        %2722 = vrot.lane.b32.xlu0 %v2291, 80
        %v2723 = vpop.permute.xlu0 %2722
        %2724 = vrot.lane.b32.xlu0 %v2292, 80
        %v2725 = vpop.permute.xlu0 %2724
        %2726 = vrot.lane.b32.xlu0 %v2293, 80
        %v2727 = vpop.permute.xlu0 %2726
        %2728 = vrot.lane.b32.xlu0 %v2294, 80
        %v2729 = vpop.permute.xlu0 %2728
        %2730 = vrot.lane.b32.xlu0 %v2295, 80
        %v2731 = vpop.permute.xlu0 %2730
        %2732 = vrot.lane.b32.xlu0 %v2296, 80
        %v2733 = vpop.permute.xlu0 %2732
        %2734 = vrot.lane.b32.xlu0 %v2297, 80
        %v2735 = vpop.permute.xlu0 %2734
        %2736 = vrot.lane.b32.xlu0 %v2298, 80
        %v2737 = vpop.permute.xlu0 %2736
        %2738 = vrot.lane.b32.xlu0 %v2299, 80
        %v2739 = vpop.permute.xlu0 %2738
        %2740 = vrot.lane.b32.xlu0 %v2439, 80
        %v2741 = vpop.permute.xlu0 %2740
        %2742 = vrot.lane.b32.xlu0 %v2459, 80
        %v2743 = vpop.permute.xlu0 %2742
        %v2746 = vsel %vm1965, %v2108, %v2485
        %v2749 = vsel %vm1965, %v2109, %v2487
        %v2752 = vsel %vm1965, %v2110, %v2489
        %v2755 = vsel %vm1965, %v2111, %v2491
        %v2758 = vsel %vm1965, %v2112, %v2493
        %v2761 = vsel %vm1965, %v2113, %v2495
        %v2764 = vsel %vm1965, %v2114, %v2497
        %v2767 = vsel %vm1965, %v2115, %v2499
        %v2770 = vsel %vm1965, %v2116, %v2501
        %v2773 = vsel %vm1965, %v2117, %v2503
        %v2776 = vsel %vm1965, %v2118, %v2505
        %v2779 = vsel %vm1965, %v2119, %v2507
        %v2782 = vsel %vm1965, %v2120, %v2509
        %v2785 = vsel %vm1965, %v2121, %v2511
        %v2788 = vsel %vm1965, %v2122, %v2513
        %v2791 = vsel %vm1965, %v2123, %v2515
        %v2793 = vsel %vm1164, %v2746, %v2533
        %v2796 = vsel %vm1164, %v2749, %v2535
        %v2799 = vsel %vm1164, %v2752, %v2537
        %v2802 = vsel %vm1164, %v2755, %v2539
        %v2805 = vsel %vm1164, %v2758, %v2541
        %v2808 = vsel %vm1164, %v2761, %v2543
        %v2811 = vsel %vm1164, %v2764, %v2545
        %v2814 = vsel %vm1164, %v2767, %v2547
        %v2817 = vsel %vm1164, %v2770, %v2549
        %v2820 = vsel %vm1164, %v2773, %v2551
        %v2823 = vsel %vm1164, %v2776, %v2553
        %v2826 = vsel %vm1164, %v2779, %v2555
        %v2829 = vsel %vm1164, %v2782, %v2557
        %v2832 = vsel %vm1164, %v2785, %v2559
        %v2835 = vsel %vm1164, %v2788, %v2561
        %v2838 = vsel %vm1164, %v2791, %v2563
        %vm2840 = vcmask 130048
        %v2842 = vsel %vm2840, %v2533, %v2581
        %v2844 = vsel %vm2840, %v2535, %v2583
        %v2846 = vsel %vm2840, %v2537, %v2585
        %v2848 = vsel %vm2840, %v2539, %v2587
        %v2850 = vsel %vm2840, %v2541, %v2589
        %v2852 = vsel %vm2840, %v2543, %v2591
        %v2854 = vsel %vm2840, %v2545, %v2593
        %v2856 = vsel %vm2840, %v2547, %v2595
        %v2858 = vsel %vm2840, %v2549, %v2597
        %v2860 = vsel %vm2840, %v2551, %v2599
        %v2862 = vsel %vm2840, %v2553, %v2601
        %v2864 = vsel %vm2840, %v2555, %v2603
        %v2866 = vsel %vm2840, %v2557, %v2605
        %v2868 = vsel %vm2840, %v2559, %v2607
        %v2870 = vsel %vm2840, %v2561, %v2609
        %v2872 = vsel %vm2840, %v2563, %v2611
        %v2874 = vsel %vm1131, %v2842, %v2614
        %v2876 = vsel %vm1131, %v2844, %v2616
        %v2878 = vsel %vm1131, %v2846, %v2618
        %v2880 = vsel %vm1131, %v2848, %v2620
        %v2882 = vsel %vm1131, %v2850, %v2622
        %v2884 = vsel %vm1131, %v2852, %v2624
        %v2886 = vsel %vm1131, %v2854, %v2626
        %v2888 = vsel %vm1131, %v2856, %v2628
        %v2890 = vsel %vm1131, %v2858, %v2630
        %v2892 = vsel %vm1131, %v2860, %v2632
        %v2894 = vsel %vm1131, %v2862, %v2634
        %v2896 = vsel %vm1131, %v2864, %v2636
        %v2898 = vsel %vm1131, %v2866, %v2638
        %v2900 = vsel %vm1131, %v2868, %v2640
        %v2902 = vsel %vm1131, %v2870, %v2642
        %v2904 = vsel %vm1131, %v2872, %v2644
        %vm2905 = vcmask 916480
        %v2907 = vsel %vm2905, %v2874, %v2647
        %v2910 = vsel %vm2905, %v2876, %v2649
        %v2913 = vsel %vm2905, %v2878, %v2651
        %v2916 = vsel %vm2905, %v2880, %v2653
        %v2919 = vsel %vm2905, %v2882, %v2655
        %v2922 = vsel %vm2905, %v2884, %v2657
        %v2925 = vsel %vm2905, %v2886, %v2659
        %v2928 = vsel %vm2905, %v2888, %v2661
        %v2931 = vsel %vm2905, %v2890, %v2663
        %v2934 = vsel %vm2905, %v2892, %v2665
        %v2937 = vsel %vm2905, %v2894, %v2667
        %v2940 = vsel %vm2905, %v2896, %v2669
        %v2943 = vsel %vm2905, %v2898, %v2671
        %v2946 = vsel %vm2905, %v2900, %v2673
        %v2949 = vsel %vm2905, %v2902, %v2675
        %v2952 = vsel %vm2905, %v2904, %v2677
        %v2955 = vsel %vm302, %v2647, %v2680
        %v2957 = vsel %vm302, %v2649, %v2682
        %v2959 = vsel %vm302, %v2651, %v2684
        %v2961 = vsel %vm302, %v2653, %v2686
        %v2963 = vsel %vm302, %v2655, %v2688
        %v2965 = vsel %vm302, %v2657, %v2690
        %v2967 = vsel %vm302, %v2659, %v2692
        %v2969 = vsel %vm302, %v2661, %v2694
        %v2971 = vsel %vm302, %v2663, %v2696
        %v2973 = vsel %vm302, %v2665, %v2698
        %v2975 = vsel %vm302, %v2667, %v2700
        %v2977 = vsel %vm302, %v2669, %v2702
        %v2979 = vsel %vm302, %v2671, %v2704
        %v2981 = vsel %vm302, %v2673, %v2706
        %v2983 = vsel %vm302, %v2675, %v2708
        %v2985 = vsel %vm302, %v2677, %v2710
        %vm2986 = vcmask 654336
        %v2988 = vsel %vm2986, %v2955, %v2713
        %v2991 = vsel %vm2986, %v2957, %v2715
        %v2994 = vsel %vm2986, %v2959, %v2717
        %v2997 = vsel %vm2986, %v2961, %v2719
        %v3000 = vsel %vm2986, %v2963, %v2721
        %v3003 = vsel %vm2986, %v2965, %v2723
        %v3006 = vsel %vm2986, %v2967, %v2725
        %v3009 = vsel %vm2986, %v2969, %v2727
        %v3012 = vsel %vm2986, %v2971, %v2729
        %v3015 = vsel %vm2986, %v2973, %v2731
        %v3018 = vsel %vm2986, %v2975, %v2733
        %v3021 = vsel %vm2986, %v2977, %v2735
        %v3024 = vsel %vm2986, %v2979, %v2737
        %v3027 = vsel %vm2986, %v2981, %v2739
        %v3030 = vsel %vm2986, %v2983, %v2741
        %v3033 = vsel %vm2986, %v2985, %v2743
        %v3035 = vld [vmem:[#allocation9] sm:$0xf]
        %v3036 = vld [vmem:[#allocation9 + $0x4] sm:$0xf]
        %v3037 = vld [vmem:[#allocation9 + $0x8] sm:$0xf]
        %v3038 = vld [vmem:[#allocation9 + $0xc] sm:$0xf]
        %v3039 = vld [vmem:[#allocation9 + $0x10] sm:$0xf]
        %v3040 = vld [vmem:[#allocation9 + $0x14] sm:$0xf]
        %v3041 = vld [vmem:[#allocation9 + $0x18] sm:$0xf]
        %v3042 = vld [vmem:[#allocation9 + $0x1c] sm:$0xf]
        %v3043 = vld [vmem:[#allocation9 + $0x20] sm:$0xf]
        %v3044 = vld [vmem:[#allocation9 + $0x24] sm:$0xf]
        %v3045 = vld [vmem:[#allocation9 + $0x28] sm:$0xf]
        %v3046 = vld [vmem:[#allocation9 + $0x2c] sm:$0xf]
        %v3047 = vld [vmem:[#allocation9 + $0x30] sm:$0xf]
        %v3048 = vld [vmem:[#allocation9 + $0x34] sm:$0xf]
        %v3049 = vld [vmem:[#allocation9 + $0x38] sm:$0xf]
        %v3050 = vld [vmem:[#allocation9 + $0x3c] sm:$0xf]
        %v3051 = vld [vmem:[#allocation9 + $0x40] sm:$0xf]
        %v3052 = vld [vmem:[#allocation9 + $0x44] sm:$0xf]
        %v3053 = vld [vmem:[#allocation9 + $0x48] sm:$0xf]
        %v3054 = vld [vmem:[#allocation9 + $0x4c] sm:$0xf]
        %v3055 = vld [vmem:[#allocation9 + $0x50] sm:$0xf]
        %v3056 = vld [vmem:[#allocation9 + $0x54] sm:$0xf]
        %v3057 = vld [vmem:[#allocation9 + $0x58] sm:$0xf]
        %v3058 = vld [vmem:[#allocation9 + $0x5c] sm:$0xf]
        %v3059 = vld [vmem:[#allocation9 + $0x60] sm:$0xf]
        %v3060 = vld [vmem:[#allocation9 + $0x64] sm:$0xf]
        %v3061 = vld [vmem:[#allocation9 + $0x68] sm:$0xf]
        %v3062 = vld [vmem:[#allocation9 + $0x6c] sm:$0xf]
        %v3063 = vld [vmem:[#allocation9 + $0x70] sm:$0xf]
        %v3064 = vld [vmem:[#allocation9 + $0x74] sm:$0xf]
        %v3065 = vld [vmem:[#allocation9 + $0x78] sm:$0xf]
        %v3066 = vld [vmem:[#allocation9 + $0x7c] sm:$0xf]
        %v3067 = vld [vmem:[#allocation9 + $0x80] sm:$0xf]
        %v3068 = vld [vmem:[#allocation9 + $0x84] sm:$0xf]
        %v3069 = vld [vmem:[#allocation9 + $0x88] sm:$0xf]
        %v3070 = vld [vmem:[#allocation9 + $0x8c] sm:$0xf]
        %v3071 = vld [vmem:[#allocation9 + $0x90] sm:$0xf]
        %v3072 = vld [vmem:[#allocation9 + $0x94] sm:$0xf]
        %v3073 = vld [vmem:[#allocation9 + $0x98] sm:$0xf]
        %v3074 = vld [vmem:[#allocation9 + $0x9c] sm:$0xf]
        %v3075 = vld [vmem:[#allocation9 + $0xa0] sm:$0xf]
        %v3076 = vld [vmem:[#allocation9 + $0xa4] sm:$0xf]
        %v3077 = vld [vmem:[#allocation9 + $0xa8] sm:$0xf]
        %v3078 = vld [vmem:[#allocation9 + $0xac] sm:$0xf]
        %v3079 = vld [vmem:[#allocation9 + $0xb0] sm:$0xf]
        %v3080 = vld [vmem:[#allocation9 + $0xb4] sm:$0xf]
        %v3081 = vld [vmem:[#allocation9 + $0xb8] sm:$0xf]
        %v3082 = vld [vmem:[#allocation9 + $0xbc] sm:$0xf]
        %v3083 = vld [vmem:[#allocation9 + $0xc0] sm:$0xf]
        %v3084 = vld [vmem:[#allocation9 + $0xc4] sm:$0xf]
        %v3085 = vld [vmem:[#allocation9 + $0xc8] sm:$0xf]
        %v3086 = vld [vmem:[#allocation9 + $0xcc] sm:$0xf]
        %v3087 = vld [vmem:[#allocation9 + $0xd0] sm:$0xf]
        %v3088 = vld [vmem:[#allocation9 + $0xd4] sm:$0xf]
        %v3089 = vld [vmem:[%s5] sm:$0x1]
        %v3091 = vlaneseq
        %v3092 = vshrl.u32 %v3091, 7
        %v3093 = vsub.s32 0, %v3092
        %v3094 = vrot.slane %v3089, %v3093
        %v3150 = vunpack.c.l.b16 %v3035
        %v3151 = vunpack.c.l.b16 %v3036
        %v3152 = vunpack.c.l.b16 %v3037
        %v3153 = vunpack.c.l.b16 %v3038
        %v3154 = vunpack.c.l.b16 %v3039
        %v3155 = vunpack.c.l.b16 %v3040
        %v3156 = vunpack.c.l.b16 %v3041
        %v3157 = vunpack.c.l.b16 %v3042
        %v3158 = vunpack.c.l.b16 %v3043
        %v3159 = vunpack.c.l.b16 %v3044
        %v3160 = vunpack.c.l.b16 %v3045
        %v3161 = vunpack.c.l.b16 %v3046
        %v3162 = vunpack.c.l.b16 %v3047
        %v3163 = vunpack.c.l.b16 %v3048
        %v3164 = vunpack.c.l.b16 %v3049
        %v3165 = vunpack.c.l.b16 %v3050
        %v3166 = vunpack.c.l.b16 %v3051
        %v3167 = vunpack.c.l.b16 %v3052
        %v3168 = vunpack.c.l.b16 %v3053
        %v3169 = vunpack.c.l.b16 %v3054
        %v3170 = vunpack.c.l.b16 %v3055
        %v3171 = vunpack.c.l.b16 %v3056
        %v3172 = vunpack.c.l.b16 %v3057
        %v3173 = vunpack.c.l.b16 %v3058
        %v3174 = vunpack.c.l.b16 %v3059
        %v3175 = vunpack.c.l.b16 %v3060
        %v3176 = vunpack.c.l.b16 %v3061
        %v3177 = vunpack.c.l.b16 %v3062
        %v3178 = vunpack.c.l.b16 %v3063
        %v3179 = vunpack.c.l.b16 %v3064
        %v3180 = vunpack.c.l.b16 %v3065
        %v3181 = vunpack.c.l.b16 %v3066
        %v3182 = vunpack.c.l.b16 %v3067
        %v3183 = vunpack.c.l.b16 %v3068
        %v3184 = vunpack.c.l.b16 %v3069
        %v3185 = vunpack.c.l.b16 %v3070
        %v3186 = vunpack.c.l.b16 %v3071
        %v3187 = vunpack.c.l.b16 %v3072
        %v3188 = vunpack.c.l.b16 %v3073
        %v3189 = vunpack.c.l.b16 %v3074
        %v3190 = vunpack.c.l.b16 %v3075
        %v3191 = vunpack.c.l.b16 %v3076
        %v3192 = vunpack.c.l.b16 %v3077
        %v3193 = vunpack.c.l.b16 %v3078
        %v3194 = vunpack.c.l.b16 %v3079
        %v3195 = vunpack.c.l.b16 %v3080
        %v3196 = vunpack.c.l.b16 %v3081
        %v3197 = vunpack.c.l.b16 %v3082
        %v3198 = vunpack.c.l.b16 %v3083
        %v3199 = vunpack.c.l.b16 %v3084
        %v3200 = vunpack.c.l.b16 %v3085
        %v3201 = vunpack.c.l.b16 %v3086
        %v3202 = vunpack.c.l.b16 %v3087
        %v3203 = vunpack.c.l.b16 %v3088
        %v3204 = vpack.c.b16 %v3151, %v3150
        %v3205 = vpack.c.b16 %v3153, %v3152
        %v3206 = vpack.c.b16 %v3155, %v3154
        %v3207 = vpack.c.b16 %v3157, %v3156
        %v3208 = vpack.c.b16 %v3159, %v3158
        %v3209 = vpack.c.b16 %v3161, %v3160
        %v3210 = vpack.c.b16 %v3163, %v3162
        %v3211 = vpack.c.b16 %v3165, %v3164
        %v3212 = vpack.c.b16 %v3167, %v3166
        %v3213 = vpack.c.b16 %v3169, %v3168
        %v3214 = vpack.c.b16 %v3171, %v3170
        %v3215 = vpack.c.b16 %v3173, %v3172
        %v3216 = vpack.c.b16 %v3175, %v3174
        %v3217 = vpack.c.b16 %v3177, %v3176
        %v3218 = vpack.c.b16 %v3179, %v3178
        %v3219 = vpack.c.b16 %v3181, %v3180
        %v3220 = vpack.c.b16 %v3183, %v3182
        %v3221 = vpack.c.b16 %v3185, %v3184
        %v3222 = vpack.c.b16 %v3187, %v3186
        %v3223 = vpack.c.b16 %v3189, %v3188
        %v3224 = vpack.c.b16 %v3191, %v3190
        %v3225 = vpack.c.b16 %v3193, %v3192
        %v3226 = vpack.c.b16 %v3195, %v3194
        %v3227 = vpack.c.b16 %v3197, %v3196
        %v3228 = vpack.c.b16 %v3199, %v3198
        %v3229 = vpack.c.b16 %v3201, %v3200
        %v3230 = vpack.c.b16 %v3203, %v3202
        %v3259 = vsel %vm1965, %v2414, 0
        %v3262 = vsel %vm1965, %v2415, 0
        %v3265 = vsel %vm1965, %v2416, 0
        %v3268 = vsel %vm1965, %v2417, 0
        %v3271 = vsel %vm1965, %v2418, 0
        %v3274 = vsel %vm1965, %v2419, 0
        %v3277 = vsel %vm1965, %v2420, 0
        %v3280 = vsel %vm1965, %v2421, 0
        %v3283 = vsel %vm1965, %v2422, 0
        %v3286 = vsel %vm1965, %v2423, 0
        %v3289 = vsel %vm1965, %v2424, 0
        %v3292 = vsel %vm1965, %v2425, 0
        %v3295 = vsel %vm1965, %v2426, 0
        %v3298 = vsel %vm1965, %v2427, 0
        %v3301 = vsel %vm1965, %v2447, 0
        %v3304 = vsel %vm1965, %v2467, 0
        %3306 = vmatprep.subr.bf16.mxu0 0
        %3307 = vmatpush1.bf16.msra.mxu0 %v3211
        %3308 = vmatprep.subr.bf16.mxu0 0
        %3309 = vmatpush1.bf16.msra.mxu0 %v3210
        %3310 = vmatprep.subr.bf16.mxu0 0
        %3311 = vmatpush1.bf16.msra.mxu0 %v3209
        %3312 = vmatprep.subr.bf16.mxu0 0
        %3313 = vmatpush1.bf16.msra.mxu0 %v3208
        %3314 = vmatprep.subr.bf16.mxu0 0
        %3315 = vmatpush1.bf16.msra.mxu0 %v3207
        %3316 = vmatprep.subr.bf16.mxu0 0
        %3317 = vmatpush1.bf16.msra.mxu0 %v3206
        %3318 = vmatprep.subr.bf16.mxu0 0
        %3319 = vmatpush1.bf16.msra.mxu0 %v3205
        %3320 = vmatprep.subr.bf16.mxu0 0
        %3321 = vmatpush1.bf16.msra.mxu0 %v3204
        %3322 = vmatprep.subr.bf16.mxu0 0
        %3323 = vmatpush2.bf16.msra.mxu0 %v3219
        %3324 = vmatprep.subr.bf16.mxu0 0
        %3325 = vmatpush2.bf16.msra.mxu0 %v3218
        %3326 = vmatprep.subr.bf16.mxu0 0
        %3327 = vmatpush2.bf16.msra.mxu0 %v3217
        %3328 = vmatprep.subr.bf16.mxu0 0
        %3329 = vmatpush2.bf16.msra.mxu0 %v3216
        %3330 = vmatprep.subr.bf16.mxu0 0
        %3331 = vmatpush2.bf16.msra.mxu0 %v3215
        %3332 = vmatprep.subr.bf16.mxu0 0
        %3333 = vmatpush2.bf16.msra.mxu0 %v3214
        %3334 = vmatprep.subr.bf16.mxu0 0
        %3335 = vmatpush2.bf16.msra.mxu0 %v3213
        %3336 = vmatprep.subr.bf16.mxu0 0
        %3337 = vmatpush2.bf16.msra.mxu0 %v3212
        %3338 = vmatprep.mubr.bf16.mxu0 %v2907
        %3339 = vmatmul.mubr.bf16.gmra.mxu0 %v2793
        %v3340 = vpop.f32.mrf.mxu0
        %v3341 = vadd.f32 %v3094, %v3340
        %v3342 = vpop.f32.mrf.mxu0
        %v3343 = vpop.f32.mrf.mxu0
        %v3344 = vadd.f32 %v3094, %v3343
        %v3345 = vpop.f32.mrf.mxu0
        %3346 = vmatprep.mubr.bf16.mxu0 %v2910
        %3347 = vmatmul.mubr.bf16.gmra.mxu0 %v2796
        %v3348 = vpop.f32.mrf.mxu0
        %v3349 = vadd.f32 %v3094, %v3348
        %v3350 = vpop.f32.mrf.mxu0
        %v3351 = vpop.f32.mrf.mxu0
        %v3352 = vadd.f32 %v3094, %v3351
        %v3353 = vpop.f32.mrf.mxu0
        %3354 = vmatprep.mubr.bf16.mxu0 %v2913
        %3355 = vmatmul.mubr.bf16.gmra.mxu0 %v2799
        %v3356 = vpop.f32.mrf.mxu0
        %v3357 = vadd.f32 %v3094, %v3356
        %v3358 = vpop.f32.mrf.mxu0
        %v3359 = vpop.f32.mrf.mxu0
        %v3360 = vadd.f32 %v3094, %v3359
        %v3361 = vpop.f32.mrf.mxu0
        %3362 = vmatprep.mubr.bf16.mxu0 %v2916
        %3363 = vmatmul.mubr.bf16.gmra.mxu0 %v2802
        %v3364 = vpop.f32.mrf.mxu0
        %v3365 = vadd.f32 %v3094, %v3364
        %v3366 = vpop.f32.mrf.mxu0
        %v3367 = vpop.f32.mrf.mxu0
        %v3368 = vadd.f32 %v3094, %v3367
        %v3369 = vpop.f32.mrf.mxu0
        %3370 = vmatprep.mubr.bf16.mxu0 %v2919
        %3371 = vmatmul.mubr.bf16.gmra.mxu0 %v2805
        %v3372 = vpop.f32.mrf.mxu0
        %v3373 = vadd.f32 %v3094, %v3372
        %v3374 = vpop.f32.mrf.mxu0
        %v3375 = vpop.f32.mrf.mxu0
        %v3376 = vadd.f32 %v3094, %v3375
        %v3377 = vpop.f32.mrf.mxu0
        %3378 = vmatprep.mubr.bf16.mxu0 %v2922
        %3379 = vmatmul.mubr.bf16.gmra.mxu0 %v2808
        %v3380 = vpop.f32.mrf.mxu0
        %v3381 = vadd.f32 %v3094, %v3380
        %v3382 = vpop.f32.mrf.mxu0
        %v3383 = vpop.f32.mrf.mxu0
        %v3384 = vadd.f32 %v3094, %v3383
        %v3385 = vpop.f32.mrf.mxu0
        %3386 = vmatprep.mubr.bf16.mxu0 %v2925
        %3387 = vmatmul.mubr.bf16.gmra.mxu0 %v2811
        %v3388 = vpop.f32.mrf.mxu0
        %v3389 = vadd.f32 %v3094, %v3388
        %v3390 = vpop.f32.mrf.mxu0
        %v3391 = vpop.f32.mrf.mxu0
        %v3392 = vadd.f32 %v3094, %v3391
        %v3393 = vpop.f32.mrf.mxu0
        %3394 = vmatprep.mubr.bf16.mxu0 %v2928
        %3395 = vmatmul.mubr.bf16.gmra.mxu0 %v2814
        %v3396 = vpop.f32.mrf.mxu0
        %v3397 = vadd.f32 %v3094, %v3396
        %v3398 = vpop.f32.mrf.mxu0
        %v3399 = vpop.f32.mrf.mxu0
        %v3400 = vadd.f32 %v3094, %v3399
        %v3401 = vpop.f32.mrf.mxu0
        %3402 = vmatprep.mubr.bf16.mxu0 %v2931
        %3403 = vmatmul.mubr.bf16.gmra.mxu0 %v2817
        %v3404 = vpop.f32.mrf.mxu0
        %v3405 = vadd.f32 %v3094, %v3404
        %v3406 = vpop.f32.mrf.mxu0
        %v3407 = vpop.f32.mrf.mxu0
        %v3408 = vadd.f32 %v3094, %v3407
        %v3409 = vpop.f32.mrf.mxu0
        %3410 = vmatprep.mubr.bf16.mxu0 %v2934
        %3411 = vmatmul.mubr.bf16.gmra.mxu0 %v2820
        %v3412 = vpop.f32.mrf.mxu0
        %v3413 = vadd.f32 %v3094, %v3412
        %v3414 = vpop.f32.mrf.mxu0
        %v3415 = vpop.f32.mrf.mxu0
        %v3416 = vadd.f32 %v3094, %v3415
        %v3417 = vpop.f32.mrf.mxu0
        %3418 = vmatprep.mubr.bf16.mxu0 %v2937
        %3419 = vmatmul.mubr.bf16.gmra.mxu0 %v2823
        %v3420 = vpop.f32.mrf.mxu0
        %v3421 = vadd.f32 %v3094, %v3420
        %v3422 = vpop.f32.mrf.mxu0
        %v3423 = vpop.f32.mrf.mxu0
        %v3424 = vadd.f32 %v3094, %v3423
        %v3425 = vpop.f32.mrf.mxu0
        %3426 = vmatprep.mubr.bf16.mxu0 %v2940
        %3427 = vmatmul.mubr.bf16.gmra.mxu0 %v2826
        %v3428 = vpop.f32.mrf.mxu0
        %v3429 = vadd.f32 %v3094, %v3428
        %v3430 = vpop.f32.mrf.mxu0
        %v3431 = vpop.f32.mrf.mxu0
        %v3432 = vadd.f32 %v3094, %v3431
        %v3433 = vpop.f32.mrf.mxu0
        %3434 = vmatprep.mubr.bf16.mxu0 %v2943
        %3435 = vmatmul.mubr.bf16.gmra.mxu0 %v2829
        %v3436 = vpop.f32.mrf.mxu0
        %v3437 = vadd.f32 %v3094, %v3436
        %v3438 = vpop.f32.mrf.mxu0
        %v3439 = vpop.f32.mrf.mxu0
        %v3440 = vadd.f32 %v3094, %v3439
        %v3441 = vpop.f32.mrf.mxu0
        %3442 = vmatprep.mubr.bf16.mxu0 %v2946
        %3443 = vmatmul.mubr.bf16.gmra.mxu0 %v2832
        %v3444 = vpop.f32.mrf.mxu0
        %v3445 = vadd.f32 %v3094, %v3444
        %v3446 = vpop.f32.mrf.mxu0
        %v3447 = vpop.f32.mrf.mxu0
        %v3448 = vadd.f32 %v3094, %v3447
        %v3449 = vpop.f32.mrf.mxu0
        %3450 = vmatprep.mubr.bf16.mxu0 %v2949
        %3451 = vmatmul.mubr.bf16.gmra.mxu0 %v2835
        %v3452 = vpop.f32.mrf.mxu0
        %v3453 = vadd.f32 %v3094, %v3452
        %v3454 = vpop.f32.mrf.mxu0
        %v3455 = vpop.f32.mrf.mxu0
        %v3456 = vadd.f32 %v3094, %v3455
        %v3457 = vpop.f32.mrf.mxu0
        %3458 = vmatprep.mubr.bf16.mxu0 %v2952
        %3459 = vmatmul.mubr.bf16.gmra.mxu0 %v2838
        %v3460 = vpop.f32.mrf.mxu0
        %v3461 = vadd.f32 %v3094, %v3460
        %v3462 = vpop.f32.mrf.mxu0
        %v3463 = vpop.f32.mrf.mxu0
        %v3464 = vadd.f32 %v3094, %v3463
        %v3465 = vpop.f32.mrf.mxu0
        %3466 = vdwg.mxu0
        %3467 = vmatprep.subr.bf16.mxu0 0
        %3468 = vmatpush1.bf16.msra.mxu0 %v3227
        %3469 = vmatprep.subr.bf16.mxu0 0
        %3470 = vmatpush1.bf16.msra.mxu0 %v3226
        %3471 = vmatprep.subr.bf16.mxu0 0
        %3472 = vmatpush1.bf16.msra.mxu0 %v3225
        %3473 = vmatprep.subr.bf16.mxu0 0
        %3474 = vmatpush1.bf16.msra.mxu0 %v3224
        %3475 = vmatprep.subr.bf16.mxu0 0
        %3476 = vmatpush1.bf16.msra.mxu0 %v3223
        %3477 = vmatprep.subr.bf16.mxu0 0
        %3478 = vmatpush1.bf16.msra.mxu0 %v3222
        %3479 = vmatprep.subr.bf16.mxu0 0
        %3480 = vmatpush1.bf16.msra.mxu0 %v3221
        %3481 = vmatprep.subr.bf16.mxu0 0
        %3482 = vmatpush1.bf16.msra.mxu0 %v3220
        %3483 = vmatprep.subr.bf16.mxu0 0
        %3484 = vmatpush2.bf16.msra.mxu0 0
        %3485 = vmatprep.subr.bf16.mxu0 0
        %3486 = vmatpush2.bf16.msra.mxu0 0
        %3487 = vmatprep.subr.bf16.mxu0 0
        %3488 = vmatpush2.bf16.msra.mxu0 0
        %3489 = vmatprep.subr.bf16.mxu0 0
        %3490 = vmatpush2.bf16.msra.mxu0 0
        %3491 = vmatprep.subr.bf16.mxu0 0
        %3492 = vmatpush2.bf16.msra.mxu0 0
        %3493 = vmatprep.subr.bf16.mxu0 0
        %3494 = vmatpush2.bf16.msra.mxu0 %v3230
        %3495 = vmatprep.subr.bf16.mxu0 0
        %3496 = vmatpush2.bf16.msra.mxu0 %v3229
        %3497 = vmatprep.subr.bf16.mxu0 0
        %3498 = vmatpush2.bf16.msra.mxu0 %v3228
        %3499 = vmatprep.mubr.bf16.mxu0 %v3259
        %3500 = vmatmul.mubr.bf16.gmra.mxu0 %v2988
        %v3501 = vpop.f32.mrf.mxu0
        %v3502 = vadd.f32 %v3341, %v3501
        %v3503 = vpop.f32.mrf.mxu0
        %v3504 = vpop.f32.mrf.mxu0
        %v3505 = vadd.f32 %v3344, %v3504
        %v3506 = vpop.f32.mrf.mxu0
        %3507 = vmatprep.mubr.bf16.mxu0 %v3262
        %3508 = vmatmul.mubr.bf16.gmra.mxu0 %v2991
        %v3509 = vpop.f32.mrf.mxu0
        %v3510 = vadd.f32 %v3349, %v3509
        %v3511 = vpop.f32.mrf.mxu0
        %v3512 = vpop.f32.mrf.mxu0
        %v3513 = vadd.f32 %v3352, %v3512
        %v3514 = vpop.f32.mrf.mxu0
        %3515 = vmatprep.mubr.bf16.mxu0 %v3265
        %3516 = vmatmul.mubr.bf16.gmra.mxu0 %v2994
        %v3517 = vpop.f32.mrf.mxu0
        %v3518 = vadd.f32 %v3357, %v3517
        %v3519 = vpop.f32.mrf.mxu0
        %v3520 = vpop.f32.mrf.mxu0
        %v3521 = vadd.f32 %v3360, %v3520
        %v3522 = vpop.f32.mrf.mxu0
        %3523 = vmatprep.mubr.bf16.mxu0 %v3268
        %3524 = vmatmul.mubr.bf16.gmra.mxu0 %v2997
        %v3525 = vpop.f32.mrf.mxu0
        %v3526 = vadd.f32 %v3365, %v3525
        %v3527 = vpop.f32.mrf.mxu0
        %v3528 = vpop.f32.mrf.mxu0
        %v3529 = vadd.f32 %v3368, %v3528
        %v3530 = vpop.f32.mrf.mxu0
        %3531 = vmatprep.mubr.bf16.mxu0 %v3271
        %3532 = vmatmul.mubr.bf16.gmra.mxu0 %v3000
        %v3533 = vpop.f32.mrf.mxu0
        %v3534 = vadd.f32 %v3373, %v3533
        %v3535 = vpop.f32.mrf.mxu0
        %v3536 = vpop.f32.mrf.mxu0
        %v3537 = vadd.f32 %v3376, %v3536
        %v3538 = vpop.f32.mrf.mxu0
        %3539 = vmatprep.mubr.bf16.mxu0 %v3274
        %3540 = vmatmul.mubr.bf16.gmra.mxu0 %v3003
        %v3541 = vpop.f32.mrf.mxu0
        %v3542 = vadd.f32 %v3381, %v3541
        %v3543 = vpop.f32.mrf.mxu0
        %v3544 = vpop.f32.mrf.mxu0
        %v3545 = vadd.f32 %v3384, %v3544
        %v3546 = vpop.f32.mrf.mxu0
        %3547 = vmatprep.mubr.bf16.mxu0 %v3277
        %3548 = vmatmul.mubr.bf16.gmra.mxu0 %v3006
        %v3549 = vpop.f32.mrf.mxu0
        %v3550 = vadd.f32 %v3389, %v3549
        %v3551 = vpop.f32.mrf.mxu0
        %v3552 = vpop.f32.mrf.mxu0
        %v3553 = vadd.f32 %v3392, %v3552
        %v3554 = vpop.f32.mrf.mxu0
        %3555 = vmatprep.mubr.bf16.mxu0 %v3280
        %3556 = vmatmul.mubr.bf16.gmra.mxu0 %v3009
        %v3557 = vpop.f32.mrf.mxu0
        %v3558 = vadd.f32 %v3397, %v3557
        %v3559 = vpop.f32.mrf.mxu0
        %v3560 = vpop.f32.mrf.mxu0
        %v3561 = vadd.f32 %v3400, %v3560
        %v3562 = vpop.f32.mrf.mxu0
        %3563 = vmatprep.mubr.bf16.mxu0 %v3283
        %3564 = vmatmul.mubr.bf16.gmra.mxu0 %v3012
        %v3565 = vpop.f32.mrf.mxu0
        %v3566 = vadd.f32 %v3405, %v3565
        %v3567 = vpop.f32.mrf.mxu0
        %v3568 = vpop.f32.mrf.mxu0
        %v3569 = vadd.f32 %v3408, %v3568
        %v3570 = vpop.f32.mrf.mxu0
        %3571 = vmatprep.mubr.bf16.mxu0 %v3286
        %3572 = vmatmul.mubr.bf16.gmra.mxu0 %v3015
        %v3573 = vpop.f32.mrf.mxu0
        %v3574 = vadd.f32 %v3413, %v3573
        %v3575 = vpop.f32.mrf.mxu0
        %v3576 = vpop.f32.mrf.mxu0
        %v3577 = vadd.f32 %v3416, %v3576
        %v3578 = vpop.f32.mrf.mxu0
        %3579 = vmatprep.mubr.bf16.mxu0 %v3289
        %3580 = vmatmul.mubr.bf16.gmra.mxu0 %v3018
        %v3581 = vpop.f32.mrf.mxu0
        %v3582 = vadd.f32 %v3421, %v3581
        %v3583 = vpop.f32.mrf.mxu0
        %v3584 = vpop.f32.mrf.mxu0
        %v3585 = vadd.f32 %v3424, %v3584
        %v3586 = vpop.f32.mrf.mxu0
        %3587 = vmatprep.mubr.bf16.mxu0 %v3292
        %3588 = vmatmul.mubr.bf16.gmra.mxu0 %v3021
        %v3589 = vpop.f32.mrf.mxu0
        %v3590 = vadd.f32 %v3429, %v3589
        %v3591 = vpop.f32.mrf.mxu0
        %v3592 = vpop.f32.mrf.mxu0
        %v3593 = vadd.f32 %v3432, %v3592
        %v3594 = vpop.f32.mrf.mxu0
        %3595 = vmatprep.mubr.bf16.mxu0 %v3295
        %3596 = vmatmul.mubr.bf16.gmra.mxu0 %v3024
        %v3597 = vpop.f32.mrf.mxu0
        %v3598 = vadd.f32 %v3437, %v3597
        %v3599 = vpop.f32.mrf.mxu0
        %v3600 = vpop.f32.mrf.mxu0
        %v3601 = vadd.f32 %v3440, %v3600
        %v3602 = vpop.f32.mrf.mxu0
        %3603 = vmatprep.mubr.bf16.mxu0 %v3298
        %3604 = vmatmul.mubr.bf16.gmra.mxu0 %v3027
        %v3605 = vpop.f32.mrf.mxu0
        %v3606 = vadd.f32 %v3445, %v3605
        %v3607 = vpop.f32.mrf.mxu0
        %v3608 = vpop.f32.mrf.mxu0
        %v3609 = vadd.f32 %v3448, %v3608
        %v3610 = vpop.f32.mrf.mxu0
        %3611 = vmatprep.mubr.bf16.mxu0 %v3301
        %3612 = vmatmul.mubr.bf16.gmra.mxu0 %v3030
        %v3613 = vpop.f32.mrf.mxu0
        %v3614 = vadd.f32 %v3453, %v3613
        %v3615 = vpop.f32.mrf.mxu0
        %v3616 = vpop.f32.mrf.mxu0
        %v3617 = vadd.f32 %v3456, %v3616
        %v3618 = vpop.f32.mrf.mxu0
        %3619 = vmatprep.mubr.bf16.mxu0 %v3304
        %3620 = vmatmul.mubr.bf16.gmra.mxu0 %v3033
        %v3621 = vpop.f32.mrf.mxu0
        %v3622 = vadd.f32 %v3461, %v3621
        %v3623 = vpop.f32.mrf.mxu0
        %v3624 = vpop.f32.mrf.mxu0
        %v3625 = vadd.f32 %v3464, %v3624
        %v3626 = vpop.f32.mrf.mxu0
        %3627 = vdwg.mxu0
        %v3628 = vlaneseq
        %v3629 = vand.u32 %v3628, 127
        %vm3630 = vcmp.eq.s32.totalorder %v3629, 0
        %vm3631 = vcmp.eq.s32.totalorder %v3629, 1
        %vm3632 = vmor %vm3630, %vm3631
        %vm3633 = vcmp.eq.s32.totalorder %v3629, 4
        %vm3634 = vmor %vm3632, %vm3633
        %v3635 = vxor.u32 %v3502, 2147483648
        %v3636 = vxor.u32 %v3505, 2147483648
        %v3637 = vxor.u32 %v3510, 2147483648
        %v3638 = vxor.u32 %v3513, 2147483648
        %v3639 = vxor.u32 %v3518, 2147483648
        %v3640 = vxor.u32 %v3521, 2147483648
        %v3641 = vxor.u32 %v3526, 2147483648
        %v3642 = vxor.u32 %v3529, 2147483648
        %v3643 = vxor.u32 %v3534, 2147483648
        %v3644 = vxor.u32 %v3537, 2147483648
        %v3645 = vxor.u32 %v3542, 2147483648
        %v3646 = vxor.u32 %v3545, 2147483648
        %v3647 = vxor.u32 %v3550, 2147483648
        %v3648 = vxor.u32 %v3553, 2147483648
        %v3649 = vxor.u32 %v3558, 2147483648
        %v3650 = vxor.u32 %v3561, 2147483648
        %v3651 = vxor.u32 %v3566, 2147483648
        %v3652 = vxor.u32 %v3569, 2147483648
        %v3653 = vxor.u32 %v3574, 2147483648
        %v3654 = vxor.u32 %v3577, 2147483648
        %v3655 = vxor.u32 %v3582, 2147483648
        %v3656 = vxor.u32 %v3585, 2147483648
        %v3657 = vxor.u32 %v3590, 2147483648
        %v3658 = vxor.u32 %v3593, 2147483648
        %v3659 = vxor.u32 %v3598, 2147483648
        %v3660 = vxor.u32 %v3601, 2147483648
        %v3661 = vxor.u32 %v3606, 2147483648
        %v3662 = vxor.u32 %v3609, 2147483648
        %v3663 = vxor.u32 %v3614, 2147483648
        %v3664 = vxor.u32 %v3617, 2147483648
        %v3665 = vxor.u32 %v3622, 2147483648
        %v3666 = vxor.u32 %v3625, 2147483648
        %v3667 = vmul.f32 %v3635, 1.442695
        %v3668 = vpow.pop %v3667
        %v3669 = vmul.f32 %v3636, 1.442695
        %v3670 = vpow.pop %v3669
        %v3671 = vmul.f32 %v3637, 1.442695
        %v3672 = vpow.pop %v3671
        %v3673 = vmul.f32 %v3638, 1.442695
        %v3674 = vpow.pop %v3673
        %v3675 = vmul.f32 %v3639, 1.442695
        %v3676 = vpow.pop %v3675
        %v3677 = vmul.f32 %v3640, 1.442695
        %v3678 = vpow.pop %v3677
        %v3679 = vmul.f32 %v3641, 1.442695
        %v3680 = vpow.pop %v3679
        %v3681 = vmul.f32 %v3642, 1.442695
        %v3682 = vpow.pop %v3681
        %v3683 = vmul.f32 %v3643, 1.442695
        %v3684 = vpow.pop %v3683
        %v3685 = vmul.f32 %v3644, 1.442695
        %v3686 = vpow.pop %v3685
        %v3687 = vmul.f32 %v3645, 1.442695
        %v3688 = vpow.pop %v3687
        %v3689 = vmul.f32 %v3646, 1.442695
        %v3690 = vpow.pop %v3689
        %v3691 = vmul.f32 %v3647, 1.442695
        %v3692 = vpow.pop %v3691
        %v3693 = vmul.f32 %v3648, 1.442695
        %v3694 = vpow.pop %v3693
        %v3695 = vmul.f32 %v3649, 1.442695
        %v3696 = vpow.pop %v3695
        %v3697 = vmul.f32 %v3650, 1.442695
        %v3698 = vpow.pop %v3697
        %v3699 = vmul.f32 %v3651, 1.442695
        %v3700 = vpow.pop %v3699
        %v3701 = vmul.f32 %v3652, 1.442695
        %v3702 = vpow.pop %v3701
        %v3703 = vmul.f32 %v3653, 1.442695
        %v3704 = vpow.pop %v3703
        %v3705 = vmul.f32 %v3654, 1.442695
        %v3706 = vpow.pop %v3705
        %v3707 = vmul.f32 %v3655, 1.442695
        %v3708 = vpow.pop %v3707
        %v3709 = vmul.f32 %v3656, 1.442695
        %v3710 = vpow.pop %v3709
        %v3711 = vmul.f32 %v3657, 1.442695
        %v3712 = vpow.pop %v3711
        %v3713 = vmul.f32 %v3658, 1.442695
        %v3714 = vpow.pop %v3713
        %v3715 = vmul.f32 %v3659, 1.442695
        %v3716 = vpow.pop %v3715
        %v3717 = vmul.f32 %v3660, 1.442695
        %v3718 = vpow.pop %v3717
        %v3719 = vmul.f32 %v3661, 1.442695
        %v3720 = vpow.pop %v3719
        %v3721 = vmul.f32 %v3662, 1.442695
        %v3722 = vpow.pop %v3721
        %v3723 = vmul.f32 %v3663, 1.442695
        %v3724 = vpow.pop %v3723
        %v3725 = vmul.f32 %v3664, 1.442695
        %v3726 = vpow.pop %v3725
        %v3727 = vmul.f32 %v3665, 1.442695
        %v3728 = vpow.pop %v3727
        %v3729 = vmul.f32 %v3666, 1.442695
        %v3730 = vpow.pop %v3729
        %v3731 = vadd.f32 %v3668, 1.0
        %v3732 = vadd.f32 %v3670, 1.0
        %v3733 = vadd.f32 %v3672, 1.0
        %v3734 = vadd.f32 %v3674, 1.0
        %v3735 = vadd.f32 %v3676, 1.0
        %v3736 = vadd.f32 %v3678, 1.0
        %v3737 = vadd.f32 %v3680, 1.0
        %v3738 = vadd.f32 %v3682, 1.0
        %v3739 = vadd.f32 %v3684, 1.0
        %v3740 = vadd.f32 %v3686, 1.0
        %v3741 = vadd.f32 %v3688, 1.0
        %v3742 = vadd.f32 %v3690, 1.0
        %v3743 = vadd.f32 %v3692, 1.0
        %v3744 = vadd.f32 %v3694, 1.0
        %v3745 = vadd.f32 %v3696, 1.0
        %v3746 = vadd.f32 %v3698, 1.0
        %v3747 = vadd.f32 %v3700, 1.0
        %v3748 = vadd.f32 %v3702, 1.0
        %v3749 = vadd.f32 %v3704, 1.0
        %v3750 = vadd.f32 %v3706, 1.0
        %v3751 = vadd.f32 %v3708, 1.0
        %v3752 = vadd.f32 %v3710, 1.0
        %v3753 = vadd.f32 %v3712, 1.0
        %v3754 = vadd.f32 %v3714, 1.0
        %v3755 = vadd.f32 %v3716, 1.0
        %v3756 = vadd.f32 %v3718, 1.0
        %v3757 = vadd.f32 %v3720, 1.0
        %v3758 = vadd.f32 %v3722, 1.0
        %v3759 = vadd.f32 %v3724, 1.0
        %v3760 = vadd.f32 %v3726, 1.0
        %v3761 = vadd.f32 %v3728, 1.0
        %v3762 = vadd.f32 %v3730, 1.0
        %v3763 = vrcp.pop %v3731
        %v3764 = vmul.f32 1.0, %v3763
        %v3765 = vrcp.pop %v3732
        %v3766 = vmul.f32 1.0, %v3765
        %v3767 = vrcp.pop %v3733
        %v3768 = vmul.f32 1.0, %v3767
        %v3769 = vrcp.pop %v3734
        %v3770 = vmul.f32 1.0, %v3769
        %v3771 = vrcp.pop %v3735
        %v3772 = vmul.f32 1.0, %v3771
        %v3773 = vrcp.pop %v3736
        %v3774 = vmul.f32 1.0, %v3773
        %v3775 = vrcp.pop %v3737
        %v3776 = vmul.f32 1.0, %v3775
        %v3777 = vrcp.pop %v3738
        %v3778 = vmul.f32 1.0, %v3777
        %v3779 = vrcp.pop %v3739
        %v3780 = vmul.f32 1.0, %v3779
        %v3781 = vrcp.pop %v3740
        %v3782 = vmul.f32 1.0, %v3781
        %v3783 = vrcp.pop %v3741
        %v3784 = vmul.f32 1.0, %v3783
        %v3785 = vrcp.pop %v3742
        %v3786 = vmul.f32 1.0, %v3785
        %v3787 = vrcp.pop %v3743
        %v3788 = vmul.f32 1.0, %v3787
        %v3789 = vrcp.pop %v3744
        %v3790 = vmul.f32 1.0, %v3789
        %v3791 = vrcp.pop %v3745
        %v3792 = vmul.f32 1.0, %v3791
        %v3793 = vrcp.pop %v3746
        %v3794 = vmul.f32 1.0, %v3793
        %v3795 = vrcp.pop %v3747
        %v3796 = vmul.f32 1.0, %v3795
        %v3797 = vrcp.pop %v3748
        %v3798 = vmul.f32 1.0, %v3797
        %v3799 = vrcp.pop %v3749
        %v3800 = vmul.f32 1.0, %v3799
        %v3801 = vrcp.pop %v3750
        %v3802 = vmul.f32 1.0, %v3801
        %v3803 = vrcp.pop %v3751
        %v3804 = vmul.f32 1.0, %v3803
        %v3805 = vrcp.pop %v3752
        %v3806 = vmul.f32 1.0, %v3805
        %v3807 = vrcp.pop %v3753
        %v3808 = vmul.f32 1.0, %v3807
        %v3809 = vrcp.pop %v3754
        %v3810 = vmul.f32 1.0, %v3809
        %v3811 = vrcp.pop %v3755
        %v3812 = vmul.f32 1.0, %v3811
        %v3813 = vrcp.pop %v3756
        %v3814 = vmul.f32 1.0, %v3813
        %v3815 = vrcp.pop %v3757
        %v3816 = vmul.f32 1.0, %v3815
        %v3817 = vrcp.pop %v3758
        %v3818 = vmul.f32 1.0, %v3817
        %v3819 = vrcp.pop %v3759
        %v3820 = vmul.f32 1.0, %v3819
        %v3821 = vrcp.pop %v3760
        %v3822 = vmul.f32 1.0, %v3821
        %v3823 = vrcp.pop %v3761
        %v3824 = vmul.f32 1.0, %v3823
        %v3825 = vrcp.pop %v3762
        %v3826 = vmul.f32 1.0, %v3825
        %v3827 = vsel %vm3634, %v3764, %v3502
        %v3828 = vsel %vm3634, %v3766, %v3505
        %v3829 = vsel %vm3634, %v3768, %v3510
        %v3830 = vsel %vm3634, %v3770, %v3513
        %v3831 = vsel %vm3634, %v3772, %v3518
        %v3832 = vsel %vm3634, %v3774, %v3521
        %v3833 = vsel %vm3634, %v3776, %v3526
        %v3834 = vsel %vm3634, %v3778, %v3529
        %v3835 = vsel %vm3634, %v3780, %v3534
        %v3836 = vsel %vm3634, %v3782, %v3537
        %v3837 = vsel %vm3634, %v3784, %v3542
        %v3838 = vsel %vm3634, %v3786, %v3545
        %v3839 = vsel %vm3634, %v3788, %v3550
        %v3840 = vsel %vm3634, %v3790, %v3553
        %v3841 = vsel %vm3634, %v3792, %v3558
        %v3842 = vsel %vm3634, %v3794, %v3561
        %v3843 = vsel %vm3634, %v3796, %v3566
        %v3844 = vsel %vm3634, %v3798, %v3569
        %v3845 = vsel %vm3634, %v3800, %v3574
        %v3846 = vsel %vm3634, %v3802, %v3577
        %v3847 = vsel %vm3634, %v3804, %v3582
        %v3848 = vsel %vm3634, %v3806, %v3585
        %v3849 = vsel %vm3634, %v3808, %v3590
        %v3850 = vsel %vm3634, %v3810, %v3593
        %v3851 = vsel %vm3634, %v3812, %v3598
        %v3852 = vsel %vm3634, %v3814, %v3601
        %v3853 = vsel %vm3634, %v3816, %v3606
        %v3854 = vsel %vm3634, %v3818, %v3609
        %v3855 = vsel %vm3634, %v3820, %v3614
        %v3856 = vsel %vm3634, %v3822, %v3617
        %v3857 = vsel %vm3634, %v3824, %v3622
        %v3858 = vsel %vm3634, %v3826, %v3625
        %vm3859 = vcmask 7168
        %3860 = vst.msk [vmem:[#allocation4] sm:$0xff] %vm3859, -1e+30
        %3861 = vst.msk [vmem:[#allocation4 + $0x8] sm:$0xff] %vm3859, -1e+30
        %vm3862 = vcmask 1024
        %3863 = vst.msk [vmem:[#allocation4 + $0x10] sm:$0x3] %vm3862, -1e+30
        %3864 = vst.msk [vmem:[#allocation4 + $0x18] sm:$0xff] %vm3859, -1e+30
        %3865 = vst.msk [vmem:[#allocation4 + $0x20] sm:$0xff] %vm3859, -1e+30
        %3866 = vst.msk [vmem:[#allocation4 + $0x28] sm:$0x3] %vm3862, -1e+30
        %3867 = vst.msk [vmem:[#allocation4 + $0x30] sm:$0xff] %vm3859, -1e+30
        %3868 = vst.msk [vmem:[#allocation4 + $0x38] sm:$0xff] %vm3859, -1e+30
        %3869 = vst.msk [vmem:[#allocation4 + $0x40] sm:$0x3] %vm3862, -1e+30
        %3870 = vst.msk [vmem:[#allocation4 + $0x48] sm:$0xff] %vm3859, -1e+30
        %3871 = vst.msk [vmem:[#allocation4 + $0x50] sm:$0xff] %vm3859, -1e+30
        %3872 = vst.msk [vmem:[#allocation4 + $0x58] sm:$0x3] %vm3862, -1e+30
        %3873 = vst.msk [vmem:[#allocation4 + $0x60] sm:$0xff] %vm3859, -1e+30
        %3874 = vst.msk [vmem:[#allocation4 + $0x68] sm:$0xff] %vm3859, -1e+30
        %3875 = vst.msk [vmem:[#allocation4 + $0x70] sm:$0x3] %vm3862, -1e+30
        %3876 = vst.msk [vmem:[#allocation4 + $0x78] sm:$0xff] %vm3859, -1e+30
        %3877 = vst.msk [vmem:[#allocation4 + $0x80] sm:$0xff] %vm3859, -1e+30
        %3878 = vst.msk [vmem:[#allocation4 + $0x88] sm:$0x3] %vm3862, -1e+30
        %3879 = vst.msk [vmem:[#allocation4 + $0x90] sm:$0xff] %vm3859, -1e+30
        %3880 = vst.msk [vmem:[#allocation4 + $0x98] sm:$0xff] %vm3859, -1e+30
        %3881 = vst.msk [vmem:[#allocation4 + $0xa0] sm:$0x3] %vm3862, -1e+30
        %3882 = vst.msk [vmem:[#allocation4 + $0xa8] sm:$0xff] %vm3859, -1e+30
        %3883 = vst.msk [vmem:[#allocation4 + $0xb0] sm:$0xff] %vm3859, -1e+30
        %3884 = vst.msk [vmem:[#allocation4 + $0xb8] sm:$0x3] %vm3862, -1e+30
        %3885 = vst.msk [vmem:[#allocation4 + $0xc0] sm:$0xff] %vm3859, -1e+30
        %3886 = vst.msk [vmem:[#allocation4 + $0xc8] sm:$0xff] %vm3859, -1e+30
        %3887 = vst.msk [vmem:[#allocation4 + $0xd0] sm:$0x3] %vm3862, -1e+30
        %3888 = vst.msk [vmem:[#allocation4 + $0xd8] sm:$0xff] %vm3859, -1e+30
        %3889 = vst.msk [vmem:[#allocation4 + $0xe0] sm:$0xff] %vm3859, -1e+30
        %3890 = vst.msk [vmem:[#allocation4 + $0xe8] sm:$0x3] %vm3862, -1e+30
        %3891 = vst.msk [vmem:[#allocation4 + $0xf0] sm:$0xff] %vm3859, -1e+30
        %3892 = vst.msk [vmem:[#allocation4 + $0xf8] sm:$0xff] %vm3859, -1e+30
        %3893 = vst.msk [vmem:[#allocation4 + $0x100] sm:$0x3] %vm3862, -1e+30
        %3894 = vst.msk [vmem:[#allocation4 + $0x108] sm:$0xff] %vm3859, -1e+30
        %3895 = vst.msk [vmem:[#allocation4 + $0x110] sm:$0xff] %vm3859, -1e+30
        %3896 = vst.msk [vmem:[#allocation4 + $0x118] sm:$0x3] %vm3862, -1e+30
        %3897 = vst.msk [vmem:[#allocation4 + $0x120] sm:$0xff] %vm3859, -1e+30
        %3898 = vst.msk [vmem:[#allocation4 + $0x128] sm:$0xff] %vm3859, -1e+30
        %3899 = vst.msk [vmem:[#allocation4 + $0x130] sm:$0x3] %vm3862, -1e+30
        %3900 = vst.msk [vmem:[#allocation4 + $0x138] sm:$0xff] %vm3859, -1e+30
        %3901 = vst.msk [vmem:[#allocation4 + $0x140] sm:$0xff] %vm3859, -1e+30
        %3902 = vst.msk [vmem:[#allocation4 + $0x148] sm:$0x3] %vm3862, -1e+30
        %3903 = vst.msk [vmem:[#allocation4 + $0x150] sm:$0xff] %vm3859, -1e+30
        %3904 = vst.msk [vmem:[#allocation4 + $0x158] sm:$0xff] %vm3859, -1e+30
        %3905 = vst.msk [vmem:[#allocation4 + $0x160] sm:$0x3] %vm3862, -1e+30
        %3906 = vst.msk [vmem:[#allocation4 + $0x168] sm:$0xff] %vm3859, -1e+30
        %3907 = vst.msk [vmem:[#allocation4 + $0x170] sm:$0xff] %vm3859, -1e+30
        %3908 = vst.msk [vmem:[#allocation4 + $0x178] sm:$0x3] %vm3862, -1e+30
        %3909 = vst.msk [vmem:[#allocation4 + $0x180] sm:$0xff] %vm3859, -1e+30
        %3910 = vst.msk [vmem:[#allocation4 + $0x188] sm:$0xff] %vm3859, -1e+30
        %3911 = vst.msk [vmem:[#allocation4 + $0x190] sm:$0x3] %vm3862, -1e+30
        %3912 = vst.msk [vmem:[#allocation4 + $0x198] sm:$0xff] %vm3859, -1e+30
        %3913 = vst.msk [vmem:[#allocation4 + $0x1a0] sm:$0xff] %vm3859, -1e+30
        %3914 = vst.msk [vmem:[#allocation4 + $0x1a8] sm:$0x3] %vm3862, -1e+30
        %3947 = vrot.lane.b32.xlu0 %v3827, 127
        %v3948 = vpop.permute.xlu0 %3947
        %3949 = vrot.lane.b32.xlu0 %v3828, 127
        %v3950 = vpop.permute.xlu0 %3949
        %3951 = vrot.lane.b32.xlu0 %v3829, 127
        %v3952 = vpop.permute.xlu0 %3951
        %3953 = vrot.lane.b32.xlu0 %v3830, 127
        %v3954 = vpop.permute.xlu0 %3953
        %3955 = vrot.lane.b32.xlu0 %v3831, 127
        %v3956 = vpop.permute.xlu0 %3955
        %3957 = vrot.lane.b32.xlu0 %v3832, 127
        %v3958 = vpop.permute.xlu0 %3957
        %3959 = vrot.lane.b32.xlu0 %v3833, 127
        %v3960 = vpop.permute.xlu0 %3959
        %3961 = vrot.lane.b32.xlu0 %v3834, 127
        %v3962 = vpop.permute.xlu0 %3961
        %3963 = vrot.lane.b32.xlu0 %v3835, 127
        %v3964 = vpop.permute.xlu0 %3963
        %3965 = vrot.lane.b32.xlu0 %v3836, 127
        %v3966 = vpop.permute.xlu0 %3965
        %3967 = vrot.lane.b32.xlu0 %v3837, 127
        %v3968 = vpop.permute.xlu0 %3967
        %3969 = vrot.lane.b32.xlu0 %v3838, 127
        %v3970 = vpop.permute.xlu0 %3969
        %3971 = vrot.lane.b32.xlu0 %v3839, 127
        %v3972 = vpop.permute.xlu0 %3971
        %3973 = vrot.lane.b32.xlu0 %v3840, 127
        %v3974 = vpop.permute.xlu0 %3973
        %3975 = vrot.lane.b32.xlu0 %v3841, 127
        %v3976 = vpop.permute.xlu0 %3975
        %3977 = vrot.lane.b32.xlu0 %v3842, 127
        %v3978 = vpop.permute.xlu0 %3977
        %3979 = vrot.lane.b32.xlu0 %v3843, 127
        %v3980 = vpop.permute.xlu0 %3979
        %3981 = vrot.lane.b32.xlu0 %v3844, 127
        %v3982 = vpop.permute.xlu0 %3981
        %3983 = vrot.lane.b32.xlu0 %v3845, 127
        %v3984 = vpop.permute.xlu0 %3983
        %3985 = vrot.lane.b32.xlu0 %v3846, 127
        %v3986 = vpop.permute.xlu0 %3985
        %3987 = vrot.lane.b32.xlu0 %v3847, 127
        %v3988 = vpop.permute.xlu0 %3987
        %3989 = vrot.lane.b32.xlu0 %v3848, 127
        %v3990 = vpop.permute.xlu0 %3989
        %3991 = vrot.lane.b32.xlu0 %v3849, 127
        %v3992 = vpop.permute.xlu0 %3991
        %3993 = vrot.lane.b32.xlu0 %v3850, 127
        %v3994 = vpop.permute.xlu0 %3993
        %3995 = vrot.lane.b32.xlu0 %v3851, 127
        %v3996 = vpop.permute.xlu0 %3995
        %3997 = vrot.lane.b32.xlu0 %v3852, 127
        %v3998 = vpop.permute.xlu0 %3997
        %3999 = vrot.lane.b32.xlu0 %v3853, 127
        %v4000 = vpop.permute.xlu0 %3999
        %4001 = vrot.lane.b32.xlu0 %v3854, 127
        %v4002 = vpop.permute.xlu0 %4001
        %4003 = vrot.lane.b32.xlu0 %v3855, 127
        %v4004 = vpop.permute.xlu0 %4003
        %4005 = vrot.lane.b32.xlu0 %v3856, 127
        %v4006 = vpop.permute.xlu0 %4005
        %4007 = vrot.lane.b32.xlu0 %v3857, 127
        %v4008 = vpop.permute.xlu0 %4007
        %4009 = vrot.lane.b32.xlu0 %v3858, 127
        %v4010 = vpop.permute.xlu0 %4009
        %s4043 = scalar_lea.vmem [#allocation4], 24
        %4044 = vst.msk [vmem:[%s4043 + $0x1] sm:$0xff] %vm3859, %v3948
        %4045 = vst.msk [vmem:[%s4043 + $0x9] sm:$0xff] %vm3859, %v3950
        %4046 = vst.msk [vmem:[%s4043 + $0x19] sm:$0xff] %vm3859, %v3952
        %4047 = vst.msk [vmem:[%s4043 + $0x21] sm:$0xff] %vm3859, %v3954
        %4048 = vst.msk [vmem:[%s4043 + $0x31] sm:$0xff] %vm3859, %v3956
        %4049 = vst.msk [vmem:[%s4043 + $0x39] sm:$0xff] %vm3859, %v3958
        %4050 = vst.msk [vmem:[%s4043 + $0x49] sm:$0xff] %vm3859, %v3960
        %4051 = vst.msk [vmem:[%s4043 + $0x51] sm:$0xff] %vm3859, %v3962
        %4052 = vst.msk [vmem:[%s4043 + $0x61] sm:$0xff] %vm3859, %v3964
        %4053 = vst.msk [vmem:[%s4043 + $0x69] sm:$0xff] %vm3859, %v3966
        %4054 = vst.msk [vmem:[%s4043 + $0x79] sm:$0xff] %vm3859, %v3968
        %4055 = vst.msk [vmem:[%s4043 + $0x81] sm:$0xff] %vm3859, %v3970
        %4056 = vst.msk [vmem:[%s4043 + $0x91] sm:$0xff] %vm3859, %v3972
        %4057 = vst.msk [vmem:[%s4043 + $0x99] sm:$0xff] %vm3859, %v3974
        %4058 = vst.msk [vmem:[%s4043 + $0xa9] sm:$0xff] %vm3859, %v3976
        %4059 = vst.msk [vmem:[%s4043 + $0xb1] sm:$0xff] %vm3859, %v3978
        %4060 = vst.msk [vmem:[%s4043 + $0xc1] sm:$0xff] %vm3859, %v3980
        %4061 = vst.msk [vmem:[%s4043 + $0xc9] sm:$0xff] %vm3859, %v3982
        %4062 = vst.msk [vmem:[%s4043 + $0xd9] sm:$0xff] %vm3859, %v3984
        %4063 = vst.msk [vmem:[%s4043 + $0xe1] sm:$0xff] %vm3859, %v3986
        %4064 = vst.msk [vmem:[%s4043 + $0xf1] sm:$0xff] %vm3859, %v3988
        %4065 = vst.msk [vmem:[%s4043 + $0xf9] sm:$0xff] %vm3859, %v3990
        %4066 = vst.msk [vmem:[%s4043 + $0x109] sm:$0xff] %vm3859, %v3992
        %4067 = vst.msk [vmem:[%s4043 + $0x111] sm:$0xff] %vm3859, %v3994
        %4068 = vst.msk [vmem:[%s4043 + $0x121] sm:$0xff] %vm3859, %v3996
        %4069 = vst.msk [vmem:[%s4043 + $0x129] sm:$0xff] %vm3859, %v3998
        %4070 = vst.msk [vmem:[%s4043 + $0x139] sm:$0xff] %vm3859, %v4000
        %4071 = vst.msk [vmem:[%s4043 + $0x141] sm:$0xff] %vm3859, %v4002
        %4072 = vst.msk [vmem:[%s4043 + $0x151] sm:$0xff] %vm3859, %v4004
        %4073 = vst.msk [vmem:[%s4043 + $0x159] sm:$0xff] %vm3859, %v4006
        %4074 = vst.msk [vmem:[%s4043 + $0x169] sm:$0xff] %vm3859, %v4008
        %4075 = vst.msk [vmem:[%s4043 + $0x171] sm:$0xff] %vm3859, %v4010
        %v4076 = vld [vmem:[#allocation4] sm:$0xff]
        %v4077 = vld [vmem:[#allocation4 + $0x8] sm:$0xff]
        %v4078 = vld [vmem:[#allocation4 + $0x10] sm:$0x3]
        %v4079 = vld [vmem:[#allocation4 + $0x18] sm:$0xff]
        %v4080 = vld [vmem:[#allocation4 + $0x20] sm:$0xff]
        %v4081 = vld [vmem:[#allocation4 + $0x28] sm:$0x3]
        %v4082 = vld [vmem:[#allocation4 + $0x30] sm:$0xff]
        %v4083 = vld [vmem:[#allocation4 + $0x38] sm:$0xff]
        %v4084 = vld [vmem:[#allocation4 + $0x40] sm:$0x3]
        %v4085 = vld [vmem:[#allocation4 + $0x48] sm:$0xff]
        %v4086 = vld [vmem:[#allocation4 + $0x50] sm:$0xff]
        %v4087 = vld [vmem:[#allocation4 + $0x58] sm:$0x3]
        %v4088 = vld [vmem:[#allocation4 + $0x60] sm:$0xff]
        %v4089 = vld [vmem:[#allocation4 + $0x68] sm:$0xff]
        %v4090 = vld [vmem:[#allocation4 + $0x70] sm:$0x3]
        %v4091 = vld [vmem:[#allocation4 + $0x78] sm:$0xff]
        %v4092 = vld [vmem:[#allocation4 + $0x80] sm:$0xff]
        %v4093 = vld [vmem:[#allocation4 + $0x88] sm:$0x3]
        %v4094 = vld [vmem:[#allocation4 + $0x90] sm:$0xff]
        %v4095 = vld [vmem:[#allocation4 + $0x98] sm:$0xff]
        %v4096 = vld [vmem:[#allocation4 + $0xa0] sm:$0x3]
        %v4097 = vld [vmem:[#allocation4 + $0xa8] sm:$0xff]
        %v4098 = vld [vmem:[#allocation4 + $0xb0] sm:$0xff]
        %v4099 = vld [vmem:[#allocation4 + $0xb8] sm:$0x3]
        %v4100 = vld [vmem:[#allocation4 + $0xc0] sm:$0xff]
        %v4101 = vld [vmem:[#allocation4 + $0xc8] sm:$0xff]
        %v4102 = vld [vmem:[#allocation4 + $0xd0] sm:$0x3]
        %v4103 = vld [vmem:[#allocation4 + $0xd8] sm:$0xff]
        %v4104 = vld [vmem:[#allocation4 + $0xe0] sm:$0xff]
        %v4105 = vld [vmem:[#allocation4 + $0xe8] sm:$0x3]
        %v4106 = vld [vmem:[#allocation4 + $0xf0] sm:$0xff]
        %v4107 = vld [vmem:[#allocation4 + $0xf8] sm:$0xff]
        %v4108 = vld [vmem:[#allocation4 + $0x100] sm:$0x3]
        %v4109 = vld [vmem:[#allocation4 + $0x108] sm:$0xff]
        %v4110 = vld [vmem:[#allocation4 + $0x110] sm:$0xff]
        %v4111 = vld [vmem:[#allocation4 + $0x118] sm:$0x3]
        %v4112 = vld [vmem:[#allocation4 + $0x120] sm:$0xff]
        %v4113 = vld [vmem:[#allocation4 + $0x128] sm:$0xff]
        %v4114 = vld [vmem:[#allocation4 + $0x130] sm:$0x3]
        %v4115 = vld [vmem:[#allocation4 + $0x138] sm:$0xff]
        %v4116 = vld [vmem:[#allocation4 + $0x140] sm:$0xff]
        %v4117 = vld [vmem:[#allocation4 + $0x148] sm:$0x3]
        %v4118 = vld [vmem:[#allocation4 + $0x150] sm:$0xff]
        %v4119 = vld [vmem:[#allocation4 + $0x158] sm:$0xff]
        %v4120 = vld [vmem:[#allocation4 + $0x160] sm:$0x3]
        %v4121 = vld [vmem:[#allocation4 + $0x168] sm:$0xff]
        %v4122 = vld [vmem:[#allocation4 + $0x170] sm:$0xff]
        %v4123 = vld [vmem:[#allocation4 + $0x178] sm:$0x3]
        %v4124 = vld [vmem:[#allocation4 + $0x180] sm:$0xff]
        %v4125 = vld [vmem:[#allocation4 + $0x188] sm:$0xff]
        %v4126 = vld [vmem:[#allocation4 + $0x190] sm:$0x3]
        %v4127 = vld [vmem:[#allocation4 + $0x198] sm:$0xff]
        %v4128 = vld [vmem:[#allocation4 + $0x1a0] sm:$0xff]
        %v4129 = vld [vmem:[#allocation4 + $0x1a8] sm:$0x3]
        %vm4162 = vcmask 1040384
        %v4163 = vrot.slane %v4076, 7
        %v4164 = vrot.slane %v4077, 7
        %v4165 = vsel %vm4162, %v4163, %v4164
        %v4166 = vrot.slane %v4079, 7
        %v4167 = vrot.slane %v4080, 7
        %v4168 = vsel %vm4162, %v4166, %v4167
        %v4169 = vrot.slane %v4082, 7
        %v4170 = vrot.slane %v4083, 7
        %v4171 = vsel %vm4162, %v4169, %v4170
        %v4172 = vrot.slane %v4085, 7
        %v4173 = vrot.slane %v4086, 7
        %v4174 = vsel %vm4162, %v4172, %v4173
        %v4175 = vrot.slane %v4088, 7
        %v4176 = vrot.slane %v4089, 7
        %v4177 = vsel %vm4162, %v4175, %v4176
        %v4178 = vrot.slane %v4091, 7
        %v4179 = vrot.slane %v4092, 7
        %v4180 = vsel %vm4162, %v4178, %v4179
        %v4181 = vrot.slane %v4094, 7
        %v4182 = vrot.slane %v4095, 7
        %v4183 = vsel %vm4162, %v4181, %v4182
        %v4184 = vrot.slane %v4097, 7
        %v4185 = vrot.slane %v4098, 7
        %v4186 = vsel %vm4162, %v4184, %v4185
        %v4187 = vrot.slane %v4100, 7
        %v4188 = vrot.slane %v4101, 7
        %v4189 = vsel %vm4162, %v4187, %v4188
        %v4190 = vrot.slane %v4103, 7
        %v4191 = vrot.slane %v4104, 7
        %v4192 = vsel %vm4162, %v4190, %v4191
        %v4193 = vrot.slane %v4106, 7
        %v4194 = vrot.slane %v4107, 7
        %v4195 = vsel %vm4162, %v4193, %v4194
        %v4196 = vrot.slane %v4109, 7
        %v4197 = vrot.slane %v4110, 7
        %v4198 = vsel %vm4162, %v4196, %v4197
        %v4199 = vrot.slane %v4112, 7
        %v4200 = vrot.slane %v4113, 7
        %v4201 = vsel %vm4162, %v4199, %v4200
        %v4202 = vrot.slane %v4115, 7
        %v4203 = vrot.slane %v4116, 7
        %v4204 = vsel %vm4162, %v4202, %v4203
        %v4205 = vrot.slane %v4118, 7
        %v4206 = vrot.slane %v4119, 7
        %v4207 = vsel %vm4162, %v4205, %v4206
        %v4208 = vrot.slane %v4121, 7
        %v4209 = vrot.slane %v4122, 7
        %v4210 = vsel %vm4162, %v4208, %v4209
        %v4259 = vmax.f32 %v4079, %v4163
        %v4260 = vmax.f32 %v4080, %v4165
        %v4261 = vmax.f32 %v4081, %v4164
        %v4262 = vmax.f32 %v4082, %v4166
        %v4263 = vmax.f32 %v4083, %v4168
        %v4264 = vmax.f32 %v4084, %v4167
        %v4265 = vmax.f32 %v4085, %v4169
        %v4266 = vmax.f32 %v4086, %v4171
        %v4267 = vmax.f32 %v4087, %v4170
        %v4268 = vmax.f32 %v4088, %v4172
        %v4269 = vmax.f32 %v4089, %v4174
        %v4270 = vmax.f32 %v4090, %v4173
        %v4271 = vmax.f32 %v4091, %v4175
        %v4272 = vmax.f32 %v4092, %v4177
        %v4273 = vmax.f32 %v4093, %v4176
        %v4274 = vmax.f32 %v4094, %v4178
        %v4275 = vmax.f32 %v4095, %v4180
        %v4276 = vmax.f32 %v4096, %v4179
        %v4277 = vmax.f32 %v4097, %v4181
        %v4278 = vmax.f32 %v4098, %v4183
        %v4279 = vmax.f32 %v4099, %v4182
        %v4280 = vmax.f32 %v4100, %v4184
        %v4281 = vmax.f32 %v4101, %v4186
        %v4282 = vmax.f32 %v4102, %v4185
        %v4283 = vmax.f32 %v4103, %v4187
        %v4284 = vmax.f32 %v4104, %v4189
        %v4285 = vmax.f32 %v4105, %v4188
        %v4286 = vmax.f32 %v4106, %v4190
        %v4287 = vmax.f32 %v4107, %v4192
        %v4288 = vmax.f32 %v4108, %v4191
        %v4289 = vmax.f32 %v4109, %v4193
        %v4290 = vmax.f32 %v4110, %v4195
        %v4291 = vmax.f32 %v4111, %v4194
        %v4292 = vmax.f32 %v4112, %v4196
        %v4293 = vmax.f32 %v4113, %v4198
        %v4294 = vmax.f32 %v4114, %v4197
        %v4295 = vmax.f32 %v4115, %v4199
        %v4296 = vmax.f32 %v4116, %v4201
        %v4297 = vmax.f32 %v4117, %v4200
        %v4298 = vmax.f32 %v4118, %v4202
        %v4299 = vmax.f32 %v4119, %v4204
        %v4300 = vmax.f32 %v4120, %v4203
        %v4301 = vmax.f32 %v4121, %v4205
        %v4302 = vmax.f32 %v4122, %v4207
        %v4303 = vmax.f32 %v4123, %v4206
        %v4304 = vmax.f32 %v4124, %v4208
        %v4305 = vmax.f32 %v4125, %v4210
        %v4306 = vmax.f32 %v4126, %v4209
        %v4307 = vmax.f32 %v4259, %v4076
        %v4308 = vmax.f32 %v4260, %v4077
        %v4309 = vmax.f32 %v4261, %v4078
        %v4310 = vmax.f32 %v4262, %v4079
        %v4311 = vmax.f32 %v4263, %v4080
        %v4312 = vmax.f32 %v4264, %v4081
        %v4313 = vmax.f32 %v4265, %v4082
        %v4314 = vmax.f32 %v4266, %v4083
        %v4315 = vmax.f32 %v4267, %v4084
        %v4316 = vmax.f32 %v4268, %v4085
        %v4317 = vmax.f32 %v4269, %v4086
        %v4318 = vmax.f32 %v4270, %v4087
        %v4319 = vmax.f32 %v4271, %v4088
        %v4320 = vmax.f32 %v4272, %v4089
        %v4321 = vmax.f32 %v4273, %v4090
        %v4322 = vmax.f32 %v4274, %v4091
        %v4323 = vmax.f32 %v4275, %v4092
        %v4324 = vmax.f32 %v4276, %v4093
        %v4325 = vmax.f32 %v4277, %v4094
        %v4326 = vmax.f32 %v4278, %v4095
        %v4327 = vmax.f32 %v4279, %v4096
        %v4328 = vmax.f32 %v4280, %v4097
        %v4329 = vmax.f32 %v4281, %v4098
        %v4330 = vmax.f32 %v4282, %v4099
        %v4331 = vmax.f32 %v4283, %v4100
        %v4332 = vmax.f32 %v4284, %v4101
        %v4333 = vmax.f32 %v4285, %v4102
        %v4334 = vmax.f32 %v4286, %v4103
        %v4335 = vmax.f32 %v4287, %v4104
        %v4336 = vmax.f32 %v4288, %v4105
        %v4337 = vmax.f32 %v4289, %v4106
        %v4338 = vmax.f32 %v4290, %v4107
        %v4339 = vmax.f32 %v4291, %v4108
        %v4340 = vmax.f32 %v4292, %v4109
        %v4341 = vmax.f32 %v4293, %v4110
        %v4342 = vmax.f32 %v4294, %v4111
        %v4343 = vmax.f32 %v4295, %v4112
        %v4344 = vmax.f32 %v4296, %v4113
        %v4345 = vmax.f32 %v4297, %v4114
        %v4346 = vmax.f32 %v4298, %v4115
        %v4347 = vmax.f32 %v4299, %v4116
        %v4348 = vmax.f32 %v4300, %v4117
        %v4349 = vmax.f32 %v4301, %v4118
        %v4350 = vmax.f32 %v4302, %v4119
        %v4351 = vmax.f32 %v4303, %v4120
        %v4352 = vmax.f32 %v4304, %v4121
        %v4353 = vmax.f32 %v4305, %v4122
        %v4354 = vmax.f32 %v4306, %v4123
        %v4371 = vrot.slane %v4076, 1
        %v4372 = vrot.slane %v4077, 1
        %v4373 = vsel %vm541, %v4371, %v4372
        %v4374 = vrot.slane %v4078, 1
        %v4375 = vsel %vm541, %v4372, %v4374
        %v4376 = vrot.slane %v4079, 1
        %v4377 = vrot.slane %v4080, 1
        %v4378 = vsel %vm541, %v4376, %v4377
        %v4379 = vrot.slane %v4081, 1
        %v4380 = vsel %vm541, %v4377, %v4379
        %v4381 = vrot.slane %v4082, 1
        %v4382 = vrot.slane %v4083, 1
        %v4383 = vsel %vm541, %v4381, %v4382
        %v4384 = vrot.slane %v4084, 1
        %v4385 = vsel %vm541, %v4382, %v4384
        %v4386 = vrot.slane %v4085, 1
        %v4387 = vrot.slane %v4086, 1
        %v4388 = vsel %vm541, %v4386, %v4387
        %v4389 = vrot.slane %v4087, 1
        %v4390 = vsel %vm541, %v4387, %v4389
        %v4391 = vrot.slane %v4088, 1
        %v4392 = vrot.slane %v4089, 1
        %v4393 = vsel %vm541, %v4391, %v4392
        %v4394 = vrot.slane %v4090, 1
        %v4395 = vsel %vm541, %v4392, %v4394
        %v4396 = vrot.slane %v4091, 1
        %v4397 = vrot.slane %v4092, 1
        %v4398 = vsel %vm541, %v4396, %v4397
        %v4399 = vrot.slane %v4093, 1
        %v4400 = vsel %vm541, %v4397, %v4399
        %v4401 = vrot.slane %v4094, 1
        %v4402 = vrot.slane %v4095, 1
        %v4403 = vsel %vm541, %v4401, %v4402
        %v4404 = vrot.slane %v4096, 1
        %v4405 = vsel %vm541, %v4402, %v4404
        %v4406 = vrot.slane %v4097, 1
        %v4407 = vrot.slane %v4098, 1
        %v4408 = vsel %vm541, %v4406, %v4407
        %v4409 = vrot.slane %v4099, 1
        %v4410 = vsel %vm541, %v4407, %v4409
        %v4411 = vrot.slane %v4100, 1
        %v4412 = vrot.slane %v4101, 1
        %v4413 = vsel %vm541, %v4411, %v4412
        %v4414 = vrot.slane %v4102, 1
        %v4415 = vsel %vm541, %v4412, %v4414
        %v4416 = vrot.slane %v4103, 1
        %v4417 = vrot.slane %v4104, 1
        %v4418 = vsel %vm541, %v4416, %v4417
        %v4419 = vrot.slane %v4105, 1
        %v4420 = vsel %vm541, %v4417, %v4419
        %v4421 = vrot.slane %v4106, 1
        %v4422 = vrot.slane %v4107, 1
        %v4423 = vsel %vm541, %v4421, %v4422
        %v4424 = vrot.slane %v4108, 1
        %v4425 = vsel %vm541, %v4422, %v4424
        %v4426 = vrot.slane %v4109, 1
        %v4427 = vrot.slane %v4110, 1
        %v4428 = vsel %vm541, %v4426, %v4427
        %v4429 = vrot.slane %v4111, 1
        %v4430 = vsel %vm541, %v4427, %v4429
        %v4431 = vrot.slane %v4112, 1
        %v4432 = vrot.slane %v4113, 1
        %v4433 = vsel %vm541, %v4431, %v4432
        %v4434 = vrot.slane %v4114, 1
        %v4435 = vsel %vm541, %v4432, %v4434
        %v4436 = vrot.slane %v4115, 1
        %v4437 = vrot.slane %v4116, 1
        %v4438 = vsel %vm541, %v4436, %v4437
        %v4439 = vrot.slane %v4117, 1
        %v4440 = vsel %vm541, %v4437, %v4439
        %v4441 = vrot.slane %v4118, 1
        %v4442 = vrot.slane %v4119, 1
        %v4443 = vsel %vm541, %v4441, %v4442
        %v4444 = vrot.slane %v4120, 1
        %v4445 = vsel %vm541, %v4442, %v4444
        %v4446 = vrot.slane %v4121, 1
        %v4447 = vrot.slane %v4122, 1
        %v4448 = vsel %vm541, %v4446, %v4447
        %v4449 = vrot.slane %v4123, 1
        %v4450 = vsel %vm541, %v4447, %v4449
        %v4499 = vmax.f32 %v4307, %v4373
        %v4500 = vmax.f32 %v4308, %v4375
        %v4501 = vmax.f32 %v4309, %v4374
        %v4502 = vmax.f32 %v4310, %v4378
        %v4503 = vmax.f32 %v4311, %v4380
        %v4504 = vmax.f32 %v4312, %v4379
        %v4505 = vmax.f32 %v4313, %v4383
        %v4506 = vmax.f32 %v4314, %v4385
        %v4507 = vmax.f32 %v4315, %v4384
        %v4508 = vmax.f32 %v4316, %v4388
        %v4509 = vmax.f32 %v4317, %v4390
        %v4510 = vmax.f32 %v4318, %v4389
        %v4511 = vmax.f32 %v4319, %v4393
        %v4512 = vmax.f32 %v4320, %v4395
        %v4513 = vmax.f32 %v4321, %v4394
        %v4514 = vmax.f32 %v4322, %v4398
        %v4515 = vmax.f32 %v4323, %v4400
        %v4516 = vmax.f32 %v4324, %v4399
        %v4517 = vmax.f32 %v4325, %v4403
        %v4518 = vmax.f32 %v4326, %v4405
        %v4519 = vmax.f32 %v4327, %v4404
        %v4520 = vmax.f32 %v4328, %v4408
        %v4521 = vmax.f32 %v4329, %v4410
        %v4522 = vmax.f32 %v4330, %v4409
        %v4523 = vmax.f32 %v4331, %v4413
        %v4524 = vmax.f32 %v4332, %v4415
        %v4525 = vmax.f32 %v4333, %v4414
        %v4526 = vmax.f32 %v4334, %v4418
        %v4527 = vmax.f32 %v4335, %v4420
        %v4528 = vmax.f32 %v4336, %v4419
        %v4529 = vmax.f32 %v4337, %v4423
        %v4530 = vmax.f32 %v4338, %v4425
        %v4531 = vmax.f32 %v4339, %v4424
        %v4532 = vmax.f32 %v4340, %v4428
        %v4533 = vmax.f32 %v4341, %v4430
        %v4534 = vmax.f32 %v4342, %v4429
        %v4535 = vmax.f32 %v4343, %v4433
        %v4536 = vmax.f32 %v4344, %v4435
        %v4537 = vmax.f32 %v4345, %v4434
        %v4538 = vmax.f32 %v4346, %v4438
        %v4539 = vmax.f32 %v4347, %v4440
        %v4540 = vmax.f32 %v4348, %v4439
        %v4541 = vmax.f32 %v4349, %v4443
        %v4542 = vmax.f32 %v4350, %v4445
        %v4543 = vmax.f32 %v4351, %v4444
        %v4544 = vmax.f32 %v4352, %v4448
        %v4545 = vmax.f32 %v4353, %v4450
        %v4546 = vmax.f32 %v4354, %v4449
        %v4549 = vrot.slane %v4124, 7
        %v4550 = vrot.slane %v4125, 7
        %v4551 = vsel %vm4162, %v4549, %v4550
        %v4555 = vmax.f32 %v4499, %v4166
        %v4556 = vmax.f32 %v4500, %v4168
        %v4557 = vmax.f32 %v4501, %v4167
        %v4558 = vmax.f32 %v4502, %v4169
        %v4559 = vmax.f32 %v4503, %v4171
        %v4560 = vmax.f32 %v4504, %v4170
        %v4561 = vmax.f32 %v4505, %v4172
        %v4562 = vmax.f32 %v4506, %v4174
        %v4563 = vmax.f32 %v4507, %v4173
        %v4564 = vmax.f32 %v4508, %v4175
        %v4565 = vmax.f32 %v4509, %v4177
        %v4566 = vmax.f32 %v4510, %v4176
        %v4567 = vmax.f32 %v4511, %v4178
        %v4568 = vmax.f32 %v4512, %v4180
        %v4569 = vmax.f32 %v4513, %v4179
        %v4570 = vmax.f32 %v4514, %v4181
        %v4571 = vmax.f32 %v4515, %v4183
        %v4572 = vmax.f32 %v4516, %v4182
        %v4573 = vmax.f32 %v4517, %v4184
        %v4574 = vmax.f32 %v4518, %v4186
        %v4575 = vmax.f32 %v4519, %v4185
        %v4576 = vmax.f32 %v4520, %v4187
        %v4577 = vmax.f32 %v4521, %v4189
        %v4578 = vmax.f32 %v4522, %v4188
        %v4579 = vmax.f32 %v4523, %v4190
        %v4580 = vmax.f32 %v4524, %v4192
        %v4581 = vmax.f32 %v4525, %v4191
        %v4582 = vmax.f32 %v4526, %v4193
        %v4583 = vmax.f32 %v4527, %v4195
        %v4584 = vmax.f32 %v4528, %v4194
        %v4585 = vmax.f32 %v4529, %v4196
        %v4586 = vmax.f32 %v4530, %v4198
        %v4587 = vmax.f32 %v4531, %v4197
        %v4588 = vmax.f32 %v4532, %v4199
        %v4589 = vmax.f32 %v4533, %v4201
        %v4590 = vmax.f32 %v4534, %v4200
        %v4591 = vmax.f32 %v4535, %v4202
        %v4592 = vmax.f32 %v4536, %v4204
        %v4593 = vmax.f32 %v4537, %v4203
        %v4594 = vmax.f32 %v4538, %v4205
        %v4595 = vmax.f32 %v4539, %v4207
        %v4596 = vmax.f32 %v4540, %v4206
        %v4597 = vmax.f32 %v4541, %v4208
        %v4598 = vmax.f32 %v4542, %v4210
        %v4599 = vmax.f32 %v4543, %v4209
        %v4600 = vmax.f32 %v4544, %v4549
        %v4601 = vmax.f32 %v4545, %v4551
        %v4602 = vmax.f32 %v4546, %v4550
        %v4604 = vrot.slane %v4124, 1
        %v4605 = vrot.slane %v4125, 1
        %v4606 = vsel %vm541, %v4604, %v4605
        %v4607 = vrot.slane %v4126, 1
        %v4608 = vsel %vm541, %v4605, %v4607
        %v4612 = vmax.f32 %v4555, %v4378
        %v4613 = vmax.f32 %v4556, %v4380
        %v4614 = vmax.f32 %v4557, %v4379
        %v4615 = vmax.f32 %v4558, %v4383
        %v4616 = vmax.f32 %v4559, %v4385
        %v4617 = vmax.f32 %v4560, %v4384
        %v4618 = vmax.f32 %v4561, %v4388
        %v4619 = vmax.f32 %v4562, %v4390
        %v4620 = vmax.f32 %v4563, %v4389
        %v4621 = vmax.f32 %v4564, %v4393
        %v4622 = vmax.f32 %v4565, %v4395
        %v4623 = vmax.f32 %v4566, %v4394
        %v4624 = vmax.f32 %v4567, %v4398
        %v4625 = vmax.f32 %v4568, %v4400
        %v4626 = vmax.f32 %v4569, %v4399
        %v4627 = vmax.f32 %v4570, %v4403
        %v4628 = vmax.f32 %v4571, %v4405
        %v4629 = vmax.f32 %v4572, %v4404
        %v4630 = vmax.f32 %v4573, %v4408
        %v4631 = vmax.f32 %v4574, %v4410
        %v4632 = vmax.f32 %v4575, %v4409
        %v4633 = vmax.f32 %v4576, %v4413
        %v4634 = vmax.f32 %v4577, %v4415
        %v4635 = vmax.f32 %v4578, %v4414
        %v4636 = vmax.f32 %v4579, %v4418
        %v4637 = vmax.f32 %v4580, %v4420
        %v4638 = vmax.f32 %v4581, %v4419
        %v4639 = vmax.f32 %v4582, %v4423
        %v4640 = vmax.f32 %v4583, %v4425
        %v4641 = vmax.f32 %v4584, %v4424
        %v4642 = vmax.f32 %v4585, %v4428
        %v4643 = vmax.f32 %v4586, %v4430
        %v4644 = vmax.f32 %v4587, %v4429
        %v4645 = vmax.f32 %v4588, %v4433
        %v4646 = vmax.f32 %v4589, %v4435
        %v4647 = vmax.f32 %v4590, %v4434
        %v4648 = vmax.f32 %v4591, %v4438
        %v4649 = vmax.f32 %v4592, %v4440
        %v4650 = vmax.f32 %v4593, %v4439
        %v4651 = vmax.f32 %v4594, %v4443
        %v4652 = vmax.f32 %v4595, %v4445
        %v4653 = vmax.f32 %v4596, %v4444
        %v4654 = vmax.f32 %v4597, %v4448
        %v4655 = vmax.f32 %v4598, %v4450
        %v4656 = vmax.f32 %v4599, %v4449
        %v4657 = vmax.f32 %v4600, %v4606
        %v4658 = vmax.f32 %v4601, %v4608
        %v4659 = vmax.f32 %v4602, %v4607
        %v4662 = vrot.slane %v4127, 7
        %v4663 = vrot.slane %v4128, 7
        %v4664 = vsel %vm4162, %v4662, %v4663
        %v4668 = vmax.f32 %v4612, %v4169
        %v4669 = vmax.f32 %v4613, %v4171
        %v4670 = vmax.f32 %v4614, %v4170
        %v4671 = vmax.f32 %v4615, %v4172
        %v4672 = vmax.f32 %v4616, %v4174
        %v4673 = vmax.f32 %v4617, %v4173
        %v4674 = vmax.f32 %v4618, %v4175
        %v4675 = vmax.f32 %v4619, %v4177
        %v4676 = vmax.f32 %v4620, %v4176
        %v4677 = vmax.f32 %v4621, %v4178
        %v4678 = vmax.f32 %v4622, %v4180
        %v4679 = vmax.f32 %v4623, %v4179
        %v4680 = vmax.f32 %v4624, %v4181
        %v4681 = vmax.f32 %v4625, %v4183
        %v4682 = vmax.f32 %v4626, %v4182
        %v4683 = vmax.f32 %v4627, %v4184
        %v4684 = vmax.f32 %v4628, %v4186
        %v4685 = vmax.f32 %v4629, %v4185
        %v4686 = vmax.f32 %v4630, %v4187
        %v4687 = vmax.f32 %v4631, %v4189
        %v4688 = vmax.f32 %v4632, %v4188
        %v4689 = vmax.f32 %v4633, %v4190
        %v4690 = vmax.f32 %v4634, %v4192
        %v4691 = vmax.f32 %v4635, %v4191
        %v4692 = vmax.f32 %v4636, %v4193
        %v4693 = vmax.f32 %v4637, %v4195
        %v4694 = vmax.f32 %v4638, %v4194
        %v4695 = vmax.f32 %v4639, %v4196
        %v4696 = vmax.f32 %v4640, %v4198
        %v4697 = vmax.f32 %v4641, %v4197
        %v4698 = vmax.f32 %v4642, %v4199
        %v4699 = vmax.f32 %v4643, %v4201
        %v4700 = vmax.f32 %v4644, %v4200
        %v4701 = vmax.f32 %v4645, %v4202
        %v4702 = vmax.f32 %v4646, %v4204
        %v4703 = vmax.f32 %v4647, %v4203
        %v4704 = vmax.f32 %v4648, %v4205
        %v4705 = vmax.f32 %v4649, %v4207
        %v4706 = vmax.f32 %v4650, %v4206
        %v4707 = vmax.f32 %v4651, %v4208
        %v4708 = vmax.f32 %v4652, %v4210
        %v4709 = vmax.f32 %v4653, %v4209
        %v4710 = vmax.f32 %v4654, %v4549
        %v4711 = vmax.f32 %v4655, %v4551
        %v4712 = vmax.f32 %v4656, %v4550
        %v4713 = vmax.f32 %v4657, %v4662
        %v4714 = vmax.f32 %v4658, %v4664
        %v4715 = vmax.f32 %v4659, %v4663
        %v4716 = vmax.f32 %v4668, %v4082
        %v4717 = vmax.f32 %v4669, %v4083
        %v4718 = vmax.f32 %v4670, %v4084
        %v4719 = vmax.f32 %v4671, %v4085
        %v4720 = vmax.f32 %v4672, %v4086
        %v4721 = vmax.f32 %v4673, %v4087
        %v4722 = vmax.f32 %v4674, %v4088
        %v4723 = vmax.f32 %v4675, %v4089
        %v4724 = vmax.f32 %v4676, %v4090
        %v4725 = vmax.f32 %v4677, %v4091
        %v4726 = vmax.f32 %v4678, %v4092
        %v4727 = vmax.f32 %v4679, %v4093
        %v4728 = vmax.f32 %v4680, %v4094
        %v4729 = vmax.f32 %v4681, %v4095
        %v4730 = vmax.f32 %v4682, %v4096
        %v4731 = vmax.f32 %v4683, %v4097
        %v4732 = vmax.f32 %v4684, %v4098
        %v4733 = vmax.f32 %v4685, %v4099
        %v4734 = vmax.f32 %v4686, %v4100
        %v4735 = vmax.f32 %v4687, %v4101
        %v4736 = vmax.f32 %v4688, %v4102
        %v4737 = vmax.f32 %v4689, %v4103
        %v4738 = vmax.f32 %v4690, %v4104
        %v4739 = vmax.f32 %v4691, %v4105
        %v4740 = vmax.f32 %v4692, %v4106
        %v4741 = vmax.f32 %v4693, %v4107
        %v4742 = vmax.f32 %v4694, %v4108
        %v4743 = vmax.f32 %v4695, %v4109
        %v4744 = vmax.f32 %v4696, %v4110
        %v4745 = vmax.f32 %v4697, %v4111
        %v4746 = vmax.f32 %v4698, %v4112
        %v4747 = vmax.f32 %v4699, %v4113
        %v4748 = vmax.f32 %v4700, %v4114
        %v4749 = vmax.f32 %v4701, %v4115
        %v4750 = vmax.f32 %v4702, %v4116
        %v4751 = vmax.f32 %v4703, %v4117
        %v4752 = vmax.f32 %v4704, %v4118
        %v4753 = vmax.f32 %v4705, %v4119
        %v4754 = vmax.f32 %v4706, %v4120
        %v4755 = vmax.f32 %v4707, %v4121
        %v4756 = vmax.f32 %v4708, %v4122
        %v4757 = vmax.f32 %v4709, %v4123
        %v4758 = vmax.f32 %v4710, %v4124
        %v4759 = vmax.f32 %v4711, %v4125
        %v4760 = vmax.f32 %v4712, %v4126
        %v4761 = vmax.f32 %v4713, %v4127
        %v4762 = vmax.f32 %v4714, %v4128
        %v4763 = vmax.f32 %v4715, %v4129
        %v4765 = vrot.slane %v4127, 1
        %v4766 = vrot.slane %v4128, 1
        %v4767 = vsel %vm541, %v4765, %v4766
        %v4768 = vrot.slane %v4129, 1
        %v4769 = vsel %vm541, %v4766, %v4768
        %v4773 = vmax.f32 %v4716, %v4383
        %v4774 = vmax.f32 %v4717, %v4385
        %v4775 = vmax.f32 %v4718, %v4384
        %v4776 = vmax.f32 %v4719, %v4388
        %v4777 = vmax.f32 %v4720, %v4390
        %v4778 = vmax.f32 %v4721, %v4389
        %v4779 = vmax.f32 %v4722, %v4393
        %v4780 = vmax.f32 %v4723, %v4395
        %v4781 = vmax.f32 %v4724, %v4394
        %v4782 = vmax.f32 %v4725, %v4398
        %v4783 = vmax.f32 %v4726, %v4400
        %v4784 = vmax.f32 %v4727, %v4399
        %v4785 = vmax.f32 %v4728, %v4403
        %v4786 = vmax.f32 %v4729, %v4405
        %v4787 = vmax.f32 %v4730, %v4404
        %v4788 = vmax.f32 %v4731, %v4408
        %v4789 = vmax.f32 %v4732, %v4410
        %v4790 = vmax.f32 %v4733, %v4409
        %v4791 = vmax.f32 %v4734, %v4413
        %v4792 = vmax.f32 %v4735, %v4415
        %v4793 = vmax.f32 %v4736, %v4414
        %v4794 = vmax.f32 %v4737, %v4418
        %v4795 = vmax.f32 %v4738, %v4420
        %v4796 = vmax.f32 %v4739, %v4419
        %v4797 = vmax.f32 %v4740, %v4423
        %v4798 = vmax.f32 %v4741, %v4425
        %v4799 = vmax.f32 %v4742, %v4424
        %v4800 = vmax.f32 %v4743, %v4428
        %v4801 = vmax.f32 %v4744, %v4430
        %v4802 = vmax.f32 %v4745, %v4429
        %v4803 = vmax.f32 %v4746, %v4433
        %v4804 = vmax.f32 %v4747, %v4435
        %v4805 = vmax.f32 %v4748, %v4434
        %v4806 = vmax.f32 %v4749, %v4438
        %v4807 = vmax.f32 %v4750, %v4440
        %v4808 = vmax.f32 %v4751, %v4439
        %v4809 = vmax.f32 %v4752, %v4443
        %v4810 = vmax.f32 %v4753, %v4445
        %v4811 = vmax.f32 %v4754, %v4444
        %v4812 = vmax.f32 %v4755, %v4448
        %v4813 = vmax.f32 %v4756, %v4450
        %v4814 = vmax.f32 %v4757, %v4449
        %v4815 = vmax.f32 %v4758, %v4606
        %v4816 = vmax.f32 %v4759, %v4608
        %v4817 = vmax.f32 %v4760, %v4607
        %v4818 = vmax.f32 %v4761, %v4767
        %v4819 = vmax.f32 %v4762, %v4769
        %v4820 = vmax.f32 %v4763, %v4768
        %vm4821 = vcmp.eq.f32.partialorder %v4079, %v4773
        %vm4822 = vcmp.eq.f32.partialorder %v4080, %v4774
        %vm4823 = vcmp.eq.f32.partialorder %v4081, %v4775
        %vm4824 = vcmp.eq.f32.partialorder %v4082, %v4776
        %vm4825 = vcmp.eq.f32.partialorder %v4083, %v4777
        %vm4826 = vcmp.eq.f32.partialorder %v4084, %v4778
        %vm4827 = vcmp.eq.f32.partialorder %v4085, %v4779
        %vm4828 = vcmp.eq.f32.partialorder %v4086, %v4780
        %vm4829 = vcmp.eq.f32.partialorder %v4087, %v4781
        %vm4830 = vcmp.eq.f32.partialorder %v4088, %v4782
        %vm4831 = vcmp.eq.f32.partialorder %v4089, %v4783
        %vm4832 = vcmp.eq.f32.partialorder %v4090, %v4784
        %vm4833 = vcmp.eq.f32.partialorder %v4091, %v4785
        %vm4834 = vcmp.eq.f32.partialorder %v4092, %v4786
        %vm4835 = vcmp.eq.f32.partialorder %v4093, %v4787
        %vm4836 = vcmp.eq.f32.partialorder %v4094, %v4788
        %vm4837 = vcmp.eq.f32.partialorder %v4095, %v4789
        %vm4838 = vcmp.eq.f32.partialorder %v4096, %v4790
        %vm4839 = vcmp.eq.f32.partialorder %v4097, %v4791
        %vm4840 = vcmp.eq.f32.partialorder %v4098, %v4792
        %vm4841 = vcmp.eq.f32.partialorder %v4099, %v4793
        %vm4842 = vcmp.eq.f32.partialorder %v4100, %v4794
        %vm4843 = vcmp.eq.f32.partialorder %v4101, %v4795
        %vm4844 = vcmp.eq.f32.partialorder %v4102, %v4796
        %vm4845 = vcmp.eq.f32.partialorder %v4103, %v4797
        %vm4846 = vcmp.eq.f32.partialorder %v4104, %v4798
        %vm4847 = vcmp.eq.f32.partialorder %v4105, %v4799
        %vm4848 = vcmp.eq.f32.partialorder %v4106, %v4800
        %vm4849 = vcmp.eq.f32.partialorder %v4107, %v4801
        %vm4850 = vcmp.eq.f32.partialorder %v4108, %v4802
        %vm4851 = vcmp.eq.f32.partialorder %v4109, %v4803
        %vm4852 = vcmp.eq.f32.partialorder %v4110, %v4804
        %vm4853 = vcmp.eq.f32.partialorder %v4111, %v4805
        %vm4854 = vcmp.eq.f32.partialorder %v4112, %v4806
        %vm4855 = vcmp.eq.f32.partialorder %v4113, %v4807
        %vm4856 = vcmp.eq.f32.partialorder %v4114, %v4808
        %vm4857 = vcmp.eq.f32.partialorder %v4115, %v4809
        %vm4858 = vcmp.eq.f32.partialorder %v4116, %v4810
        %vm4859 = vcmp.eq.f32.partialorder %v4117, %v4811
        %vm4860 = vcmp.eq.f32.partialorder %v4118, %v4812
        %vm4861 = vcmp.eq.f32.partialorder %v4119, %v4813
        %vm4862 = vcmp.eq.f32.partialorder %v4120, %v4814
        %vm4863 = vcmp.eq.f32.partialorder %v4121, %v4815
        %vm4864 = vcmp.eq.f32.partialorder %v4122, %v4816
        %vm4865 = vcmp.eq.f32.partialorder %v4123, %v4817
        %vm4866 = vcmp.eq.f32.partialorder %v4124, %v4818
        %vm4867 = vcmp.eq.f32.partialorder %v4125, %v4819
        %vm4868 = vcmp.eq.f32.partialorder %v4126, %v4820
        %v4869 = vsel %vm4821, %v4079, 0.0
        %v4870 = vsel %vm4822, %v4080, 0.0
        %v4871 = vsel %vm4823, %v4081, 0.0
        %v4872 = vsel %vm4824, %v4082, 0.0
        %v4873 = vsel %vm4825, %v4083, 0.0
        %v4874 = vsel %vm4826, %v4084, 0.0
        %v4875 = vsel %vm4827, %v4085, 0.0
        %v4876 = vsel %vm4828, %v4086, 0.0
        %v4877 = vsel %vm4829, %v4087, 0.0
        %v4878 = vsel %vm4830, %v4088, 0.0
        %v4879 = vsel %vm4831, %v4089, 0.0
        %v4880 = vsel %vm4832, %v4090, 0.0
        %v4881 = vsel %vm4833, %v4091, 0.0
        %v4882 = vsel %vm4834, %v4092, 0.0
        %v4883 = vsel %vm4835, %v4093, 0.0
        %v4884 = vsel %vm4836, %v4094, 0.0
        %v4885 = vsel %vm4837, %v4095, 0.0
        %v4886 = vsel %vm4838, %v4096, 0.0
        %v4887 = vsel %vm4839, %v4097, 0.0
        %v4888 = vsel %vm4840, %v4098, 0.0
        %v4889 = vsel %vm4841, %v4099, 0.0
        %v4890 = vsel %vm4842, %v4100, 0.0
        %v4891 = vsel %vm4843, %v4101, 0.0
        %v4892 = vsel %vm4844, %v4102, 0.0
        %v4893 = vsel %vm4845, %v4103, 0.0
        %v4894 = vsel %vm4846, %v4104, 0.0
        %v4895 = vsel %vm4847, %v4105, 0.0
        %v4896 = vsel %vm4848, %v4106, 0.0
        %v4897 = vsel %vm4849, %v4107, 0.0
        %v4898 = vsel %vm4850, %v4108, 0.0
        %v4899 = vsel %vm4851, %v4109, 0.0
        %v4900 = vsel %vm4852, %v4110, 0.0
        %v4901 = vsel %vm4853, %v4111, 0.0
        %v4902 = vsel %vm4854, %v4112, 0.0
        %v4903 = vsel %vm4855, %v4113, 0.0
        %v4904 = vsel %vm4856, %v4114, 0.0
        %v4905 = vsel %vm4857, %v4115, 0.0
        %v4906 = vsel %vm4858, %v4116, 0.0
        %v4907 = vsel %vm4859, %v4117, 0.0
        %v4908 = vsel %vm4860, %v4118, 0.0
        %v4909 = vsel %vm4861, %v4119, 0.0
        %v4910 = vsel %vm4862, %v4120, 0.0
        %v4911 = vsel %vm4863, %v4121, 0.0
        %v4912 = vsel %vm4864, %v4122, 0.0
        %v4913 = vsel %vm4865, %v4123, 0.0
        %v4914 = vsel %vm4866, %v4124, 0.0
        %v4915 = vsel %vm4867, %v4125, 0.0
        %v4916 = vsel %vm4868, %v4126, 0.0
        %v4965 = vrot.slane %v4869, 1
        %v4966 = vrot.slane %v4870, 1
        %v4967 = vsel %vm541, %v4965, %v4966
        %v4968 = vrot.slane %v4871, 1
        %v4969 = vsel %vm541, %v4966, %v4968
        %v4970 = vrot.slane %v4872, 1
        %v4971 = vrot.slane %v4873, 1
        %v4972 = vsel %vm541, %v4970, %v4971
        %v4973 = vrot.slane %v4874, 1
        %v4974 = vsel %vm541, %v4971, %v4973
        %v4975 = vrot.slane %v4875, 1
        %v4976 = vrot.slane %v4876, 1
        %v4977 = vsel %vm541, %v4975, %v4976
        %v4978 = vrot.slane %v4877, 1
        %v4979 = vsel %vm541, %v4976, %v4978
        %v4980 = vrot.slane %v4878, 1
        %v4981 = vrot.slane %v4879, 1
        %v4982 = vsel %vm541, %v4980, %v4981
        %v4983 = vrot.slane %v4880, 1
        %v4984 = vsel %vm541, %v4981, %v4983
        %v4985 = vrot.slane %v4881, 1
        %v4986 = vrot.slane %v4882, 1
        %v4987 = vsel %vm541, %v4985, %v4986
        %v4988 = vrot.slane %v4883, 1
        %v4989 = vsel %vm541, %v4986, %v4988
        %v4990 = vrot.slane %v4884, 1
        %v4991 = vrot.slane %v4885, 1
        %v4992 = vsel %vm541, %v4990, %v4991
        %v4993 = vrot.slane %v4886, 1
        %v4994 = vsel %vm541, %v4991, %v4993
        %v4995 = vrot.slane %v4887, 1
        %v4996 = vrot.slane %v4888, 1
        %v4997 = vsel %vm541, %v4995, %v4996
        %v4998 = vrot.slane %v4889, 1
        %v4999 = vsel %vm541, %v4996, %v4998
        %v5000 = vrot.slane %v4890, 1
        %v5001 = vrot.slane %v4891, 1
        %v5002 = vsel %vm541, %v5000, %v5001
        %v5003 = vrot.slane %v4892, 1
        %v5004 = vsel %vm541, %v5001, %v5003
        %v5005 = vrot.slane %v4893, 1
        %v5006 = vrot.slane %v4894, 1
        %v5007 = vsel %vm541, %v5005, %v5006
        %v5008 = vrot.slane %v4895, 1
        %v5009 = vsel %vm541, %v5006, %v5008
        %v5010 = vrot.slane %v4896, 1
        %v5011 = vrot.slane %v4897, 1
        %v5012 = vsel %vm541, %v5010, %v5011
        %v5013 = vrot.slane %v4898, 1
        %v5014 = vsel %vm541, %v5011, %v5013
        %v5015 = vrot.slane %v4899, 1
        %v5016 = vrot.slane %v4900, 1
        %v5017 = vsel %vm541, %v5015, %v5016
        %v5018 = vrot.slane %v4901, 1
        %v5019 = vsel %vm541, %v5016, %v5018
        %v5020 = vrot.slane %v4902, 1
        %v5021 = vrot.slane %v4903, 1
        %v5022 = vsel %vm541, %v5020, %v5021
        %v5023 = vrot.slane %v4904, 1
        %v5024 = vsel %vm541, %v5021, %v5023
        %v5025 = vrot.slane %v4905, 1
        %v5026 = vrot.slane %v4906, 1
        %v5027 = vsel %vm541, %v5025, %v5026
        %v5028 = vrot.slane %v4907, 1
        %v5029 = vsel %vm541, %v5026, %v5028
        %v5030 = vrot.slane %v4908, 1
        %v5031 = vrot.slane %v4909, 1
        %v5032 = vsel %vm541, %v5030, %v5031
        %v5033 = vrot.slane %v4910, 1
        %v5034 = vsel %vm541, %v5031, %v5033
        %v5035 = vrot.slane %v4911, 1
        %v5036 = vrot.slane %v4912, 1
        %v5037 = vsel %vm541, %v5035, %v5036
        %v5038 = vrot.slane %v4913, 1
        %v5039 = vsel %vm541, %v5036, %v5038
        %v5040 = vrot.slane %v4914, 1
        %v5041 = vrot.slane %v4915, 1
        %v5042 = vsel %vm541, %v5040, %v5041
        %v5043 = vrot.slane %v4916, 1
        %v5044 = vsel %vm541, %v5041, %v5043
        %5045 = vset.pattern.permute.xlu0 0
        %5046 = vperm.xlu0 %5045, %v4967
        %v5047 = vpop.permute.xlu0 %5046
        %5049 = vset.pattern.permute.xlu0 0
        %5050 = vperm.xlu0 %5049, %v4969
        %v5051 = vpop.permute.xlu0 %5050
        %5053 = vset.pattern.permute.xlu0 0
        %5054 = vperm.xlu0 %5053, %v4972
        %v5055 = vpop.permute.xlu0 %5054
        %5057 = vset.pattern.permute.xlu0 0
        %5058 = vperm.xlu0 %5057, %v4974
        %v5059 = vpop.permute.xlu0 %5058
        %5061 = vset.pattern.permute.xlu0 0
        %5062 = vperm.xlu0 %5061, %v4977
        %v5063 = vpop.permute.xlu0 %5062
        %5065 = vset.pattern.permute.xlu0 0
        %5066 = vperm.xlu0 %5065, %v4979
        %v5067 = vpop.permute.xlu0 %5066
        %5069 = vset.pattern.permute.xlu0 0
        %5070 = vperm.xlu0 %5069, %v4982
        %v5071 = vpop.permute.xlu0 %5070
        %5073 = vset.pattern.permute.xlu0 0
        %5074 = vperm.xlu0 %5073, %v4984
        %v5075 = vpop.permute.xlu0 %5074
        %5077 = vset.pattern.permute.xlu0 0
        %5078 = vperm.xlu0 %5077, %v4987
        %v5079 = vpop.permute.xlu0 %5078
        %5081 = vset.pattern.permute.xlu0 0
        %5082 = vperm.xlu0 %5081, %v4989
        %v5083 = vpop.permute.xlu0 %5082
        %5085 = vset.pattern.permute.xlu0 0
        %5086 = vperm.xlu0 %5085, %v4992
        %v5087 = vpop.permute.xlu0 %5086
        %5089 = vset.pattern.permute.xlu0 0
        %5090 = vperm.xlu0 %5089, %v4994
        %v5091 = vpop.permute.xlu0 %5090
        %5093 = vset.pattern.permute.xlu0 0
        %5094 = vperm.xlu0 %5093, %v4997
        %v5095 = vpop.permute.xlu0 %5094
        %5097 = vset.pattern.permute.xlu0 0
        %5098 = vperm.xlu0 %5097, %v4999
        %v5099 = vpop.permute.xlu0 %5098
        %5101 = vset.pattern.permute.xlu0 0
        %5102 = vperm.xlu0 %5101, %v5002
        %v5103 = vpop.permute.xlu0 %5102
        %5105 = vset.pattern.permute.xlu0 0
        %5106 = vperm.xlu0 %5105, %v5004
        %v5107 = vpop.permute.xlu0 %5106
        %5109 = vset.pattern.permute.xlu0 0
        %5110 = vperm.xlu0 %5109, %v5007
        %v5111 = vpop.permute.xlu0 %5110
        %5113 = vset.pattern.permute.xlu0 0
        %5114 = vperm.xlu0 %5113, %v5009
        %v5115 = vpop.permute.xlu0 %5114
        %5117 = vset.pattern.permute.xlu0 0
        %5118 = vperm.xlu0 %5117, %v5012
        %v5119 = vpop.permute.xlu0 %5118
        %5121 = vset.pattern.permute.xlu0 0
        %5122 = vperm.xlu0 %5121, %v5014
        %v5123 = vpop.permute.xlu0 %5122
        %5125 = vset.pattern.permute.xlu0 0
        %5126 = vperm.xlu0 %5125, %v5017
        %v5127 = vpop.permute.xlu0 %5126
        %5129 = vset.pattern.permute.xlu0 0
        %5130 = vperm.xlu0 %5129, %v5019
        %v5131 = vpop.permute.xlu0 %5130
        %5133 = vset.pattern.permute.xlu0 0
        %5134 = vperm.xlu0 %5133, %v5022
        %v5135 = vpop.permute.xlu0 %5134
        %5137 = vset.pattern.permute.xlu0 0
        %5138 = vperm.xlu0 %5137, %v5024
        %v5139 = vpop.permute.xlu0 %5138
        %5141 = vset.pattern.permute.xlu0 0
        %5142 = vperm.xlu0 %5141, %v5027
        %v5143 = vpop.permute.xlu0 %5142
        %5145 = vset.pattern.permute.xlu0 0
        %5146 = vperm.xlu0 %5145, %v5029
        %v5147 = vpop.permute.xlu0 %5146
        %5149 = vset.pattern.permute.xlu0 0
        %5150 = vperm.xlu0 %5149, %v5032
        %v5151 = vpop.permute.xlu0 %5150
        %5153 = vset.pattern.permute.xlu0 0
        %5154 = vperm.xlu0 %5153, %v5034
        %v5155 = vpop.permute.xlu0 %5154
        %5157 = vset.pattern.permute.xlu0 0
        %5158 = vperm.xlu0 %5157, %v5037
        %v5159 = vpop.permute.xlu0 %5158
        %5161 = vset.pattern.permute.xlu0 0
        %5162 = vperm.xlu0 %5161, %v5039
        %v5163 = vpop.permute.xlu0 %5162
        %5165 = vset.pattern.permute.xlu0 0
        %5166 = vperm.xlu0 %5165, %v5042
        %v5167 = vpop.permute.xlu0 %5166
        %5169 = vset.pattern.permute.xlu0 0
        %5170 = vperm.xlu0 %5169, %v5044
        %v5171 = vpop.permute.xlu0 %5170
        %vm5173 = vcmp.eq.s32.totalorder %v3629, 11
        %v5174 = vsel %vm5173, %v5047, %v3827
        %v5175 = vsel %vm5173, %v5051, %v3828
        %v5176 = vsel %vm5173, %v5055, %v3829
        %v5177 = vsel %vm5173, %v5059, %v3830
        %v5178 = vsel %vm5173, %v5063, %v3831
        %v5179 = vsel %vm5173, %v5067, %v3832
        %v5180 = vsel %vm5173, %v5071, %v3833
        %v5181 = vsel %vm5173, %v5075, %v3834
        %v5182 = vsel %vm5173, %v5079, %v3835
        %v5183 = vsel %vm5173, %v5083, %v3836
        %v5184 = vsel %vm5173, %v5087, %v3837
        %v5185 = vsel %vm5173, %v5091, %v3838
        %v5186 = vsel %vm5173, %v5095, %v3839
        %v5187 = vsel %vm5173, %v5099, %v3840
        %v5188 = vsel %vm5173, %v5103, %v3841
        %v5189 = vsel %vm5173, %v5107, %v3842
        %v5190 = vsel %vm5173, %v5111, %v3843
        %v5191 = vsel %vm5173, %v5115, %v3844
        %v5192 = vsel %vm5173, %v5119, %v3845
        %v5193 = vsel %vm5173, %v5123, %v3846
        %v5194 = vsel %vm5173, %v5127, %v3847
        %v5195 = vsel %vm5173, %v5131, %v3848
        %v5196 = vsel %vm5173, %v5135, %v3849
        %v5197 = vsel %vm5173, %v5139, %v3850
        %v5198 = vsel %vm5173, %v5143, %v3851
        %v5199 = vsel %vm5173, %v5147, %v3852
        %v5200 = vsel %vm5173, %v5151, %v3853
        %v5201 = vsel %vm5173, %v5155, %v3854
        %v5202 = vsel %vm5173, %v5159, %v3855
        %v5203 = vsel %vm5173, %v5163, %v3856
        %v5204 = vsel %vm5173, %v5167, %v3857
        %v5205 = vsel %vm5173, %v5171, %v3858
        %5206 = vxpose.xlu0.b32.start [1/16] %v5174, 128
        %5207 = vxpose.xlu0.b32.cont [2/16] %v5175, 128
        %5208 = vxpose.xlu0.b32.cont [3/16] %v5176, 128
        %5209 = vxpose.xlu0.b32.cont [4/16] %v5177, 128
        %5210 = vxpose.xlu0.b32.cont [5/16] %v5178, 128
        %5211 = vxpose.xlu0.b32.cont [6/16] %v5179, 128
        %5212 = vxpose.xlu0.b32.cont [7/16] %v5180, 128
        %5213 = vxpose.xlu0.b32.cont [8/16] %v5181, 128
        %5214 = vxpose.xlu0.b32.cont [9/16] %v5182, 128
        %5215 = vxpose.xlu0.b32.cont [10/16] %v5183, 128
        %5216 = vxpose.xlu0.b32.cont [11/16] %v5184, 128
        %5217 = vxpose.xlu0.b32.cont [12/16] %v5185, 128
        %5218 = vxpose.xlu0.b32.cont [13/16] %v5186, 128
        %5219 = vxpose.xlu0.b32.cont [14/16] %v5187, 128
        %5220 = vxpose.xlu0.b32.cont [15/16] %v5188, 128
        %5221 = vxpose.xlu0.b32.end [16/16] %v5189, 128
        %v5222 = vpop.trf.xlu0
        %v5223 = vpop.trf.xlu0
        %v5224 = vpop.trf.xlu0
        %v5225 = vpop.trf.xlu0
        %v5226 = vpop.trf.xlu0
        %v5227 = vpop.trf.xlu0
        %v5228 = vpop.trf.xlu0
        %v5229 = vpop.trf.xlu0
        %v5230 = vpop.trf.xlu0
        %v5231 = vpop.trf.xlu0
        %v5232 = vpop.trf.xlu0
        %v5233 = vpop.trf.xlu0
        %v5234 = vpop.trf.xlu0
        %v5235 = vpop.trf.xlu0
        %v5236 = vpop.trf.xlu0
        %v5237 = vpop.trf.xlu0
        %5238 = vxpose.xlu0.b32.start [1/16] %v5190, 128
        %5239 = vxpose.xlu0.b32.cont [2/16] %v5191, 128
        %5240 = vxpose.xlu0.b32.cont [3/16] %v5192, 128
        %5241 = vxpose.xlu0.b32.cont [4/16] %v5193, 128
        %5242 = vxpose.xlu0.b32.cont [5/16] %v5194, 128
        %5243 = vxpose.xlu0.b32.cont [6/16] %v5195, 128
        %5244 = vxpose.xlu0.b32.cont [7/16] %v5196, 128
        %5245 = vxpose.xlu0.b32.cont [8/16] %v5197, 128
        %5246 = vxpose.xlu0.b32.cont [9/16] %v5198, 128
        %5247 = vxpose.xlu0.b32.cont [10/16] %v5199, 128
        %5248 = vxpose.xlu0.b32.cont [11/16] %v5200, 128
        %5249 = vxpose.xlu0.b32.cont [12/16] %v5201, 128
        %5250 = vxpose.xlu0.b32.cont [13/16] %v5202, 128
        %5251 = vxpose.xlu0.b32.cont [14/16] %v5203, 128
        %5252 = vxpose.xlu0.b32.cont [15/16] %v5204, 128
        %5253 = vxpose.xlu0.b32.end [16/16] %v5205, 128
        %v5254 = vpop.trf.xlu0
        %v5255 = vpop.trf.xlu0
        %v5256 = vpop.trf.xlu0
        %v5257 = vpop.trf.xlu0
        %v5258 = vpop.trf.xlu0
        %v5259 = vpop.trf.xlu0
        %v5260 = vpop.trf.xlu0
        %v5261 = vpop.trf.xlu0
        %v5262 = vpop.trf.xlu0
        %v5263 = vpop.trf.xlu0
        %v5264 = vpop.trf.xlu0
        %v5265 = vpop.trf.xlu0
        %v5266 = vpop.trf.xlu0
        %v5267 = vpop.trf.xlu0
        %v5268 = vpop.trf.xlu0
        %v5269 = vpop.trf.xlu0
        %5270 = vst [vmem:[%s300] sm:$0xff] %v5222
        %5271 = vst [vmem:[%s300 + $0x8] sm:$0xff] %v5254
        %5272 = vst [vmem:[%s300 + $0x10] sm:$0xff] %v5223
        %5273 = vst [vmem:[%s300 + $0x18] sm:$0xff] %v5255
        %p5274 = scmp.lt.s32.totalorder %s21, 1
        %s5275 = scalar_select %p5274, %s21, 1
        %s5276 = smul.addr %s5275, 4
        %s5277 = smul.addr %s5276, 8
        %s5278 = scalar_lea.vmem %s6, %s5277
        // Predicated region
        $region57: #{_forward_impl.1} parent=43 // pred_check
          %p5279 = pneg %p170
        $region58: #{_forward_impl.1} parent=43 // pred_check_branch
          %5281 = sbr.rel (%p5279) target = $region60
        $region59: #{_forward_impl.1} parent=43 // pred_region
          _
        $region60: #{_forward_impl.1} parent=43 // pred_fallthru
          _
      $region44: #{_forward_impl.1} parent=5 // pred_fallthru
        _
      %p5282 = scmp.le.s32.totalorder 2, %s16
      // Predicated region
      $region61: #{_forward_impl.1} parent=5 // pred_check
        %p5283 = pneg %p5282
      $region62: #{_forward_impl.1} parent=5 // pred_check_branch
        %5285 = sbr.rel (%p5283) target = $region64
      $region63: #{_forward_impl.1} parent=5 // pred_region
        %s5286 = ssub.s32 %s16, 2
        // Predicated region
        $region65: #{_forward_impl.1} parent=63 // pred_check
          %p5287 = pneg %p176
        $region66: #{_forward_impl.1} parent=63 // pred_check_branch
          %5289 = sbr.rel (%p5287) target = $region68
        $region67: #{_forward_impl.1} parent=63 // pred_region
          %p5290 = scmp.lt.s32.totalorder %s22, 1
          %s5291 = scalar_select %p5290, %s22, 1
          %s5292 = smul.addr %s5291, 4
          %s5293 = smul.addr %s5292, 8
          %s5294 = scalar_lea.vmem %s6, %s5293
        $region68: #{_forward_impl.1} parent=63 // pred_fallthru
          _
      $region64: #{_forward_impl.1} parent=5 // pred_fallthru
        _
    $region6: #{_forward_impl.1} parent=1 // loop_footer
      %s20 = sadd.s32 1, %s16
    $region7: #{_forward_impl.1} parent=1 // loop_footer_branch
      %15 = sbr.rel target = $region3
    $region8: #{_forward_impl.1} parent=1 // loop_exit
      _
    %5295 = vsyncpa [#allocation6], 1
    %s5296 = scalar_lea.sflag [#allocation6], 1
    %5297 = vsyncpa %s5296, 1
    %5298 = vsyncpa [#allocation8], 1

</llo_original>
